<compile_context>
chip_gen: v6e
topology: v6e:2x2x1
jax: 0.10.0
libtpu: 0.0.40
codegen_flags: <defaults>
</compile_context>

<pallas_src>
import jax
import jax.numpy as jnp
from jax.experimental import pallas as pl
from jax.experimental.pallas import tpu as pltpu


def _round_up(x, m):
    return ((x + m - 1) // m) * m


def _make_kernel(single_n, compute_dtype):
    def kernel(x_ref, w1_ref, b1_ref, w2_ref, b2_ref, w3_ref, b3_ref,
               o_ref, gate_sc):
        # Grid: (batch tiles, w3 output-column tiles).
        # NOTE: gate_sc is only correct because the column axis is the
        # innermost, "arbitrary" grid axis (written at n == 0, reused for
        # n > 0 of the same batch tile). Do not reorder the grid around this.
        tile_n = o_ref.shape[1]

        x = x_ref[...]                           # native rows, f32 for the residual
        xb = x.astype(compute_dtype)             # bf16 operand for both MXU dots

        def gate_value():
            h = jnp.dot(xb, w1_ref[...], preferred_element_type=jnp.float32)
            h = jnp.maximum(h + b1_ref[...].astype(jnp.float32), 0.0)    # (tb, H)
            # N=1 matmul would waste the MXU: VPU multiply + lane reduction.
            logit = jnp.sum(h * w2_ref[...].astype(jnp.float32),
                            axis=-1, keepdims=True) + b2_ref[0, 0]       # (tb, 1)
            return jax.nn.sigmoid(logit)

        if single_n:
            gate = gate_value()                  # straight-line, no scf.if
        else:
            @pl.when(pl.program_id(1) == 0)
            def _():
                gate_sc[...] = gate_value()
            gate = gate_sc[...]

        # Feature-transform branch for this output-column tile.
        t = jnp.dot(xb, w3_ref[...], preferred_element_type=jnp.float32)
        t = jnp.maximum(t + b3_ref[...].astype(jnp.float32), 0.0)        # (tb, tile_n)

        if single_n:
            xf = x.astype(jnp.float32)
        else:
            start = pl.program_id(1) * tile_n
            if tile_n % 128 == 0:
                start = pl.multiple_of(start, 128)
            xf = x_ref[:, pl.ds(start, tile_n)].astype(jnp.float32)

        # Fused epilogue: 0.7*x + 0.3*t + gate*x*t == x*(0.7 + gate*t) + 0.3*t
        o_ref[...] = (xf * (0.7 + gate * t) + 0.3 * t).astype(o_ref.dtype)

    return kernel


def diagnostic_gate(x, w1, b1, w2_row, b2, w3, b3, *,
                    tile_b=256, tile_n=None, compute_dtype=jnp.bfloat16):
    """x: (B, D). Pre-transposed params: w1 (D, H), b1 (1, H), w2_row (1, H),
    b2 (1, 1), w3 (D, Dout), b3 (1, Dout). Requires Dout == D (residual)."""
    B, D = x.shape
    H = w1.shape[1]
    Dout = w3.shape[1]
    assert D == Dout, "residual add requires input_dim == output_dim"
    assert w1.shape == (D, H) and b1.shape == (1, H)
    assert w2_row.shape == (1, H) and b2.shape == (1, 1)
    assert w3.shape == (D, Dout) and b3.shape == (1, Dout)

    # MXU operands in bf16 (one-time cast; a real model would store weights in
    # compute_dtype already). Biases and the gate row stay f32.
    w1c = w1.astype(compute_dtype)
    w3c = w3.astype(compute_dtype)
    b1c = b1.astype(jnp.float32)
    w2c = w2_row.astype(jnp.float32)
    b2c = b2.astype(jnp.float32)
    b3c = b3.astype(jnp.float32)

    # ---- Batch tile: one largest tile (<= tile_b); no pad when B <= tile_b. ----
    if B <= tile_b:
        tb = B            # block == full batch dim: no 8-row constraint, no pad
        B_pad = B
    else:
        B_pad = _round_up(B, 8)
        tb = (tile_b // 8) * 8
        while B_pad % tb != 0:     # largest multiple of 8 <= tile_b dividing B_pad
            tb -= 8
    x_p = x if B_pad == B else jnp.pad(x, ((0, B_pad - B), (0, 0)))

    # ---- VMEM budget and w3 column tile (prefer w3 fully resident). ----
    f32b = 4
    cb = jnp.dtype(compute_dtype).itemsize
    xbytes = jnp.dtype(x.dtype).itemsize
    try:
        vmem_cap = int(pltpu.get_tpu_info().vmem_capacity_bytes)
    except Exception:
        vmem_cap = 64 * 1024 * 1024            # v7x worst case
    budget = (vmem_cap * 3) // 4               # headroom for compiler scratch

    def vmem_need(tn, w3_bufs):
        need = D * H * cb + 2 * 8 * H * f32b             # w1 + b1 + w2 (1-buffered)
        need += w3_bufs * (D * tn * cb + 8 * tn * f32b)  # w3 + b3
        need += 2 * tb * D * xbytes                      # x, double-buffered
        need += 2 * tb * tn * xbytes                     # out, double-buffered
        need += max(tb, 8) * 128 * f32b                  # gate scratch (padded)
        return need

    if tile_n is None:
        if Dout % 128 != 0 or vmem_need(Dout, 1) <= budget:
            tile_n = Dout                                # keep w3 fully resident
        else:
            tile_n = 128
            for cand in range(Dout - 128, 127, -128):
                if Dout % cand == 0 and vmem_need(cand, 2) <= budget:
                    tile_n = cand
                    break
    assert Dout % tile_n == 0 and (tile_n % 128 == 0 or tile_n == Dout)

    grid_n = Dout // tile_n
    single_n = (grid_n == 1)
    grid = (B_pad // tb, grid_n)
    kernel = _make_kernel(single_n, compute_dtype)
    const2 = lambda i, n: (0, 0)
    vmem_limit = int(budget)

    def build_call(use_buffer_hint):
        def const_spec(shape):
            if use_buffer_hint:
                return pl.BlockSpec(shape, const2, pipeline_mode=pl.Buffered(1))
            return pl.BlockSpec(shape, const2)

        def col_spec(shape):
            imap = lambda i, n: (0, n)
            if use_buffer_hint and single_n:     # constant index when grid_n == 1
                return pl.BlockSpec(shape, imap, pipeline_mode=pl.Buffered(1))
            return pl.BlockSpec(shape, imap)

        in_specs = [
            pl.BlockSpec((tb, D), lambda i, n: (i, 0)),          # x (full row)
            const_spec((D, H)),                                  # w1
            const_spec((1, H)),                                  # b1
            const_spec((1, H)),                                  # w2 as a row
            pl.BlockSpec(memory_space=pltpu.MemorySpace.SMEM),   # b2 scalar
            col_spec((D, tile_n)),                               # w3 column tile
            col_spec((1, tile_n)),                               # b3 tile
        ]
        return pl.pallas_call(
            kernel,
            out_shape=jax.ShapeDtypeStruct((B_pad, Dout), x.dtype),
            grid_spec=pltpu.PrefetchScalarGridSpec(
                num_scalar_prefetch=0,
                grid=grid,
                in_specs=in_specs,
                out_specs=pl.BlockSpec((tb, tile_n), lambda i, n: (i, n)),
                scratch_shapes=[pltpu.VMEM((tb, 1), jnp.float32)],
            ),
            compiler_params=pltpu.CompilerParams(
                dimension_semantics=("parallel", "arbitrary"),
                vmem_limit_bytes=vmem_limit),
        )

    args = (x_p, w1c, b1c, w2c, b2c, w3c, b3c)
    try:
        out = build_call(True)(*args)
    except Exception:
        # pipeline_mode=pl.Buffered(1) unsupported on this JAX: plain specs.
        out = build_call(False)(*args)

    return out if B_pad == B else out[:B]


def reference_matched(x, w1, b1, w2_row, b2, w3, b3, compute_dtype=jnp.bfloat16):
    """Pure-JAX reference with the same bf16-operand / f32-accumulate math."""
    xb = x.astype(compute_dtype)
    h = jnp.maximum(
        jnp.dot(xb, w1.astype(compute_dtype),
                preferred_element_type=jnp.float32) + b1, 0.0)
    gate = jax.nn.sigmoid(jnp.sum(h * w2_row, axis=-1, keepdims=True) + b2[0, 0])
    t = jnp.maximum(
        jnp.dot(xb, w3.astype(compute_dtype),
                preferred_element_type=jnp.float32) + b3, 0.0)
    return 0.7 * x + 0.3 * t + gate * x * t


if __name__ == "__main__":
    # Shapes implied by the module: input_dim = output_dim = 512, gate hidden = 256.
    B, D, H = 64, 512, 256

    key = jax.random.PRNGKey(0)
    kx, k1, k2, k3, k4, k5, k6 = jax.random.split(key, 7)

    x = jax.random.normal(kx, (B, D), dtype=jnp.float32)
    w1 = jax.random.normal(k1, (D, H), dtype=jnp.float32) * (1.0 / jnp.sqrt(D))
    b1 = jax.random.normal(k2, (1, H), dtype=jnp.float32) * 0.01
    w2 = jax.random.normal(k3, (1, H), dtype=jnp.float32) * (1.0 / jnp.sqrt(H))
    b2 = jax.random.normal(k4, (1, 1), dtype=jnp.float32) * 0.01
    w3 = jax.random.normal(k5, (D, D), dtype=jnp.float32) * (1.0 / jnp.sqrt(D))
    b3 = jax.random.normal(k6, (1, D), dtype=jnp.float32) * 0.01

    out = diagnostic_gate(x, w1, b1, w2, b2, w3, b3)
    out = jax.block_until_ready(out)
    assert out.shape == (B, D)

    ref = reference_matched(x, w1, b1, w2, b2, w3, b3)
    err = float(jnp.max(jnp.abs(out - ref)))
    assert jnp.allclose(out, ref, atol=2e-2, rtol=2e-2), (
        f"mismatch vs matched reference (max abs err {err})")

    print("KERNEL_OK")
</pallas_src>

<mosaic_0001>
module attributes {stable_mosaic.version = 11 : i64} {
  func.func @kernel(%arg0: i32, %arg1: i32, %arg2: memref<64x512xf32, #tpu.memory_space<vmem>>, %arg3: memref<512x256xbf16, #tpu.memory_space<vmem>>, %arg4: memref<1x256xf32, #tpu.memory_space<vmem>>, %arg5: memref<1x256xf32, #tpu.memory_space<vmem>>, %arg6: memref<1x1xf32, #tpu.memory_space<smem>>, %arg7: memref<512x512xbf16, #tpu.memory_space<vmem>>, %arg8: memref<1x512xf32, #tpu.memory_space<vmem>>, %arg9: memref<64x512xf32, #tpu.memory_space<vmem>>, %arg10: memref<64x1xf32, #tpu.memory_space<vmem>>) attributes {dimension_semantics = [#tpu.dimension_semantics<parallel>, #tpu.dimension_semantics<arbitrary>], iteration_bounds = array<i64: 1, 1>, scalar_prefetch = 0 : i64, scratch_operands = 1 : i64, tpu.core_type = #tpu.core_type<tc>, window_params = [{transform_indices = @transform_0, window_bounds = array<i64: 64, 512>}, {pipeline_mode = #tpu.pipeline_mode<synchronous>, transform_indices = @transform_1, window_bounds = array<i64: 512, 256>}, {pipeline_mode = #tpu.pipeline_mode<synchronous>, transform_indices = @transform_2, window_bounds = array<i64: 1, 256>}, {pipeline_mode = #tpu.pipeline_mode<synchronous>, transform_indices = @transform_3, window_bounds = array<i64: 1, 256>}, {transform_indices = @transform_4, window_bounds = array<i64: 1, 1>}, {pipeline_mode = #tpu.pipeline_mode<synchronous>, transform_indices = @transform_5, window_bounds = array<i64: 512, 512>}, {pipeline_mode = #tpu.pipeline_mode<synchronous>, transform_indices = @transform_6, window_bounds = array<i64: 1, 512>}, {transform_indices = @transform_7, window_bounds = array<i64: 64, 512>}]} {
    %c0 = arith.constant 0 : index
    %c0_0 = arith.constant 0 : index
    %0 = vector.load %arg2[%c0, %c0_0] : memref<64x512xf32, #tpu.memory_space<vmem>>, vector<64x512xf32>
    %1 = arith.truncf %0 : vector<64x512xf32> to vector<64x512xbf16>
    %c0_1 = arith.constant 0 : index
    %c0_2 = arith.constant 0 : index
    %2 = vector.load %arg3[%c0_1, %c0_2] : memref<512x256xbf16, #tpu.memory_space<vmem>>, vector<512x256xbf16>
    %cst = arith.constant dense<0.000000e+00> : vector<64x256xf32>
    %3 = tpu.matmul %1, %2, %cst {dimension_numbers = #tpu.dot_dimension_numbers<[1], [0], [0], [1], [0, 0, 1, 1], [], []>} : vector<64x512xbf16>, vector<512x256xbf16>, vector<64x256xf32> -> vector<64x256xf32>
    %c0_3 = arith.constant 0 : index
    %c0_4 = arith.constant 0 : index
    %4 = vector.load %arg4[%c0_3, %c0_4] : memref<1x256xf32, #tpu.memory_space<vmem>>, vector<1x256xf32>
    %5 = vector.broadcast %4 : vector<1x256xf32> to vector<64x256xf32>
    %6 = arith.addf %3, %5 : vector<64x256xf32>
    %cst_5 = arith.constant 0.000000e+00 : f32
    %7 = vector.broadcast %cst_5 : f32 to vector<64x256xf32>
    %8 = arith.maximumf %6, %7 : vector<64x256xf32>
    %c0_6 = arith.constant 0 : index
    %c0_7 = arith.constant 0 : index
    %9 = vector.load %arg5[%c0_6, %c0_7] : memref<1x256xf32, #tpu.memory_space<vmem>>, vector<1x256xf32>
    %10 = vector.broadcast %9 : vector<1x256xf32> to vector<64x256xf32>
    %11 = arith.mulf %8, %10 : vector<64x256xf32>
    %cst_8 = arith.constant dense<0.000000e+00> : vector<64xf32>
    %12 = vector.multi_reduction <add>, %11, %cst_8 [1] : vector<64x256xf32> to vector<64xf32>
    %13 = vector.shape_cast %12 : vector<64xf32> to vector<64x1xf32>
    %c0_9 = arith.constant 0 : index
    %c0_10 = arith.constant 0 : index
    %14 = memref.load %arg6[%c0_9, %c0_10] : memref<1x1xf32, #tpu.memory_space<smem>>
    %15 = vector.broadcast %14 : f32 to vector<64x1xf32>
    %16 = arith.addf %13, %15 : vector<64x1xf32>
    %17 = arith.negf %16 : vector<64x1xf32>
    %18 = math.exp %17 : vector<64x1xf32>
    %cst_11 = arith.constant 1.000000e+00 : f32
    %19 = vector.broadcast %cst_11 : f32 to vector<64x1xf32>
    %20 = arith.addf %19, %18 : vector<64x1xf32>
    %21 = arith.divf %19, %20 : vector<64x1xf32>
    %c0_12 = arith.constant 0 : index
    %c0_13 = arith.constant 0 : index
    %22 = vector.load %arg7[%c0_12, %c0_13] : memref<512x512xbf16, #tpu.memory_space<vmem>>, vector<512x512xbf16>
    %cst_14 = arith.constant dense<0.000000e+00> : vector<64x512xf32>
    %23 = tpu.matmul %1, %22, %cst_14 {dimension_numbers = #tpu.dot_dimension_numbers<[1], [0], [0], [1], [0, 0, 1, 1], [], []>} : vector<64x512xbf16>, vector<512x512xbf16>, vector<64x512xf32> -> vector<64x512xf32>
    %c0_15 = arith.constant 0 : index
    %c0_16 = arith.constant 0 : index
    %24 = vector.load %arg8[%c0_15, %c0_16] : memref<1x512xf32, #tpu.memory_space<vmem>>, vector<1x512xf32>
    %25 = vector.broadcast %24 : vector<1x512xf32> to vector<64x512xf32>
    %26 = arith.addf %23, %25 : vector<64x512xf32>
    %cst_17 = arith.constant 0.000000e+00 : f32
    %27 = vector.broadcast %cst_17 : f32 to vector<64x512xf32>
    %28 = arith.maximumf %26, %27 : vector<64x512xf32>
    %29 = vector.broadcast %21 : vector<64x1xf32> to vector<64x512xf32>
    %30 = arith.mulf %29, %28 : vector<64x512xf32>
    %cst_18 = arith.constant 0.699999988 : f32
    %31 = vector.broadcast %cst_18 : f32 to vector<64x512xf32>
    %32 = arith.addf %31, %30 : vector<64x512xf32>
    %33 = arith.mulf %0, %32 : vector<64x512xf32>
    %cst_19 = arith.constant 3.000000e-01 : f32
    %34 = vector.broadcast %cst_19 : f32 to vector<64x512xf32>
    %35 = arith.mulf %34, %28 : vector<64x512xf32>
    %36 = arith.addf %33, %35 : vector<64x512xf32>
    %c0_20 = arith.constant 0 : index
    %c0_21 = arith.constant 0 : index
    %37 = vector.load %arg9[%c0_20, %c0_21] : memref<64x512xf32, #tpu.memory_space<vmem>>, vector<64x512xf32>
    tpu.vector_store %arg9[%c0_20, %c0_21], %36 {strides = array<i32>} : memref<64x512xf32, #tpu.memory_space<vmem>>, vector<64x512xf32>,
    return
  }
  func.func @transform_0(%arg0: i32, %arg1: i32) -> (i32, i32) {
    %c0_i32 = arith.constant 0 : i32
    %c0_i32_0 = arith.constant 0 : i32
    return %arg0, %c0_i32 : i32, i32
  }
  func.func @transform_1(%arg0: i32, %arg1: i32) -> (i32, i32) {
    %c0_i32 = arith.constant 0 : i32
    %c0_i32_0 = arith.constant 0 : i32
    %c0_i32_1 = arith.constant 0 : i32
    return %c0_i32, %c0_i32_0 : i32, i32
  }
  func.func @transform_2(%arg0: i32, %arg1: i32) -> (i32, i32) {
    %c0_i32 = arith.constant 0 : i32
    %c0_i32_0 = arith.constant 0 : i32
    %c0_i32_1 = arith.constant 0 : i32
    return %c0_i32, %c0_i32_0 : i32, i32
  }
  func.func @transform_3(%arg0: i32, %arg1: i32) -> (i32, i32) {
    %c0_i32 = arith.constant 0 : i32
    %c0_i32_0 = arith.constant 0 : i32
    %c0_i32_1 = arith.constant 0 : i32
    return %c0_i32, %c0_i32_0 : i32, i32
  }
  func.func @transform_4(%arg0: i32, %arg1: i32) -> (i32, i32) {
    %c0_i32 = arith.constant 0 : i32
    %c0_i32_0 = arith.constant 0 : i32
    %c0_i32_1 = arith.constant 0 : i32
    return %c0_i32, %c0_i32_0 : i32, i32
  }
  func.func @transform_5(%arg0: i32, %arg1: i32) -> (i32, i32) {
    %c0_i32 = arith.constant 0 : i32
    %c0_i32_0 = arith.constant 0 : i32
    return %c0_i32, %arg1 : i32, i32
  }
  func.func @transform_6(%arg0: i32, %arg1: i32) -> (i32, i32) {
    %c0_i32 = arith.constant 0 : i32
    %c0_i32_0 = arith.constant 0 : i32
    return %c0_i32, %arg1 : i32, i32
  }
  func.func @transform_7(%arg0: i32, %arg1: i32) -> (i32, i32) {
    %c0_i32 = arith.constant 0 : i32
    return %arg0, %arg1 : i32, i32
  }
}

module attributes {stable_mosaic.version = 11 : i64} {
  func.func @kernel(%arg0: i32, %arg1: i32, %arg2: memref<64x512xf32, #tpu.memory_space<vmem>>, %arg3: memref<512x256xbf16, #tpu.memory_space<vmem>>, %arg4: memref<1x256xf32, #tpu.memory_space<vmem>>, %arg5: memref<1x256xf32, #tpu.memory_space<vmem>>, %arg6: memref<1x1xf32, #tpu.memory_space<smem>>, %arg7: memref<512x512xbf16, #tpu.memory_space<vmem>>, %arg8: memref<1x512xf32, #tpu.memory_space<vmem>>, %arg9: memref<64x512xf32, #tpu.memory_space<vmem>>, %arg10: memref<64x1xf32, #tpu.memory_space<vmem>>) attributes {dimension_semantics = [#tpu.dimension_semantics<parallel>, #tpu.dimension_semantics<arbitrary>], iteration_bounds = array<i64: 1, 1>, scalar_prefetch = 0 : i64, scratch_operands = 1 : i64, tpu.core_type = #tpu.core_type<tc>, window_params = [{transform_indices = @transform_0, window_bounds = array<i64: 64, 512>}, {pipeline_mode = #tpu.pipeline_mode<synchronous>, transform_indices = @transform_1, window_bounds = array<i64: 512, 256>}, {pipeline_mode = #tpu.pipeline_mode<synchronous>, transform_indices = @transform_2, window_bounds = array<i64: 1, 256>}, {pipeline_mode = #tpu.pipeline_mode<synchronous>, transform_indices = @transform_3, window_bounds = array<i64: 1, 256>}, {transform_indices = @transform_4, window_bounds = array<i64: 1, 1>}, {transform_indices = @transform_5, window_bounds = array<i64: 512, 512>}, {transform_indices = @transform_6, window_bounds = array<i64: 1, 512>}, {transform_indices = @transform_7, window_bounds = array<i64: 64, 512>}]} {
    %c0 = arith.constant 0 : index
    %c0_0 = arith.constant 0 : index
    %0 = vector.load %arg2[%c0, %c0_0] : memref<64x512xf32, #tpu.memory_space<vmem>>, vector<64x512xf32>
    %1 = arith.truncf %0 : vector<64x512xf32> to vector<64x512xbf16>
    %c0_1 = arith.constant 0 : index
    %c0_2 = arith.constant 0 : index
    %2 = vector.load %arg3[%c0_1, %c0_2] : memref<512x256xbf16, #tpu.memory_space<vmem>>, vector<512x256xbf16>
    %cst = arith.constant dense<0.000000e+00> : vector<64x256xf32>
    %3 = tpu.matmul %1, %2, %cst {dimension_numbers = #tpu.dot_dimension_numbers<[1], [0], [0], [1], [0, 0, 1, 1], [], []>} : vector<64x512xbf16>, vector<512x256xbf16>, vector<64x256xf32> -> vector<64x256xf32>
    %c0_3 = arith.constant 0 : index
    %c0_4 = arith.constant 0 : index
    %4 = vector.load %arg4[%c0_3, %c0_4] : memref<1x256xf32, #tpu.memory_space<vmem>>, vector<1x256xf32>
    %5 = vector.broadcast %4 : vector<1x256xf32> to vector<64x256xf32>
    %6 = arith.addf %3, %5 : vector<64x256xf32>
    %cst_5 = arith.constant 0.000000e+00 : f32
    %7 = vector.broadcast %cst_5 : f32 to vector<64x256xf32>
    %8 = arith.maximumf %6, %7 : vector<64x256xf32>
    %c0_6 = arith.constant 0 : index
    %c0_7 = arith.constant 0 : index
    %9 = vector.load %arg5[%c0_6, %c0_7] : memref<1x256xf32, #tpu.memory_space<vmem>>, vector<1x256xf32>
    %10 = vector.broadcast %9 : vector<1x256xf32> to vector<64x256xf32>
    %11 = arith.mulf %8, %10 : vector<64x256xf32>
    %cst_8 = arith.constant dense<0.000000e+00> : vector<64xf32>
    %12 = vector.multi_reduction <add>, %11, %cst_8 [1] : vector<64x256xf32> to vector<64xf32>
    %13 = vector.shape_cast %12 : vector<64xf32> to vector<64x1xf32>
    %c0_9 = arith.constant 0 : index
    %c0_10 = arith.constant 0 : index
    %14 = memref.load %arg6[%c0_9, %c0_10] : memref<1x1xf32, #tpu.memory_space<smem>>
    %15 = vector.broadcast %14 : f32 to vector<64x1xf32>
    %16 = arith.addf %13, %15 : vector<64x1xf32>
    %17 = arith.negf %16 : vector<64x1xf32>
    %18 = math.exp %17 : vector<64x1xf32>
    %cst_11 = arith.constant 1.000000e+00 : f32
    %19 = vector.broadcast %cst_11 : f32 to vector<64x1xf32>
    %20 = arith.addf %19, %18 : vector<64x1xf32>
    %21 = arith.divf %19, %20 : vector<64x1xf32>
    %c0_12 = arith.constant 0 : index
    %c0_13 = arith.constant 0 : index
    %22 = vector.load %arg7[%c0_12, %c0_13] : memref<512x512xbf16, #tpu.memory_space<vmem>>, vector<512x512xbf16>
    %cst_14 = arith.constant dense<0.000000e+00> : vector<64x512xf32>
    %23 = tpu.matmul %1, %22, %cst_14 {dimension_numbers = #tpu.dot_dimension_numbers<[1], [0], [0], [1], [0, 0, 1, 1], [], []>} : vector<64x512xbf16>, vector<512x512xbf16>, vector<64x512xf32> -> vector<64x512xf32>
    %c0_15 = arith.constant 0 : index
    %c0_16 = arith.constant 0 : index
    %24 = vector.load %arg8[%c0_15, %c0_16] : memref<1x512xf32, #tpu.memory_space<vmem>>, vector<1x512xf32>
    %25 = vector.broadcast %24 : vector<1x512xf32> to vector<64x512xf32>
    %26 = arith.addf %23, %25 : vector<64x512xf32>
    %cst_17 = arith.constant 0.000000e+00 : f32
    %27 = vector.broadcast %cst_17 : f32 to vector<64x512xf32>
    %28 = arith.maximumf %26, %27 : vector<64x512xf32>
    %29 = vector.broadcast %21 : vector<64x1xf32> to vector<64x512xf32>
    %30 = arith.mulf %29, %28 : vector<64x512xf32>
    %cst_18 = arith.constant 0.699999988 : f32
    %31 = vector.broadcast %cst_18 : f32 to vector<64x512xf32>
    %32 = arith.addf %31, %30 : vector<64x512xf32>
    %33 = arith.mulf %0, %32 : vector<64x512xf32>
    %cst_19 = arith.constant 3.000000e-01 : f32
    %34 = vector.broadcast %cst_19 : f32 to vector<64x512xf32>
    %35 = arith.mulf %34, %28 : vector<64x512xf32>
    %36 = arith.addf %33, %35 : vector<64x512xf32>
    %c0_20 = arith.constant 0 : index
    %c0_21 = arith.constant 0 : index
    %37 = vector.load %arg9[%c0_20, %c0_21] : memref<64x512xf32, #tpu.memory_space<vmem>>, vector<64x512xf32>
    tpu.vector_store %arg9[%c0_20, %c0_21], %36 {strides = array<i32>} : memref<64x512xf32, #tpu.memory_space<vmem>>, vector<64x512xf32>,
    return
  }
  func.func @transform_0(%arg0: i32, %arg1: i32) -> (i32, i32) {
    %c0_i32 = arith.constant 0 : i32
    %c0_i32_0 = arith.constant 0 : i32
    return %arg0, %c0_i32 : i32, i32
  }
  func.func @transform_1(%arg0: i32, %arg1: i32) -> (i32, i32) {
    %c0_i32 = arith.constant 0 : i32
    %c0_i32_0 = arith.constant 0 : i32
    %c0_i32_1 = arith.constant 0 : i32
    return %c0_i32, %c0_i32_0 : i32, i32
  }
  func.func @transform_2(%arg0: i32, %arg1: i32) -> (i32, i32) {
    %c0_i32 = arith.constant 0 : i32
    %c0_i32_0 = arith.constant 0 : i32
    %c0_i32_1 = arith.constant 0 : i32
    return %c0_i32, %c0_i32_0 : i32, i32
  }
  func.func @transform_3(%arg0: i32, %arg1: i32) -> (i32, i32) {
    %c0_i32 = arith.constant 0 : i32
    %c0_i32_0 = arith.constant 0 : i32
    %c0_i32_1 = arith.constant 0 : i32
    return %c0_i32, %c0_i32_0 : i32, i32
  }
  func.func @transform_4(%arg0: i32, %arg1: i32) -> (i32, i32) {
    %c0_i32 = arith.constant 0 : i32
    %c0_i32_0 = arith.constant 0 : i32
    %c0_i32_1 = arith.constant 0 : i32
    return %c0_i32, %c0_i32_0 : i32, i32
  }
  func.func @transform_5(%arg0: i32, %arg1: i32) -> (i32, i32) {
    %c0_i32 = arith.constant 0 : i32
    %c0_i32_0 = arith.constant 0 : i32
    return %c0_i32, %arg1 : i32, i32
  }
  func.func @transform_6(%arg0: i32, %arg1: i32) -> (i32, i32) {
    %c0_i32 = arith.constant 0 : i32
    %c0_i32_0 = arith.constant 0 : i32
    return %c0_i32, %arg1 : i32, i32
  }
  func.func @transform_7(%arg0: i32, %arg1: i32) -> (i32, i32) {
    %c0_i32 = arith.constant 0 : i32
    return %arg0, %arg1 : i32, i32
  }
}

</mosaic_0001>

<llo_original>
// kernel: tpu_custom_call.1
$region0: #{tpu_custom_call.1}
  #allocation0 [shape = 'u32[]', space=smem, size = 0x4, offset = 0x4, fixed_abs, tag = 'smem constant byte address 0x4 - core index']
  #allocation1 [shape = 'u32[144,128]{1,0:T(1,128)}', space=vmem, size = 0x12000, scoped, tag = 'internal scratch']
  #allocation2 [shape = 'f32[64,1]{1,0:T(8,128)}', space=vmem, size = 0x8000, scoped, tag = 'scratch operand']
  #allocation3 [shape = 'f32[1,1]{1,0:T(1,128)S(6)}', space=smem, size = 0x200, scoped, tag = 'scoped memory for tpu_custom_call.1']
  %s0 = inlined_call_operand.hbm [shape: f32[64,512], index: 0, kind: input, shape index: {}]
  %s1 = inlined_call_operand.hbm [shape: bf16[512,256], index: 1, kind: input, shape index: {}]
  %s2 = inlined_call_operand.vmem [shape: f32[1,256], index: 2, kind: input, shape index: {}]
  %s3 = inlined_call_operand.hbm [shape: f32[1,256], index: 3, kind: input, shape index: {}]
  %s4 = inlined_call_operand.<no memory space> [shape: f32[1,1], index: 4, kind: input, shape index: {}]
  %s5 = inlined_call_operand.hbm [shape: bf16[512,512], index: 5, kind: input, shape index: {}]
  %s6 = inlined_call_operand.vmem [shape: f32[1,512], index: 6, kind: input, shape index: {}]
  %s7 = inlined_call_operand.hbm [shape: f32[64,512], index: 7, kind: output, shape index: {}]
  %s8 = sld [smem:[#allocation0]]
  $region54: #{tpu_custom_call.1} parent=0
    _
  %s10 = ssub.s32 1, %s8
  %s11 = scalar_select 0, %s10, %s8
  %12 = sst [smem:[#allocation3]] %s4
  $region1: #{tpu_custom_call.1} parent=0
    #allocation4 [shape = 'u8[131072]{0}', space=vmem, size = 0x20000, scoped, tag = 'input window, operand 0, single buffered']
    #allocation5 [shape = 's32[1]{0}', space=sflag, size = 0x4, scoped, tag = 'scoped memory for tpu_custom_call.1']
    #allocation6 [shape = 's32[1]{0}', space=sflag, size = 0x4, scoped, tag = 'scoped memory for tpu_custom_call.1']
    #allocation7 [shape = 'u8[262144]{0}', space=vmem, size = 0x40000, scoped, tag = 'input window, operand 1, single buffered']
    #allocation8 [shape = 's32[1]{0}', space=sflag, size = 0x4, scoped, tag = 'scoped memory for tpu_custom_call.1']
    #allocation9 [shape = 'u8[1024]{0}', space=vmem, size = 0x400, scoped, tag = 'input window, operand 3, single buffered']
    #allocation10 [shape = 'u8[524288]{0}', space=vmem, size = 0x80000, scoped, tag = 'input window, operand 5, single buffered']
    #allocation11 [shape = 's32[1]{0}', space=sflag, size = 0x4, scoped, tag = 'scoped memory for tpu_custom_call.1']
    #allocation12 [shape = 'u8[131072]{0}', space=vmem, size = 0x20000, scoped, tag = 'output window, operand 0, single buffered']
    %13 = vsyncpa [#allocation5], 0
    %14 = vsyncpa [#allocation8], 0
    %15 = vsyncpa [#allocation11], 0
    %16 = vsyncpa [#allocation6], 0
    // Predicated region
    $region2: #{tpu_custom_call.1} parent=1 // pred_check
      _
    $region3: #{tpu_custom_call.1} parent=1 // pred_check_branch
      %18 = sbr.rel (0) target = $region5
    $region4: #{tpu_custom_call.1} parent=1 // pred_region
      %s20 = ssub.s32 4096, 4096
      %21 = vsyncadd [#allocation5], %s20
      %s22 = sshll.u32 [#allocation4], 4
      %s23 = int_to_ptr.vmem [resolvable:$true] %s22
      %28 = dma.hbm_to_vmem [thread:$0]  %s0, 4096, %s23, [#allocation5], 512, 512, 32
    $region5: #{tpu_custom_call.1} parent=1 // pred_fallthru
      _
    // Predicated region
    $region6: #{tpu_custom_call.1} parent=1 // pred_check
      _
    $region7: #{tpu_custom_call.1} parent=1 // pred_check_branch
      %30 = sbr.rel (0) target = $region9
    $region8: #{tpu_custom_call.1} parent=1 // pred_region
      %s32 = ssub.s32 8192, 8192
      %33 = vsyncadd [#allocation8], %s32
      %s34 = sshll.u32 [#allocation7], 4
      %s35 = int_to_ptr.vmem [resolvable:$true] %s34
      %40 = dma.hbm_to_vmem [thread:$0]  %s1, 8192, %s35, [#allocation8], 128, 128, 8
    $region9: #{tpu_custom_call.1} parent=1 // pred_fallthru
      _
    // Predicated region
    $region10: #{tpu_custom_call.1} parent=1 // pred_check
      _
    $region11: #{tpu_custom_call.1} parent=1 // pred_check_branch
      %42 = sbr.rel (0) target = $region13
    $region12: #{tpu_custom_call.1} parent=1 // pred_region
      _
    $region13: #{tpu_custom_call.1} parent=1 // pred_fallthru
      _
    // Predicated region
    $region14: #{tpu_custom_call.1} parent=1 // pred_check
      _
    $region15: #{tpu_custom_call.1} parent=1 // pred_check_branch
      %44 = sbr.rel (0) target = $region17
    $region16: #{tpu_custom_call.1} parent=1 // pred_region
      %s46 = ssub.s32 32, 32
      %47 = vsyncadd [#allocation8], %s46
      %s49 = sshll.u32 [#allocation9], 4
      %s50 = int_to_ptr.vmem [resolvable:$true] %s49
      %52 = dma.hbm_to_vmem [thread:$0]  %s3, 32, %s50, [#allocation8]
    $region17: #{tpu_custom_call.1} parent=1 // pred_fallthru
      _
    // Predicated region
    $region18: #{tpu_custom_call.1} parent=1 // pred_check
      _
    $region19: #{tpu_custom_call.1} parent=1 // pred_check_branch
      %54 = sbr.rel (0) target = $region21
    $region20: #{tpu_custom_call.1} parent=1 // pred_region
      _
    $region21: #{tpu_custom_call.1} parent=1 // pred_fallthru
      _
    // Predicated region
    $region22: #{tpu_custom_call.1} parent=1 // pred_check
      _
    $region23: #{tpu_custom_call.1} parent=1 // pred_check_branch
      %56 = sbr.rel (0) target = $region25
    $region24: #{tpu_custom_call.1} parent=1 // pred_region
      %s58 = ssub.s32 16384, 16384
      %59 = vsyncadd [#allocation11], %s58
      %s60 = sshll.u32 [#allocation10], 4
      %s61 = int_to_ptr.vmem [resolvable:$true] %s60
      %66 = dma.hbm_to_vmem [thread:$0]  %s5, 16384, %s61, [#allocation11], 256, 256, 16
    $region25: #{tpu_custom_call.1} parent=1 // pred_fallthru
      _
    // Predicated region
    $region26: #{tpu_custom_call.1} parent=1 // pred_check
      _
    $region27: #{tpu_custom_call.1} parent=1 // pred_check_branch
      %68 = sbr.rel (0) target = $region29
    $region28: #{tpu_custom_call.1} parent=1 // pred_region
      _
    $region29: #{tpu_custom_call.1} parent=1 // pred_fallthru
      _
    // Predicated region
    $region30: #{tpu_custom_call.1} parent=1 // pred_check
      _
    $region31: #{tpu_custom_call.1} parent=1 // pred_check_branch
      %70 = sbr.rel (0) target = $region33
    $region32: #{tpu_custom_call.1} parent=1 // pred_region
      %71 = dma.done [#allocation5], 4096
    $region33: #{tpu_custom_call.1} parent=1 // pred_fallthru
      _
    // Predicated region
    $region34: #{tpu_custom_call.1} parent=1 // pred_check
      _
    $region35: #{tpu_custom_call.1} parent=1 // pred_check_branch
      %73 = sbr.rel (0) target = $region37
    $region36: #{tpu_custom_call.1} parent=1 // pred_region
      %74 = dma.done [#allocation8], 8192
    $region37: #{tpu_custom_call.1} parent=1 // pred_fallthru
      _
    // Predicated region
    $region38: #{tpu_custom_call.1} parent=1 // pred_check
      _
    $region39: #{tpu_custom_call.1} parent=1 // pred_check_branch
      %76 = sbr.rel (0) target = $region41
    $region40: #{tpu_custom_call.1} parent=1 // pred_region
      %77 = dma.done [#allocation8], 32
    $region41: #{tpu_custom_call.1} parent=1 // pred_fallthru
      _
    // Predicated region
    $region42: #{tpu_custom_call.1} parent=1 // pred_check
      _
    $region43: #{tpu_custom_call.1} parent=1 // pred_check_branch
      %79 = sbr.rel (0) target = $region45
    $region44: #{tpu_custom_call.1} parent=1 // pred_region
      %80 = dma.done [#allocation11], 16384
    $region45: #{tpu_custom_call.1} parent=1 // pred_fallthru
      _
    %v81 = vld [vmem:[#allocation4] sm:$0xff]
    %v82 = vld [vmem:[#allocation4 + $0x8] sm:$0xff]
    %v83 = vld [vmem:[#allocation4 + $0x10] sm:$0xff]
    %v84 = vld [vmem:[#allocation4 + $0x18] sm:$0xff]
    %v85 = vld [vmem:[#allocation4 + $0x20] sm:$0xff]
    %v86 = vld [vmem:[#allocation4 + $0x28] sm:$0xff]
    %v87 = vld [vmem:[#allocation4 + $0x30] sm:$0xff]
    %v88 = vld [vmem:[#allocation4 + $0x38] sm:$0xff]
    %v89 = vld [vmem:[#allocation4 + $0x40] sm:$0xff]
    %v90 = vld [vmem:[#allocation4 + $0x48] sm:$0xff]
    %v91 = vld [vmem:[#allocation4 + $0x50] sm:$0xff]
    %v92 = vld [vmem:[#allocation4 + $0x58] sm:$0xff]
    %v93 = vld [vmem:[#allocation4 + $0x60] sm:$0xff]
    %v94 = vld [vmem:[#allocation4 + $0x68] sm:$0xff]
    %v95 = vld [vmem:[#allocation4 + $0x70] sm:$0xff]
    %v96 = vld [vmem:[#allocation4 + $0x78] sm:$0xff]
    %v97 = vld [vmem:[#allocation4 + $0x80] sm:$0xff]
    %v98 = vld [vmem:[#allocation4 + $0x88] sm:$0xff]
    %v99 = vld [vmem:[#allocation4 + $0x90] sm:$0xff]
    %v100 = vld [vmem:[#allocation4 + $0x98] sm:$0xff]
    %v101 = vld [vmem:[#allocation4 + $0xa0] sm:$0xff]
    %v102 = vld [vmem:[#allocation4 + $0xa8] sm:$0xff]
    %v103 = vld [vmem:[#allocation4 + $0xb0] sm:$0xff]
    %v104 = vld [vmem:[#allocation4 + $0xb8] sm:$0xff]
    %v105 = vld [vmem:[#allocation4 + $0xc0] sm:$0xff]
    %v106 = vld [vmem:[#allocation4 + $0xc8] sm:$0xff]
    %v107 = vld [vmem:[#allocation4 + $0xd0] sm:$0xff]
    %v108 = vld [vmem:[#allocation4 + $0xd8] sm:$0xff]
    %v109 = vld [vmem:[#allocation4 + $0xe0] sm:$0xff]
    %v110 = vld [vmem:[#allocation4 + $0xe8] sm:$0xff]
    %v111 = vld [vmem:[#allocation4 + $0xf0] sm:$0xff]
    %v112 = vld [vmem:[#allocation4 + $0xf8] sm:$0xff]
    %v113 = vpack.c.bf16 %v85, %v81
    %v114 = vpack.c.bf16 %v86, %v82
    %v115 = vpack.c.bf16 %v87, %v83
    %v116 = vpack.c.bf16 %v88, %v84
    %v117 = vpack.c.bf16 %v93, %v89
    %v118 = vpack.c.bf16 %v94, %v90
    %v119 = vpack.c.bf16 %v95, %v91
    %v120 = vpack.c.bf16 %v96, %v92
    %v121 = vpack.c.bf16 %v101, %v97
    %v122 = vpack.c.bf16 %v102, %v98
    %v123 = vpack.c.bf16 %v103, %v99
    %v124 = vpack.c.bf16 %v104, %v100
    %v125 = vpack.c.bf16 %v109, %v105
    %v126 = vpack.c.bf16 %v110, %v106
    %v127 = vpack.c.bf16 %v111, %v107
    %v128 = vpack.c.bf16 %v112, %v108
    %v129 = vld [vmem:[#allocation7] sm:$0xff]
    %v130 = vld [vmem:[#allocation7 + $0x8] sm:$0xff]
    %v131 = vld [vmem:[#allocation7 + $0x10] sm:$0xff]
    %v132 = vld [vmem:[#allocation7 + $0x18] sm:$0xff]
    %v133 = vld [vmem:[#allocation7 + $0x20] sm:$0xff]
    %v134 = vld [vmem:[#allocation7 + $0x28] sm:$0xff]
    %v135 = vld [vmem:[#allocation7 + $0x30] sm:$0xff]
    %v136 = vld [vmem:[#allocation7 + $0x38] sm:$0xff]
    %v137 = vld [vmem:[#allocation7 + $0x40] sm:$0xff]
    %v138 = vld [vmem:[#allocation7 + $0x48] sm:$0xff]
    %v139 = vld [vmem:[#allocation7 + $0x50] sm:$0xff]
    %v140 = vld [vmem:[#allocation7 + $0x58] sm:$0xff]
    %v141 = vld [vmem:[#allocation7 + $0x60] sm:$0xff]
    %v142 = vld [vmem:[#allocation7 + $0x68] sm:$0xff]
    %v143 = vld [vmem:[#allocation7 + $0x70] sm:$0xff]
    %v144 = vld [vmem:[#allocation7 + $0x78] sm:$0xff]
    %v145 = vld [vmem:[#allocation7 + $0x80] sm:$0xff]
    %v146 = vld [vmem:[#allocation7 + $0x88] sm:$0xff]
    %v147 = vld [vmem:[#allocation7 + $0x90] sm:$0xff]
    %v148 = vld [vmem:[#allocation7 + $0x98] sm:$0xff]
    %v149 = vld [vmem:[#allocation7 + $0xa0] sm:$0xff]
    %v150 = vld [vmem:[#allocation7 + $0xa8] sm:$0xff]
    %v151 = vld [vmem:[#allocation7 + $0xb0] sm:$0xff]
    %v152 = vld [vmem:[#allocation7 + $0xb8] sm:$0xff]
    %v153 = vld [vmem:[#allocation7 + $0xc0] sm:$0xff]
    %v154 = vld [vmem:[#allocation7 + $0xc8] sm:$0xff]
    %v155 = vld [vmem:[#allocation7 + $0xd0] sm:$0xff]
    %v156 = vld [vmem:[#allocation7 + $0xd8] sm:$0xff]
    %v157 = vld [vmem:[#allocation7 + $0xe0] sm:$0xff]
    %v158 = vld [vmem:[#allocation7 + $0xe8] sm:$0xff]
    %v159 = vld [vmem:[#allocation7 + $0xf0] sm:$0xff]
    %v160 = vld [vmem:[#allocation7 + $0xf8] sm:$0xff]
    %v161 = vld [vmem:[#allocation7 + $0x100] sm:$0xff]
    %v162 = vld [vmem:[#allocation7 + $0x108] sm:$0xff]
    %v163 = vld [vmem:[#allocation7 + $0x110] sm:$0xff]
    %v164 = vld [vmem:[#allocation7 + $0x118] sm:$0xff]
    %v165 = vld [vmem:[#allocation7 + $0x120] sm:$0xff]
    %v166 = vld [vmem:[#allocation7 + $0x128] sm:$0xff]
    %v167 = vld [vmem:[#allocation7 + $0x130] sm:$0xff]
    %v168 = vld [vmem:[#allocation7 + $0x138] sm:$0xff]
    %v169 = vld [vmem:[#allocation7 + $0x140] sm:$0xff]
    %v170 = vld [vmem:[#allocation7 + $0x148] sm:$0xff]
    %v171 = vld [vmem:[#allocation7 + $0x150] sm:$0xff]
    %v172 = vld [vmem:[#allocation7 + $0x158] sm:$0xff]
    %v173 = vld [vmem:[#allocation7 + $0x160] sm:$0xff]
    %v174 = vld [vmem:[#allocation7 + $0x168] sm:$0xff]
    %v175 = vld [vmem:[#allocation7 + $0x170] sm:$0xff]
    %v176 = vld [vmem:[#allocation7 + $0x178] sm:$0xff]
    %v177 = vld [vmem:[#allocation7 + $0x180] sm:$0xff]
    %v178 = vld [vmem:[#allocation7 + $0x188] sm:$0xff]
    %v179 = vld [vmem:[#allocation7 + $0x190] sm:$0xff]
    %v180 = vld [vmem:[#allocation7 + $0x198] sm:$0xff]
    %v181 = vld [vmem:[#allocation7 + $0x1a0] sm:$0xff]
    %v182 = vld [vmem:[#allocation7 + $0x1a8] sm:$0xff]
    %v183 = vld [vmem:[#allocation7 + $0x1b0] sm:$0xff]
    %v184 = vld [vmem:[#allocation7 + $0x1b8] sm:$0xff]
    %v185 = vld [vmem:[#allocation7 + $0x1c0] sm:$0xff]
    %v186 = vld [vmem:[#allocation7 + $0x1c8] sm:$0xff]
    %v187 = vld [vmem:[#allocation7 + $0x1d0] sm:$0xff]
    %v188 = vld [vmem:[#allocation7 + $0x1d8] sm:$0xff]
    %v189 = vld [vmem:[#allocation7 + $0x1e0] sm:$0xff]
    %v190 = vld [vmem:[#allocation7 + $0x1e8] sm:$0xff]
    %v191 = vld [vmem:[#allocation7 + $0x1f0] sm:$0xff]
    %v192 = vld [vmem:[#allocation7 + $0x1f8] sm:$0xff]
    %v193 = vld [vmem:[%s2] sm:$0x3]
    %v195 = vlaneseq
    %v196 = vshrl.u32 %v195, 7
    %v197 = vsub.s32 0, %v196
    %v198 = vrot.slane %v193, %v197
    %v199 = vlaneseq
    %v200 = vshrl.u32 %v199, 7
    %v201 = vsub.s32 1, %v200
    %v202 = vrot.slane %v193, %v201
    %v269 = vunpack.c.l.b16 %v129
    %v270 = vunpack.c.h.b16 %v129
    %v271 = vunpack.c.l.b16 %v130
    %v272 = vunpack.c.h.b16 %v130
    %v273 = vunpack.c.l.b16 %v131
    %v274 = vunpack.c.h.b16 %v131
    %v275 = vunpack.c.l.b16 %v132
    %v276 = vunpack.c.h.b16 %v132
    %v277 = vunpack.c.l.b16 %v133
    %v278 = vunpack.c.h.b16 %v133
    %v279 = vunpack.c.l.b16 %v134
    %v280 = vunpack.c.h.b16 %v134
    %v281 = vunpack.c.l.b16 %v135
    %v282 = vunpack.c.h.b16 %v135
    %v283 = vunpack.c.l.b16 %v136
    %v284 = vunpack.c.h.b16 %v136
    %v285 = vunpack.c.l.b16 %v137
    %v286 = vunpack.c.h.b16 %v137
    %v287 = vunpack.c.l.b16 %v138
    %v288 = vunpack.c.h.b16 %v138
    %v289 = vunpack.c.l.b16 %v139
    %v290 = vunpack.c.h.b16 %v139
    %v291 = vunpack.c.l.b16 %v140
    %v292 = vunpack.c.h.b16 %v140
    %v293 = vunpack.c.l.b16 %v141
    %v294 = vunpack.c.h.b16 %v141
    %v295 = vunpack.c.l.b16 %v142
    %v296 = vunpack.c.h.b16 %v142
    %v297 = vunpack.c.l.b16 %v143
    %v298 = vunpack.c.h.b16 %v143
    %v299 = vunpack.c.l.b16 %v144
    %v300 = vunpack.c.h.b16 %v144
    %v301 = vunpack.c.l.b16 %v145
    %v302 = vunpack.c.h.b16 %v145
    %v303 = vunpack.c.l.b16 %v146
    %v304 = vunpack.c.h.b16 %v146
    %v305 = vunpack.c.l.b16 %v147
    %v306 = vunpack.c.h.b16 %v147
    %v307 = vunpack.c.l.b16 %v148
    %v308 = vunpack.c.h.b16 %v148
    %v309 = vunpack.c.l.b16 %v149
    %v310 = vunpack.c.h.b16 %v149
    %v311 = vunpack.c.l.b16 %v150
    %v312 = vunpack.c.h.b16 %v150
    %v313 = vunpack.c.l.b16 %v151
    %v314 = vunpack.c.h.b16 %v151
    %v315 = vunpack.c.l.b16 %v152
    %v316 = vunpack.c.h.b16 %v152
    %v317 = vunpack.c.l.b16 %v153
    %v318 = vunpack.c.h.b16 %v153
    %v319 = vunpack.c.l.b16 %v154
    %v320 = vunpack.c.h.b16 %v154
    %v321 = vunpack.c.l.b16 %v155
    %v322 = vunpack.c.h.b16 %v155
    %v323 = vunpack.c.l.b16 %v156
    %v324 = vunpack.c.h.b16 %v156
    %v325 = vunpack.c.l.b16 %v157
    %v326 = vunpack.c.h.b16 %v157
    %v327 = vunpack.c.l.b16 %v158
    %v328 = vunpack.c.h.b16 %v158
    %v329 = vunpack.c.l.b16 %v159
    %v330 = vunpack.c.h.b16 %v159
    %v331 = vunpack.c.l.b16 %v160
    %v332 = vunpack.c.h.b16 %v160
    %v333 = vunpack.c.l.b16 %v161
    %v334 = vunpack.c.h.b16 %v161
    %v335 = vunpack.c.l.b16 %v162
    %v336 = vunpack.c.h.b16 %v162
    %v337 = vunpack.c.l.b16 %v163
    %v338 = vunpack.c.h.b16 %v163
    %v339 = vunpack.c.l.b16 %v164
    %v340 = vunpack.c.h.b16 %v164
    %v341 = vunpack.c.l.b16 %v165
    %v342 = vunpack.c.h.b16 %v165
    %v343 = vunpack.c.l.b16 %v166
    %v344 = vunpack.c.h.b16 %v166
    %v345 = vunpack.c.l.b16 %v167
    %v346 = vunpack.c.h.b16 %v167
    %v347 = vunpack.c.l.b16 %v168
    %v348 = vunpack.c.h.b16 %v168
    %v349 = vunpack.c.l.b16 %v169
    %v350 = vunpack.c.h.b16 %v169
    %v351 = vunpack.c.l.b16 %v170
    %v352 = vunpack.c.h.b16 %v170
    %v353 = vunpack.c.l.b16 %v171
    %v354 = vunpack.c.h.b16 %v171
    %v355 = vunpack.c.l.b16 %v172
    %v356 = vunpack.c.h.b16 %v172
    %v357 = vunpack.c.l.b16 %v173
    %v358 = vunpack.c.h.b16 %v173
    %v359 = vunpack.c.l.b16 %v174
    %v360 = vunpack.c.h.b16 %v174
    %v361 = vunpack.c.l.b16 %v175
    %v362 = vunpack.c.h.b16 %v175
    %v363 = vunpack.c.l.b16 %v176
    %v364 = vunpack.c.h.b16 %v176
    %v365 = vunpack.c.l.b16 %v177
    %v366 = vunpack.c.h.b16 %v177
    %v367 = vunpack.c.l.b16 %v178
    %v368 = vunpack.c.h.b16 %v178
    %v369 = vunpack.c.l.b16 %v179
    %v370 = vunpack.c.h.b16 %v179
    %v371 = vunpack.c.l.b16 %v180
    %v372 = vunpack.c.h.b16 %v180
    %v373 = vunpack.c.l.b16 %v181
    %v374 = vunpack.c.h.b16 %v181
    %v375 = vunpack.c.l.b16 %v182
    %v376 = vunpack.c.h.b16 %v182
    %v377 = vunpack.c.l.b16 %v183
    %v378 = vunpack.c.h.b16 %v183
    %v379 = vunpack.c.l.b16 %v184
    %v380 = vunpack.c.h.b16 %v184
    %v381 = vunpack.c.l.b16 %v185
    %v382 = vunpack.c.h.b16 %v185
    %v383 = vunpack.c.l.b16 %v186
    %v384 = vunpack.c.h.b16 %v186
    %v385 = vunpack.c.l.b16 %v187
    %v386 = vunpack.c.h.b16 %v187
    %v387 = vunpack.c.l.b16 %v188
    %v388 = vunpack.c.h.b16 %v188
    %v389 = vunpack.c.l.b16 %v189
    %v390 = vunpack.c.h.b16 %v189
    %v391 = vunpack.c.l.b16 %v190
    %v392 = vunpack.c.h.b16 %v190
    %v393 = vunpack.c.l.b16 %v191
    %v394 = vunpack.c.h.b16 %v191
    %v395 = vunpack.c.l.b16 %v192
    %v396 = vunpack.c.h.b16 %v192
    %v397 = vpack.c.b16 %v271, %v269
    %v398 = vpack.c.b16 %v272, %v270
    %v399 = vpack.c.b16 %v275, %v273
    %v400 = vpack.c.b16 %v276, %v274
    %v401 = vpack.c.b16 %v279, %v277
    %v402 = vpack.c.b16 %v280, %v278
    %v403 = vpack.c.b16 %v283, %v281
    %v404 = vpack.c.b16 %v284, %v282
    %v405 = vpack.c.b16 %v287, %v285
    %v406 = vpack.c.b16 %v288, %v286
    %v407 = vpack.c.b16 %v291, %v289
    %v408 = vpack.c.b16 %v292, %v290
    %v409 = vpack.c.b16 %v295, %v293
    %v410 = vpack.c.b16 %v296, %v294
    %v411 = vpack.c.b16 %v299, %v297
    %v412 = vpack.c.b16 %v300, %v298
    %v413 = vpack.c.b16 %v303, %v301
    %v414 = vpack.c.b16 %v304, %v302
    %v415 = vpack.c.b16 %v307, %v305
    %v416 = vpack.c.b16 %v308, %v306
    %v417 = vpack.c.b16 %v311, %v309
    %v418 = vpack.c.b16 %v312, %v310
    %v419 = vpack.c.b16 %v315, %v313
    %v420 = vpack.c.b16 %v316, %v314
    %v421 = vpack.c.b16 %v319, %v317
    %v422 = vpack.c.b16 %v320, %v318
    %v423 = vpack.c.b16 %v323, %v321
    %v424 = vpack.c.b16 %v324, %v322
    %v425 = vpack.c.b16 %v327, %v325
    %v426 = vpack.c.b16 %v328, %v326
    %v427 = vpack.c.b16 %v331, %v329
    %v428 = vpack.c.b16 %v332, %v330
    %v429 = vpack.c.b16 %v335, %v333
    %v430 = vpack.c.b16 %v336, %v334
    %v431 = vpack.c.b16 %v339, %v337
    %v432 = vpack.c.b16 %v340, %v338
    %v433 = vpack.c.b16 %v343, %v341
    %v434 = vpack.c.b16 %v344, %v342
    %v435 = vpack.c.b16 %v347, %v345
    %v436 = vpack.c.b16 %v348, %v346
    %v437 = vpack.c.b16 %v351, %v349
    %v438 = vpack.c.b16 %v352, %v350
    %v439 = vpack.c.b16 %v355, %v353
    %v440 = vpack.c.b16 %v356, %v354
    %v441 = vpack.c.b16 %v359, %v357
    %v442 = vpack.c.b16 %v360, %v358
    %v443 = vpack.c.b16 %v363, %v361
    %v444 = vpack.c.b16 %v364, %v362
    %v445 = vpack.c.b16 %v367, %v365
    %v446 = vpack.c.b16 %v368, %v366
    %v447 = vpack.c.b16 %v371, %v369
    %v448 = vpack.c.b16 %v372, %v370
    %v449 = vpack.c.b16 %v375, %v373
    %v450 = vpack.c.b16 %v376, %v374
    %v451 = vpack.c.b16 %v379, %v377
    %v452 = vpack.c.b16 %v380, %v378
    %v453 = vpack.c.b16 %v383, %v381
    %v454 = vpack.c.b16 %v384, %v382
    %v455 = vpack.c.b16 %v387, %v385
    %v456 = vpack.c.b16 %v388, %v386
    %v457 = vpack.c.b16 %v391, %v389
    %v458 = vpack.c.b16 %v392, %v390
    %v459 = vpack.c.b16 %v395, %v393
    %v460 = vpack.c.b16 %v396, %v394
    %525 = vmatprep.subr.bf16.mxu0 %v412
    %526 = vmatpush1.bf16.msra.mxu0 %v411
    %527 = vmatprep.subr.bf16.mxu0 %v410
    %528 = vmatpush1.bf16.msra.mxu0 %v409
    %529 = vmatprep.subr.bf16.mxu0 %v408
    %530 = vmatpush1.bf16.msra.mxu0 %v407
    %531 = vmatprep.subr.bf16.mxu0 %v406
    %532 = vmatpush1.bf16.msra.mxu0 %v405
    %533 = vmatprep.subr.bf16.mxu0 %v404
    %534 = vmatpush1.bf16.msra.mxu0 %v403
    %535 = vmatprep.subr.bf16.mxu0 %v402
    %536 = vmatpush1.bf16.msra.mxu0 %v401
    %537 = vmatprep.subr.bf16.mxu0 %v400
    %538 = vmatpush1.bf16.msra.mxu0 %v399
    %539 = vmatprep.subr.bf16.mxu0 %v398
    %540 = vmatpush1.bf16.msra.mxu0 %v397
    %541 = vmatprep.subr.bf16.mxu0 %v428
    %542 = vmatpush2.bf16.msra.mxu0 %v427
    %543 = vmatprep.subr.bf16.mxu0 %v426
    %544 = vmatpush2.bf16.msra.mxu0 %v425
    %545 = vmatprep.subr.bf16.mxu0 %v424
    %546 = vmatpush2.bf16.msra.mxu0 %v423
    %547 = vmatprep.subr.bf16.mxu0 %v422
    %548 = vmatpush2.bf16.msra.mxu0 %v421
    %549 = vmatprep.subr.bf16.mxu0 %v420
    %550 = vmatpush2.bf16.msra.mxu0 %v419
    %551 = vmatprep.subr.bf16.mxu0 %v418
    %552 = vmatpush2.bf16.msra.mxu0 %v417
    %553 = vmatprep.subr.bf16.mxu0 %v416
    %554 = vmatpush2.bf16.msra.mxu0 %v415
    %555 = vmatprep.subr.bf16.mxu0 %v414
    %556 = vmatpush2.bf16.msra.mxu0 %v413
    %557 = vmatprep.mubr.bf16.mxu0 %v114
    %558 = vmatmul.mubr.bf16.gmra.mxu0 %v113
    %v559 = vpop.f32.mrf.mxu0
    %v560 = vadd.f32 %v198, %v559
    %v561 = vpop.f32.mrf.mxu0
    %v562 = vadd.f32 %v202, %v561
    %v563 = vpop.f32.mrf.mxu0
    %v564 = vadd.f32 %v198, %v563
    %v565 = vpop.f32.mrf.mxu0
    %v566 = vadd.f32 %v202, %v565
    %567 = vmatprep.mubr.bf16.mxu0 %v118
    %568 = vmatmul.mubr.bf16.gmra.mxu0 %v117
    %v569 = vpop.f32.mrf.mxu0
    %v570 = vadd.f32 %v198, %v569
    %v571 = vpop.f32.mrf.mxu0
    %v572 = vadd.f32 %v202, %v571
    %v573 = vpop.f32.mrf.mxu0
    %v574 = vadd.f32 %v198, %v573
    %v575 = vpop.f32.mrf.mxu0
    %v576 = vadd.f32 %v202, %v575
    %577 = vmatprep.mubr.bf16.mxu0 %v122
    %578 = vmatmul.mubr.bf16.gmra.mxu0 %v121
    %v579 = vpop.f32.mrf.mxu0
    %v580 = vadd.f32 %v198, %v579
    %v581 = vpop.f32.mrf.mxu0
    %v582 = vadd.f32 %v202, %v581
    %v583 = vpop.f32.mrf.mxu0
    %v584 = vadd.f32 %v198, %v583
    %v585 = vpop.f32.mrf.mxu0
    %v586 = vadd.f32 %v202, %v585
    %587 = vmatprep.mubr.bf16.mxu0 %v126
    %588 = vmatmul.mubr.bf16.gmra.mxu0 %v125
    %v589 = vpop.f32.mrf.mxu0
    %v590 = vadd.f32 %v198, %v589
    %v591 = vpop.f32.mrf.mxu0
    %v592 = vadd.f32 %v202, %v591
    %v593 = vpop.f32.mrf.mxu0
    %v594 = vadd.f32 %v198, %v593
    %v595 = vpop.f32.mrf.mxu0
    %v596 = vadd.f32 %v202, %v595
    %597 = vdwg.mxu0
    %598 = vmatprep.subr.bf16.mxu0 %v444
    %599 = vmatpush1.bf16.msra.mxu0 %v443
    %600 = vmatprep.subr.bf16.mxu0 %v442
    %601 = vmatpush1.bf16.msra.mxu0 %v441
    %602 = vmatprep.subr.bf16.mxu0 %v440
    %603 = vmatpush1.bf16.msra.mxu0 %v439
    %604 = vmatprep.subr.bf16.mxu0 %v438
    %605 = vmatpush1.bf16.msra.mxu0 %v437
    %606 = vmatprep.subr.bf16.mxu0 %v436
    %607 = vmatpush1.bf16.msra.mxu0 %v435
    %608 = vmatprep.subr.bf16.mxu0 %v434
    %609 = vmatpush1.bf16.msra.mxu0 %v433
    %610 = vmatprep.subr.bf16.mxu0 %v432
    %611 = vmatpush1.bf16.msra.mxu0 %v431
    %612 = vmatprep.subr.bf16.mxu0 %v430
    %613 = vmatpush1.bf16.msra.mxu0 %v429
    %614 = vmatprep.subr.bf16.mxu0 %v460
    %615 = vmatpush2.bf16.msra.mxu0 %v459
    %616 = vmatprep.subr.bf16.mxu0 %v458
    %617 = vmatpush2.bf16.msra.mxu0 %v457
    %618 = vmatprep.subr.bf16.mxu0 %v456
    %619 = vmatpush2.bf16.msra.mxu0 %v455
    %620 = vmatprep.subr.bf16.mxu0 %v454
    %621 = vmatpush2.bf16.msra.mxu0 %v453
    %622 = vmatprep.subr.bf16.mxu0 %v452
    %623 = vmatpush2.bf16.msra.mxu0 %v451
    %624 = vmatprep.subr.bf16.mxu0 %v450
    %625 = vmatpush2.bf16.msra.mxu0 %v449
    %626 = vmatprep.subr.bf16.mxu0 %v448
    %627 = vmatpush2.bf16.msra.mxu0 %v447
    %628 = vmatprep.subr.bf16.mxu0 %v446
    %629 = vmatpush2.bf16.msra.mxu0 %v445
    %630 = vmatprep.mubr.bf16.mxu0 %v116
    %631 = vmatmul.mubr.bf16.gmra.mxu0 %v115
    %v632 = vpop.f32.mrf.mxu0
    %v633 = vadd.f32 %v560, %v632
    %v634 = vpop.f32.mrf.mxu0
    %v635 = vadd.f32 %v562, %v634
    %v636 = vpop.f32.mrf.mxu0
    %v637 = vadd.f32 %v564, %v636
    %v638 = vpop.f32.mrf.mxu0
    %v639 = vadd.f32 %v566, %v638
    %640 = vmatprep.mubr.bf16.mxu0 %v120
    %641 = vmatmul.mubr.bf16.gmra.mxu0 %v119
    %v642 = vpop.f32.mrf.mxu0
    %v643 = vadd.f32 %v570, %v642
    %v644 = vpop.f32.mrf.mxu0
    %v645 = vadd.f32 %v572, %v644
    %v646 = vpop.f32.mrf.mxu0
    %v647 = vadd.f32 %v574, %v646
    %v648 = vpop.f32.mrf.mxu0
    %v649 = vadd.f32 %v576, %v648
    %650 = vmatprep.mubr.bf16.mxu0 %v124
    %651 = vmatmul.mubr.bf16.gmra.mxu0 %v123
    %v652 = vpop.f32.mrf.mxu0
    %v653 = vadd.f32 %v580, %v652
    %v654 = vpop.f32.mrf.mxu0
    %v655 = vadd.f32 %v582, %v654
    %v656 = vpop.f32.mrf.mxu0
    %v657 = vadd.f32 %v584, %v656
    %v658 = vpop.f32.mrf.mxu0
    %v659 = vadd.f32 %v586, %v658
    %660 = vmatprep.mubr.bf16.mxu0 %v128
    %661 = vmatmul.mubr.bf16.gmra.mxu0 %v127
    %v662 = vpop.f32.mrf.mxu0
    %v663 = vadd.f32 %v590, %v662
    %v664 = vpop.f32.mrf.mxu0
    %v665 = vadd.f32 %v592, %v664
    %v666 = vpop.f32.mrf.mxu0
    %v667 = vadd.f32 %v594, %v666
    %v668 = vpop.f32.mrf.mxu0
    %v669 = vadd.f32 %v596, %v668
    %670 = vdwg.mxu0
    %v671 = vmax.f32 %v633, 0.0
    %v672 = vmax.f32 %v635, 0.0
    %v673 = vmax.f32 %v637, 0.0
    %v674 = vmax.f32 %v639, 0.0
    %v675 = vmax.f32 %v643, 0.0
    %v676 = vmax.f32 %v645, 0.0
    %v677 = vmax.f32 %v647, 0.0
    %v678 = vmax.f32 %v649, 0.0
    %v679 = vmax.f32 %v653, 0.0
    %v680 = vmax.f32 %v655, 0.0
    %v681 = vmax.f32 %v657, 0.0
    %v682 = vmax.f32 %v659, 0.0
    %v683 = vmax.f32 %v663, 0.0
    %v684 = vmax.f32 %v665, 0.0
    %v685 = vmax.f32 %v667, 0.0
    %v686 = vmax.f32 %v669, 0.0
    %v687 = vld [vmem:[#allocation9] sm:$0x3]
    %v689 = vlaneseq
    %v690 = vshrl.u32 %v689, 7
    %v691 = vsub.s32 0, %v690
    %v692 = vrot.slane %v687, %v691
    %v693 = vlaneseq
    %v694 = vshrl.u32 %v693, 7
    %v695 = vsub.s32 1, %v694
    %v696 = vrot.slane %v687, %v695
    %v699 = vmul.f32 %v671, %v692
    %v700 = vmul.f32 %v672, %v696
    %v701 = vmul.f32 %v673, %v692
    %v702 = vmul.f32 %v674, %v696
    %v703 = vmul.f32 %v675, %v692
    %v704 = vmul.f32 %v676, %v696
    %v705 = vmul.f32 %v677, %v692
    %v706 = vmul.f32 %v678, %v696
    %v707 = vmul.f32 %v679, %v692
    %v708 = vmul.f32 %v680, %v696
    %v709 = vmul.f32 %v681, %v692
    %v710 = vmul.f32 %v682, %v696
    %v711 = vmul.f32 %v683, %v692
    %v712 = vmul.f32 %v684, %v696
    %v713 = vmul.f32 %v685, %v692
    %v714 = vmul.f32 %v686, %v696
    %v715 = vadd.f32 %v699, %v700
    %716 = vadd.xlane.f32.xlu0 %v715
    %v717 = vpop.xlane.xlu0 %716
    %v718 = vadd.f32 %v701, %v702
    %719 = vadd.xlane.f32.xlu0 %v718
    %v720 = vpop.xlane.xlu0 %719
    %v721 = vadd.f32 %v703, %v704
    %722 = vadd.xlane.f32.xlu0 %v721
    %v723 = vpop.xlane.xlu0 %722
    %v724 = vadd.f32 %v705, %v706
    %725 = vadd.xlane.f32.xlu0 %v724
    %v726 = vpop.xlane.xlu0 %725
    %v727 = vadd.f32 %v707, %v708
    %728 = vadd.xlane.f32.xlu0 %v727
    %v729 = vpop.xlane.xlu0 %728
    %v730 = vadd.f32 %v709, %v710
    %731 = vadd.xlane.f32.xlu0 %v730
    %v732 = vpop.xlane.xlu0 %731
    %v733 = vadd.f32 %v711, %v712
    %734 = vadd.xlane.f32.xlu0 %v733
    %v735 = vpop.xlane.xlu0 %734
    %v736 = vadd.f32 %v713, %v714
    %737 = vadd.xlane.f32.xlu0 %v736
    %v738 = vpop.xlane.xlu0 %737
    %s739 = sld [smem:[#allocation3]]
    %v740 = vstv %s739
    %v741 = vadd.f32 %v717, %v740
    %v742 = vadd.f32 %v720, %v740
    %v743 = vadd.f32 %v723, %v740
    %v744 = vadd.f32 %v726, %v740
    %v745 = vadd.f32 %v729, %v740
    %v746 = vadd.f32 %v732, %v740
    %v747 = vadd.f32 %v735, %v740
    %v748 = vadd.f32 %v738, %v740
    %v749 = vxor.u32 %v741, 2147483648
    %v750 = vxor.u32 %v742, 2147483648
    %v751 = vxor.u32 %v743, 2147483648
    %v752 = vxor.u32 %v744, 2147483648
    %v753 = vxor.u32 %v745, 2147483648
    %v754 = vxor.u32 %v746, 2147483648
    %v755 = vxor.u32 %v747, 2147483648
    %v756 = vxor.u32 %v748, 2147483648
    %v757 = vmul.f32 %v749, 1.442695
    %v758 = vpow.pop %v757
    %v759 = vmul.f32 %v750, 1.442695
    %v760 = vpow.pop %v759
    %v761 = vmul.f32 %v751, 1.442695
    %v762 = vpow.pop %v761
    %v763 = vmul.f32 %v752, 1.442695
    %v764 = vpow.pop %v763
    %v765 = vmul.f32 %v753, 1.442695
    %v766 = vpow.pop %v765
    %v767 = vmul.f32 %v754, 1.442695
    %v768 = vpow.pop %v767
    %v769 = vmul.f32 %v755, 1.442695
    %v770 = vpow.pop %v769
    %v771 = vmul.f32 %v756, 1.442695
    %v772 = vpow.pop %v771
    %v773 = vadd.f32 %v758, 1.0
    %v774 = vadd.f32 %v760, 1.0
    %v775 = vadd.f32 %v762, 1.0
    %v776 = vadd.f32 %v764, 1.0
    %v777 = vadd.f32 %v766, 1.0
    %v778 = vadd.f32 %v768, 1.0
    %v779 = vadd.f32 %v770, 1.0
    %v780 = vadd.f32 %v772, 1.0
    %v781 = vrcp.pop %v773
    %v782 = vmul.f32 1.0, %v781
    %v783 = vrcp.pop %v774
    %v784 = vmul.f32 1.0, %v783
    %v785 = vrcp.pop %v775
    %v786 = vmul.f32 1.0, %v785
    %v787 = vrcp.pop %v776
    %v788 = vmul.f32 1.0, %v787
    %v789 = vrcp.pop %v777
    %v790 = vmul.f32 1.0, %v789
    %v791 = vrcp.pop %v778
    %v792 = vmul.f32 1.0, %v791
    %v793 = vrcp.pop %v779
    %v794 = vmul.f32 1.0, %v793
    %v795 = vrcp.pop %v780
    %v796 = vmul.f32 1.0, %v795
    %v797 = vld [vmem:[#allocation10] sm:$0xff]
    %v798 = vld [vmem:[#allocation10 + $0x8] sm:$0xff]
    %v799 = vld [vmem:[#allocation10 + $0x10] sm:$0xff]
    %v800 = vld [vmem:[#allocation10 + $0x18] sm:$0xff]
    %v801 = vld [vmem:[#allocation10 + $0x20] sm:$0xff]
    %v802 = vld [vmem:[#allocation10 + $0x28] sm:$0xff]
    %v803 = vld [vmem:[#allocation10 + $0x30] sm:$0xff]
    %v804 = vld [vmem:[#allocation10 + $0x38] sm:$0xff]
    %v805 = vld [vmem:[#allocation10 + $0x40] sm:$0xff]
    %v806 = vld [vmem:[#allocation10 + $0x48] sm:$0xff]
    %v807 = vld [vmem:[#allocation10 + $0x50] sm:$0xff]
    %v808 = vld [vmem:[#allocation10 + $0x58] sm:$0xff]
    %v809 = vld [vmem:[#allocation10 + $0x60] sm:$0xff]
    %v810 = vld [vmem:[#allocation10 + $0x68] sm:$0xff]
    %v811 = vld [vmem:[#allocation10 + $0x70] sm:$0xff]
    %v812 = vld [vmem:[#allocation10 + $0x78] sm:$0xff]
    %v813 = vld [vmem:[#allocation10 + $0x80] sm:$0xff]
    %v814 = vld [vmem:[#allocation10 + $0x88] sm:$0xff]
    %v815 = vld [vmem:[#allocation10 + $0x90] sm:$0xff]
    %v816 = vld [vmem:[#allocation10 + $0x98] sm:$0xff]
    %v817 = vld [vmem:[#allocation10 + $0xa0] sm:$0xff]
    %v818 = vld [vmem:[#allocation10 + $0xa8] sm:$0xff]
    %v819 = vld [vmem:[#allocation10 + $0xb0] sm:$0xff]
    %v820 = vld [vmem:[#allocation10 + $0xb8] sm:$0xff]
    %v821 = vld [vmem:[#allocation10 + $0xc0] sm:$0xff]
    %v822 = vld [vmem:[#allocation10 + $0xc8] sm:$0xff]
    %v823 = vld [vmem:[#allocation10 + $0xd0] sm:$0xff]
    %v824 = vld [vmem:[#allocation10 + $0xd8] sm:$0xff]
    %v825 = vld [vmem:[#allocation10 + $0xe0] sm:$0xff]
    %v826 = vld [vmem:[#allocation10 + $0xe8] sm:$0xff]
    %v827 = vld [vmem:[#allocation10 + $0xf0] sm:$0xff]
    %v828 = vld [vmem:[#allocation10 + $0xf8] sm:$0xff]
    %v829 = vld [vmem:[#allocation10 + $0x100] sm:$0xff]
    %v830 = vld [vmem:[#allocation10 + $0x108] sm:$0xff]
    %v831 = vld [vmem:[#allocation10 + $0x110] sm:$0xff]
    %v832 = vld [vmem:[#allocation10 + $0x118] sm:$0xff]
    %v833 = vld [vmem:[#allocation10 + $0x120] sm:$0xff]
    %v834 = vld [vmem:[#allocation10 + $0x128] sm:$0xff]
    %v835 = vld [vmem:[#allocation10 + $0x130] sm:$0xff]
    %v836 = vld [vmem:[#allocation10 + $0x138] sm:$0xff]
    %v837 = vld [vmem:[#allocation10 + $0x140] sm:$0xff]
    %v838 = vld [vmem:[#allocation10 + $0x148] sm:$0xff]
    %v839 = vld [vmem:[#allocation10 + $0x150] sm:$0xff]
    %v840 = vld [vmem:[#allocation10 + $0x158] sm:$0xff]
    %v841 = vld [vmem:[#allocation10 + $0x160] sm:$0xff]
    %v842 = vld [vmem:[#allocation10 + $0x168] sm:$0xff]
    %v843 = vld [vmem:[#allocation10 + $0x170] sm:$0xff]
    %v844 = vld [vmem:[#allocation10 + $0x178] sm:$0xff]
    %v845 = vld [vmem:[#allocation10 + $0x180] sm:$0xff]
    %v846 = vld [vmem:[#allocation10 + $0x188] sm:$0xff]
    %v847 = vld [vmem:[#allocation10 + $0x190] sm:$0xff]
    %v848 = vld [vmem:[#allocation10 + $0x198] sm:$0xff]
    %v849 = vld [vmem:[#allocation10 + $0x1a0] sm:$0xff]
    %v850 = vld [vmem:[#allocation10 + $0x1a8] sm:$0xff]
    %v851 = vld [vmem:[#allocation10 + $0x1b0] sm:$0xff]
    %v852 = vld [vmem:[#allocation10 + $0x1b8] sm:$0xff]
    %v853 = vld [vmem:[#allocation10 + $0x1c0] sm:$0xff]
    %v854 = vld [vmem:[#allocation10 + $0x1c8] sm:$0xff]
    %v855 = vld [vmem:[#allocation10 + $0x1d0] sm:$0xff]
    %v856 = vld [vmem:[#allocation10 + $0x1d8] sm:$0xff]
    %v857 = vld [vmem:[#allocation10 + $0x1e0] sm:$0xff]
    %v858 = vld [vmem:[#allocation10 + $0x1e8] sm:$0xff]
    %v859 = vld [vmem:[#allocation10 + $0x1f0] sm:$0xff]
    %v860 = vld [vmem:[#allocation10 + $0x1f8] sm:$0xff]
    %v861 = vld [vmem:[#allocation10 + $0x200] sm:$0xff]
    %v862 = vld [vmem:[#allocation10 + $0x208] sm:$0xff]
    %v863 = vld [vmem:[#allocation10 + $0x210] sm:$0xff]
    %v864 = vld [vmem:[#allocation10 + $0x218] sm:$0xff]
    %v865 = vld [vmem:[#allocation10 + $0x220] sm:$0xff]
    %v866 = vld [vmem:[#allocation10 + $0x228] sm:$0xff]
    %v867 = vld [vmem:[#allocation10 + $0x230] sm:$0xff]
    %v868 = vld [vmem:[#allocation10 + $0x238] sm:$0xff]
    %v869 = vld [vmem:[#allocation10 + $0x240] sm:$0xff]
    %v870 = vld [vmem:[#allocation10 + $0x248] sm:$0xff]
    %v871 = vld [vmem:[#allocation10 + $0x250] sm:$0xff]
    %v872 = vld [vmem:[#allocation10 + $0x258] sm:$0xff]
    %v873 = vld [vmem:[#allocation10 + $0x260] sm:$0xff]
    %v874 = vld [vmem:[#allocation10 + $0x268] sm:$0xff]
    %v875 = vld [vmem:[#allocation10 + $0x270] sm:$0xff]
    %v876 = vld [vmem:[#allocation10 + $0x278] sm:$0xff]
    %v877 = vld [vmem:[#allocation10 + $0x280] sm:$0xff]
    %v878 = vld [vmem:[#allocation10 + $0x288] sm:$0xff]
    %v879 = vld [vmem:[#allocation10 + $0x290] sm:$0xff]
    %v880 = vld [vmem:[#allocation10 + $0x298] sm:$0xff]
    %v881 = vld [vmem:[#allocation10 + $0x2a0] sm:$0xff]
    %v882 = vld [vmem:[#allocation10 + $0x2a8] sm:$0xff]
    %v883 = vld [vmem:[#allocation10 + $0x2b0] sm:$0xff]
    %v884 = vld [vmem:[#allocation10 + $0x2b8] sm:$0xff]
    %v885 = vld [vmem:[#allocation10 + $0x2c0] sm:$0xff]
    %v886 = vld [vmem:[#allocation10 + $0x2c8] sm:$0xff]
    %v887 = vld [vmem:[#allocation10 + $0x2d0] sm:$0xff]
    %v888 = vld [vmem:[#allocation10 + $0x2d8] sm:$0xff]
    %v889 = vld [vmem:[#allocation10 + $0x2e0] sm:$0xff]
    %v890 = vld [vmem:[#allocation10 + $0x2e8] sm:$0xff]
    %v891 = vld [vmem:[#allocation10 + $0x2f0] sm:$0xff]
    %v892 = vld [vmem:[#allocation10 + $0x2f8] sm:$0xff]
    %v893 = vld [vmem:[#allocation10 + $0x300] sm:$0xff]
    %v894 = vld [vmem:[#allocation10 + $0x308] sm:$0xff]
    %v895 = vld [vmem:[#allocation10 + $0x310] sm:$0xff]
    %v896 = vld [vmem:[#allocation10 + $0x318] sm:$0xff]
    %v897 = vld [vmem:[#allocation10 + $0x320] sm:$0xff]
    %v898 = vld [vmem:[#allocation10 + $0x328] sm:$0xff]
    %v899 = vld [vmem:[#allocation10 + $0x330] sm:$0xff]
    %v900 = vld [vmem:[#allocation10 + $0x338] sm:$0xff]
    %v901 = vld [vmem:[#allocation10 + $0x340] sm:$0xff]
    %v902 = vld [vmem:[#allocation10 + $0x348] sm:$0xff]
    %v903 = vld [vmem:[#allocation10 + $0x350] sm:$0xff]
    %v904 = vld [vmem:[#allocation10 + $0x358] sm:$0xff]
    %v905 = vld [vmem:[#allocation10 + $0x360] sm:$0xff]
    %v906 = vld [vmem:[#allocation10 + $0x368] sm:$0xff]
    %v907 = vld [vmem:[#allocation10 + $0x370] sm:$0xff]
    %v908 = vld [vmem:[#allocation10 + $0x378] sm:$0xff]
    %v909 = vld [vmem:[#allocation10 + $0x380] sm:$0xff]
    %v910 = vld [vmem:[#allocation10 + $0x388] sm:$0xff]
    %v911 = vld [vmem:[#allocation10 + $0x390] sm:$0xff]
    %v912 = vld [vmem:[#allocation10 + $0x398] sm:$0xff]
    %v913 = vld [vmem:[#allocation10 + $0x3a0] sm:$0xff]
    %v914 = vld [vmem:[#allocation10 + $0x3a8] sm:$0xff]
    %v915 = vld [vmem:[#allocation10 + $0x3b0] sm:$0xff]
    %v916 = vld [vmem:[#allocation10 + $0x3b8] sm:$0xff]
    %v917 = vld [vmem:[#allocation10 + $0x3c0] sm:$0xff]
    %v918 = vld [vmem:[#allocation10 + $0x3c8] sm:$0xff]
    %v919 = vld [vmem:[#allocation10 + $0x3d0] sm:$0xff]
    %v920 = vld [vmem:[#allocation10 + $0x3d8] sm:$0xff]
    %v921 = vld [vmem:[#allocation10 + $0x3e0] sm:$0xff]
    %v922 = vld [vmem:[#allocation10 + $0x3e8] sm:$0xff]
    %v923 = vld [vmem:[#allocation10 + $0x3f0] sm:$0xff]
    %v924 = vld [vmem:[#allocation10 + $0x3f8] sm:$0xff]
    %v925 = vld [vmem:[%s6] sm:$0xf]
    %v927 = vlaneseq
    %v928 = vshrl.u32 %v927, 7
    %v929 = vsub.s32 0, %v928
    %v930 = vrot.slane %v925, %v929
    %v931 = vlaneseq
    %v932 = vshrl.u32 %v931, 7
    %v933 = vsub.s32 1, %v932
    %v934 = vrot.slane %v925, %v933
    %v935 = vlaneseq
    %v936 = vshrl.u32 %v935, 7
    %v937 = vsub.s32 2, %v936
    %v938 = vrot.slane %v925, %v937
    %v939 = vlaneseq
    %v940 = vshrl.u32 %v939, 7
    %v941 = vsub.s32 3, %v940
    %v942 = vrot.slane %v925, %v941
    %v1075 = vunpack.c.l.b16 %v797
    %v1076 = vunpack.c.h.b16 %v797
    %v1077 = vunpack.c.l.b16 %v798
    %v1078 = vunpack.c.h.b16 %v798
    %v1079 = vunpack.c.l.b16 %v799
    %v1080 = vunpack.c.h.b16 %v799
    %v1081 = vunpack.c.l.b16 %v800
    %v1082 = vunpack.c.h.b16 %v800
    %v1083 = vunpack.c.l.b16 %v801
    %v1084 = vunpack.c.h.b16 %v801
    %v1085 = vunpack.c.l.b16 %v802
    %v1086 = vunpack.c.h.b16 %v802
    %v1087 = vunpack.c.l.b16 %v803
    %v1088 = vunpack.c.h.b16 %v803
    %v1089 = vunpack.c.l.b16 %v804
    %v1090 = vunpack.c.h.b16 %v804
    %v1091 = vunpack.c.l.b16 %v805
    %v1092 = vunpack.c.h.b16 %v805
    %v1093 = vunpack.c.l.b16 %v806
    %v1094 = vunpack.c.h.b16 %v806
    %v1095 = vunpack.c.l.b16 %v807
    %v1096 = vunpack.c.h.b16 %v807
    %v1097 = vunpack.c.l.b16 %v808
    %v1098 = vunpack.c.h.b16 %v808
    %v1099 = vunpack.c.l.b16 %v809
    %v1100 = vunpack.c.h.b16 %v809
    %v1101 = vunpack.c.l.b16 %v810
    %v1102 = vunpack.c.h.b16 %v810
    %v1103 = vunpack.c.l.b16 %v811
    %v1104 = vunpack.c.h.b16 %v811
    %v1105 = vunpack.c.l.b16 %v812
    %v1106 = vunpack.c.h.b16 %v812
    %v1107 = vunpack.c.l.b16 %v813
    %v1108 = vunpack.c.h.b16 %v813
    %v1109 = vunpack.c.l.b16 %v814
    %v1110 = vunpack.c.h.b16 %v814
    %v1111 = vunpack.c.l.b16 %v815
    %v1112 = vunpack.c.h.b16 %v815
    %v1113 = vunpack.c.l.b16 %v816
    %v1114 = vunpack.c.h.b16 %v816
    %v1115 = vunpack.c.l.b16 %v817
    %v1116 = vunpack.c.h.b16 %v817
    %v1117 = vunpack.c.l.b16 %v818
    %v1118 = vunpack.c.h.b16 %v818
    %v1119 = vunpack.c.l.b16 %v819
    %v1120 = vunpack.c.h.b16 %v819
    %v1121 = vunpack.c.l.b16 %v820
    %v1122 = vunpack.c.h.b16 %v820
    %v1123 = vunpack.c.l.b16 %v821
    %v1124 = vunpack.c.h.b16 %v821
    %v1125 = vunpack.c.l.b16 %v822
    %v1126 = vunpack.c.h.b16 %v822
    %v1127 = vunpack.c.l.b16 %v823
    %v1128 = vunpack.c.h.b16 %v823
    %v1129 = vunpack.c.l.b16 %v824
    %v1130 = vunpack.c.h.b16 %v824
    %v1131 = vunpack.c.l.b16 %v825
    %v1132 = vunpack.c.h.b16 %v825
    %v1133 = vunpack.c.l.b16 %v826
    %v1134 = vunpack.c.h.b16 %v826
    %v1135 = vunpack.c.l.b16 %v827
    %v1136 = vunpack.c.h.b16 %v827
    %v1137 = vunpack.c.l.b16 %v828
    %v1138 = vunpack.c.h.b16 %v828
    %v1139 = vunpack.c.l.b16 %v829
    %v1140 = vunpack.c.h.b16 %v829
    %v1141 = vunpack.c.l.b16 %v830
    %v1142 = vunpack.c.h.b16 %v830
    %v1143 = vunpack.c.l.b16 %v831
    %v1144 = vunpack.c.h.b16 %v831
    %v1145 = vunpack.c.l.b16 %v832
    %v1146 = vunpack.c.h.b16 %v832
    %v1147 = vunpack.c.l.b16 %v833
    %v1148 = vunpack.c.h.b16 %v833
    %v1149 = vunpack.c.l.b16 %v834
    %v1150 = vunpack.c.h.b16 %v834
    %v1151 = vunpack.c.l.b16 %v835
    %v1152 = vunpack.c.h.b16 %v835
    %v1153 = vunpack.c.l.b16 %v836
    %v1154 = vunpack.c.h.b16 %v836
    %v1155 = vunpack.c.l.b16 %v837
    %v1156 = vunpack.c.h.b16 %v837
    %v1157 = vunpack.c.l.b16 %v838
    %v1158 = vunpack.c.h.b16 %v838
    %v1159 = vunpack.c.l.b16 %v839
    %v1160 = vunpack.c.h.b16 %v839
    %v1161 = vunpack.c.l.b16 %v840
    %v1162 = vunpack.c.h.b16 %v840
    %v1163 = vunpack.c.l.b16 %v841
    %v1164 = vunpack.c.h.b16 %v841
    %v1165 = vunpack.c.l.b16 %v842
    %v1166 = vunpack.c.h.b16 %v842
    %v1167 = vunpack.c.l.b16 %v843
    %v1168 = vunpack.c.h.b16 %v843
    %v1169 = vunpack.c.l.b16 %v844
    %v1170 = vunpack.c.h.b16 %v844
    %v1171 = vunpack.c.l.b16 %v845
    %v1172 = vunpack.c.h.b16 %v845
    %v1173 = vunpack.c.l.b16 %v846
    %v1174 = vunpack.c.h.b16 %v846
    %v1175 = vunpack.c.l.b16 %v847
    %v1176 = vunpack.c.h.b16 %v847
    %v1177 = vunpack.c.l.b16 %v848
    %v1178 = vunpack.c.h.b16 %v848
    %v1179 = vunpack.c.l.b16 %v849
    %v1180 = vunpack.c.h.b16 %v849
    %v1181 = vunpack.c.l.b16 %v850
    %v1182 = vunpack.c.h.b16 %v850
    %v1183 = vunpack.c.l.b16 %v851
    %v1184 = vunpack.c.h.b16 %v851
    %v1185 = vunpack.c.l.b16 %v852
    %v1186 = vunpack.c.h.b16 %v852
    %v1187 = vunpack.c.l.b16 %v853
    %v1188 = vunpack.c.h.b16 %v853
    %v1189 = vunpack.c.l.b16 %v854
    %v1190 = vunpack.c.h.b16 %v854
    %v1191 = vunpack.c.l.b16 %v855
    %v1192 = vunpack.c.h.b16 %v855
    %v1193 = vunpack.c.l.b16 %v856
    %v1194 = vunpack.c.h.b16 %v856
    %v1195 = vunpack.c.l.b16 %v857
    %v1196 = vunpack.c.h.b16 %v857
    %v1197 = vunpack.c.l.b16 %v858
    %v1198 = vunpack.c.h.b16 %v858
    %v1199 = vunpack.c.l.b16 %v859
    %v1200 = vunpack.c.h.b16 %v859
    %v1201 = vunpack.c.l.b16 %v860
    %v1202 = vunpack.c.h.b16 %v860
    %v1203 = vunpack.c.l.b16 %v861
    %v1204 = vunpack.c.h.b16 %v861
    %v1205 = vunpack.c.l.b16 %v862
    %v1206 = vunpack.c.h.b16 %v862
    %v1207 = vunpack.c.l.b16 %v863
    %v1208 = vunpack.c.h.b16 %v863
    %v1209 = vunpack.c.l.b16 %v864
    %v1210 = vunpack.c.h.b16 %v864
    %v1211 = vunpack.c.l.b16 %v865
    %v1212 = vunpack.c.h.b16 %v865
    %v1213 = vunpack.c.l.b16 %v866
    %v1214 = vunpack.c.h.b16 %v866
    %v1215 = vunpack.c.l.b16 %v867
    %v1216 = vunpack.c.h.b16 %v867
    %v1217 = vunpack.c.l.b16 %v868
    %v1218 = vunpack.c.h.b16 %v868
    %v1219 = vunpack.c.l.b16 %v869
    %v1220 = vunpack.c.h.b16 %v869
    %v1221 = vunpack.c.l.b16 %v870
    %v1222 = vunpack.c.h.b16 %v870
    %v1223 = vunpack.c.l.b16 %v871
    %v1224 = vunpack.c.h.b16 %v871
    %v1225 = vunpack.c.l.b16 %v872
    %v1226 = vunpack.c.h.b16 %v872
    %v1227 = vunpack.c.l.b16 %v873
    %v1228 = vunpack.c.h.b16 %v873
    %v1229 = vunpack.c.l.b16 %v874
    %v1230 = vunpack.c.h.b16 %v874
    %v1231 = vunpack.c.l.b16 %v875
    %v1232 = vunpack.c.h.b16 %v875
    %v1233 = vunpack.c.l.b16 %v876
    %v1234 = vunpack.c.h.b16 %v876
    %v1235 = vunpack.c.l.b16 %v877
    %v1236 = vunpack.c.h.b16 %v877
    %v1237 = vunpack.c.l.b16 %v878
    %v1238 = vunpack.c.h.b16 %v878
    %v1239 = vunpack.c.l.b16 %v879
    %v1240 = vunpack.c.h.b16 %v879
    %v1241 = vunpack.c.l.b16 %v880
    %v1242 = vunpack.c.h.b16 %v880
    %v1243 = vunpack.c.l.b16 %v881
    %v1244 = vunpack.c.h.b16 %v881
    %v1245 = vunpack.c.l.b16 %v882
    %v1246 = vunpack.c.h.b16 %v882
    %v1247 = vunpack.c.l.b16 %v883
    %v1248 = vunpack.c.h.b16 %v883
    %v1249 = vunpack.c.l.b16 %v884
    %v1250 = vunpack.c.h.b16 %v884
    %v1251 = vunpack.c.l.b16 %v885
    %v1252 = vunpack.c.h.b16 %v885
    %v1253 = vunpack.c.l.b16 %v886
    %v1254 = vunpack.c.h.b16 %v886
    %v1255 = vunpack.c.l.b16 %v887
    %v1256 = vunpack.c.h.b16 %v887
    %v1257 = vunpack.c.l.b16 %v888
    %v1258 = vunpack.c.h.b16 %v888
    %v1259 = vunpack.c.l.b16 %v889
    %v1260 = vunpack.c.h.b16 %v889
    %v1261 = vunpack.c.l.b16 %v890
    %v1262 = vunpack.c.h.b16 %v890
    %v1263 = vunpack.c.l.b16 %v891
    %v1264 = vunpack.c.h.b16 %v891
    %v1265 = vunpack.c.l.b16 %v892
    %v1266 = vunpack.c.h.b16 %v892
    %v1267 = vunpack.c.l.b16 %v893
    %v1268 = vunpack.c.h.b16 %v893
    %v1269 = vunpack.c.l.b16 %v894
    %v1270 = vunpack.c.h.b16 %v894
    %v1271 = vunpack.c.l.b16 %v895
    %v1272 = vunpack.c.h.b16 %v895
    %v1273 = vunpack.c.l.b16 %v896
    %v1274 = vunpack.c.h.b16 %v896
    %v1275 = vunpack.c.l.b16 %v897
    %v1276 = vunpack.c.h.b16 %v897
    %v1277 = vunpack.c.l.b16 %v898
    %v1278 = vunpack.c.h.b16 %v898
    %v1279 = vunpack.c.l.b16 %v899
    %v1280 = vunpack.c.h.b16 %v899
    %v1281 = vunpack.c.l.b16 %v900
    %v1282 = vunpack.c.h.b16 %v900
    %v1283 = vunpack.c.l.b16 %v901
    %v1284 = vunpack.c.h.b16 %v901
    %v1285 = vunpack.c.l.b16 %v902
    %v1286 = vunpack.c.h.b16 %v902
    %v1287 = vunpack.c.l.b16 %v903
    %v1288 = vunpack.c.h.b16 %v903
    %v1289 = vunpack.c.l.b16 %v904
    %v1290 = vunpack.c.h.b16 %v904
    %v1291 = vunpack.c.l.b16 %v905
    %v1292 = vunpack.c.h.b16 %v905
    %v1293 = vunpack.c.l.b16 %v906
    %v1294 = vunpack.c.h.b16 %v906
    %v1295 = vunpack.c.l.b16 %v907
    %v1296 = vunpack.c.h.b16 %v907
    %v1297 = vunpack.c.l.b16 %v908
    %v1298 = vunpack.c.h.b16 %v908
    %v1299 = vunpack.c.l.b16 %v909
    %v1300 = vunpack.c.h.b16 %v909
    %v1301 = vunpack.c.l.b16 %v910
    %v1302 = vunpack.c.h.b16 %v910
    %v1303 = vunpack.c.l.b16 %v911
    %v1304 = vunpack.c.h.b16 %v911
    %v1305 = vunpack.c.l.b16 %v912
    %v1306 = vunpack.c.h.b16 %v912
    %v1307 = vunpack.c.l.b16 %v913
    %v1308 = vunpack.c.h.b16 %v913
    %v1309 = vunpack.c.l.b16 %v914
    %v1310 = vunpack.c.h.b16 %v914
    %v1311 = vunpack.c.l.b16 %v915
    %v1312 = vunpack.c.h.b16 %v915
    %v1313 = vunpack.c.l.b16 %v916
    %v1314 = vunpack.c.h.b16 %v916
    %v1315 = vunpack.c.l.b16 %v917
    %v1316 = vunpack.c.h.b16 %v917
    %v1317 = vunpack.c.l.b16 %v918
    %v1318 = vunpack.c.h.b16 %v918
    %v1319 = vunpack.c.l.b16 %v919
    %v1320 = vunpack.c.h.b16 %v919
    %v1321 = vunpack.c.l.b16 %v920
    %v1322 = vunpack.c.h.b16 %v920
    %v1323 = vunpack.c.l.b16 %v921
    %v1324 = vunpack.c.h.b16 %v921
    %v1325 = vunpack.c.l.b16 %v922
    %v1326 = vunpack.c.h.b16 %v922
    %v1327 = vunpack.c.l.b16 %v923
    %v1328 = vunpack.c.h.b16 %v923
    %v1329 = vunpack.c.l.b16 %v924
    %v1330 = vunpack.c.h.b16 %v924
    %v1331 = vpack.c.b16 %v1079, %v1075
    %v1332 = vpack.c.b16 %v1080, %v1076
    %v1333 = vpack.c.b16 %v1081, %v1077
    %v1334 = vpack.c.b16 %v1082, %v1078
    %v1335 = vpack.c.b16 %v1087, %v1083
    %v1336 = vpack.c.b16 %v1088, %v1084
    %v1337 = vpack.c.b16 %v1089, %v1085
    %v1338 = vpack.c.b16 %v1090, %v1086
    %v1339 = vpack.c.b16 %v1095, %v1091
    %v1340 = vpack.c.b16 %v1096, %v1092
    %v1341 = vpack.c.b16 %v1097, %v1093
    %v1342 = vpack.c.b16 %v1098, %v1094
    %v1343 = vpack.c.b16 %v1103, %v1099
    %v1344 = vpack.c.b16 %v1104, %v1100
    %v1345 = vpack.c.b16 %v1105, %v1101
    %v1346 = vpack.c.b16 %v1106, %v1102
    %v1347 = vpack.c.b16 %v1111, %v1107
    %v1348 = vpack.c.b16 %v1112, %v1108
    %v1349 = vpack.c.b16 %v1113, %v1109
    %v1350 = vpack.c.b16 %v1114, %v1110
    %v1351 = vpack.c.b16 %v1119, %v1115
    %v1352 = vpack.c.b16 %v1120, %v1116
    %v1353 = vpack.c.b16 %v1121, %v1117
    %v1354 = vpack.c.b16 %v1122, %v1118
    %v1355 = vpack.c.b16 %v1127, %v1123
    %v1356 = vpack.c.b16 %v1128, %v1124
    %v1357 = vpack.c.b16 %v1129, %v1125
    %v1358 = vpack.c.b16 %v1130, %v1126
    %v1359 = vpack.c.b16 %v1135, %v1131
    %v1360 = vpack.c.b16 %v1136, %v1132
    %v1361 = vpack.c.b16 %v1137, %v1133
    %v1362 = vpack.c.b16 %v1138, %v1134
    %v1363 = vpack.c.b16 %v1143, %v1139
    %v1364 = vpack.c.b16 %v1144, %v1140
    %v1365 = vpack.c.b16 %v1145, %v1141
    %v1366 = vpack.c.b16 %v1146, %v1142
    %v1367 = vpack.c.b16 %v1151, %v1147
    %v1368 = vpack.c.b16 %v1152, %v1148
    %v1369 = vpack.c.b16 %v1153, %v1149
    %v1370 = vpack.c.b16 %v1154, %v1150
    %v1371 = vpack.c.b16 %v1159, %v1155
    %v1372 = vpack.c.b16 %v1160, %v1156
    %v1373 = vpack.c.b16 %v1161, %v1157
    %v1374 = vpack.c.b16 %v1162, %v1158
    %v1375 = vpack.c.b16 %v1167, %v1163
    %v1376 = vpack.c.b16 %v1168, %v1164
    %v1377 = vpack.c.b16 %v1169, %v1165
    %v1378 = vpack.c.b16 %v1170, %v1166
    %v1379 = vpack.c.b16 %v1175, %v1171
    %v1380 = vpack.c.b16 %v1176, %v1172
    %v1381 = vpack.c.b16 %v1177, %v1173
    %v1382 = vpack.c.b16 %v1178, %v1174
    %v1383 = vpack.c.b16 %v1183, %v1179
    %v1384 = vpack.c.b16 %v1184, %v1180
    %v1385 = vpack.c.b16 %v1185, %v1181
    %v1386 = vpack.c.b16 %v1186, %v1182
    %v1387 = vpack.c.b16 %v1191, %v1187
    %v1388 = vpack.c.b16 %v1192, %v1188
    %v1389 = vpack.c.b16 %v1193, %v1189
    %v1390 = vpack.c.b16 %v1194, %v1190
    %v1391 = vpack.c.b16 %v1199, %v1195
    %v1392 = vpack.c.b16 %v1200, %v1196
    %v1393 = vpack.c.b16 %v1201, %v1197
    %v1394 = vpack.c.b16 %v1202, %v1198
    %v1395 = vpack.c.b16 %v1207, %v1203
    %v1396 = vpack.c.b16 %v1208, %v1204
    %v1397 = vpack.c.b16 %v1209, %v1205
    %v1398 = vpack.c.b16 %v1210, %v1206
    %v1399 = vpack.c.b16 %v1215, %v1211
    %v1400 = vpack.c.b16 %v1216, %v1212
    %v1401 = vpack.c.b16 %v1217, %v1213
    %v1402 = vpack.c.b16 %v1218, %v1214
    %v1403 = vpack.c.b16 %v1223, %v1219
    %v1404 = vpack.c.b16 %v1224, %v1220
    %v1405 = vpack.c.b16 %v1225, %v1221
    %v1406 = vpack.c.b16 %v1226, %v1222
    %v1407 = vpack.c.b16 %v1231, %v1227
    %v1408 = vpack.c.b16 %v1232, %v1228
    %v1409 = vpack.c.b16 %v1233, %v1229
    %v1410 = vpack.c.b16 %v1234, %v1230
    %v1411 = vpack.c.b16 %v1239, %v1235
    %v1412 = vpack.c.b16 %v1240, %v1236
    %v1413 = vpack.c.b16 %v1241, %v1237
    %v1414 = vpack.c.b16 %v1242, %v1238
    %v1415 = vpack.c.b16 %v1247, %v1243
    %v1416 = vpack.c.b16 %v1248, %v1244
    %v1417 = vpack.c.b16 %v1249, %v1245
    %v1418 = vpack.c.b16 %v1250, %v1246
    %v1419 = vpack.c.b16 %v1255, %v1251
    %v1420 = vpack.c.b16 %v1256, %v1252
    %v1421 = vpack.c.b16 %v1257, %v1253
    %v1422 = vpack.c.b16 %v1258, %v1254
    %v1423 = vpack.c.b16 %v1263, %v1259
    %v1424 = vpack.c.b16 %v1264, %v1260
    %v1425 = vpack.c.b16 %v1265, %v1261
    %v1426 = vpack.c.b16 %v1266, %v1262
    %v1427 = vpack.c.b16 %v1271, %v1267
    %v1428 = vpack.c.b16 %v1272, %v1268
    %v1429 = vpack.c.b16 %v1273, %v1269
    %v1430 = vpack.c.b16 %v1274, %v1270
    %v1431 = vpack.c.b16 %v1279, %v1275
    %v1432 = vpack.c.b16 %v1280, %v1276
    %v1433 = vpack.c.b16 %v1281, %v1277
    %v1434 = vpack.c.b16 %v1282, %v1278
    %v1435 = vpack.c.b16 %v1287, %v1283
    %v1436 = vpack.c.b16 %v1288, %v1284
    %v1437 = vpack.c.b16 %v1289, %v1285
    %v1438 = vpack.c.b16 %v1290, %v1286
    %v1439 = vpack.c.b16 %v1295, %v1291
    %v1440 = vpack.c.b16 %v1296, %v1292
    %v1441 = vpack.c.b16 %v1297, %v1293
    %v1442 = vpack.c.b16 %v1298, %v1294
    %v1443 = vpack.c.b16 %v1303, %v1299
    %v1444 = vpack.c.b16 %v1304, %v1300
    %v1445 = vpack.c.b16 %v1305, %v1301
    %v1446 = vpack.c.b16 %v1306, %v1302
    %v1447 = vpack.c.b16 %v1311, %v1307
    %v1448 = vpack.c.b16 %v1312, %v1308
    %v1449 = vpack.c.b16 %v1313, %v1309
    %v1450 = vpack.c.b16 %v1314, %v1310
    %v1451 = vpack.c.b16 %v1319, %v1315
    %v1452 = vpack.c.b16 %v1320, %v1316
    %v1453 = vpack.c.b16 %v1321, %v1317
    %v1454 = vpack.c.b16 %v1322, %v1318
    %v1455 = vpack.c.b16 %v1327, %v1323
    %v1456 = vpack.c.b16 %v1328, %v1324
    %v1457 = vpack.c.b16 %v1329, %v1325
    %v1458 = vpack.c.b16 %v1330, %v1326
    %1587 = vmatprep.subr.bf16.mxu0 %v1360
    %1588 = vmatpush1.bf16.msra.mxu0 %v1359
    %1589 = vmatprep.subr.bf16.mxu0 %v1356
    %1590 = vmatpush1.bf16.msra.mxu0 %v1355
    %1591 = vmatprep.subr.bf16.mxu0 %v1352
    %1592 = vmatpush1.bf16.msra.mxu0 %v1351
    %1593 = vmatprep.subr.bf16.mxu0 %v1348
    %1594 = vmatpush1.bf16.msra.mxu0 %v1347
    %1595 = vmatprep.subr.bf16.mxu0 %v1344
    %1596 = vmatpush1.bf16.msra.mxu0 %v1343
    %1597 = vmatprep.subr.bf16.mxu0 %v1340
    %1598 = vmatpush1.bf16.msra.mxu0 %v1339
    %1599 = vmatprep.subr.bf16.mxu0 %v1336
    %1600 = vmatpush1.bf16.msra.mxu0 %v1335
    %1601 = vmatprep.subr.bf16.mxu0 %v1332
    %1602 = vmatpush1.bf16.msra.mxu0 %v1331
    %1603 = vmatprep.subr.bf16.mxu0 %v1392
    %1604 = vmatpush2.bf16.msra.mxu0 %v1391
    %1605 = vmatprep.subr.bf16.mxu0 %v1388
    %1606 = vmatpush2.bf16.msra.mxu0 %v1387
    %1607 = vmatprep.subr.bf16.mxu0 %v1384
    %1608 = vmatpush2.bf16.msra.mxu0 %v1383
    %1609 = vmatprep.subr.bf16.mxu0 %v1380
    %1610 = vmatpush2.bf16.msra.mxu0 %v1379
    %1611 = vmatprep.subr.bf16.mxu0 %v1376
    %1612 = vmatpush2.bf16.msra.mxu0 %v1375
    %1613 = vmatprep.subr.bf16.mxu0 %v1372
    %1614 = vmatpush2.bf16.msra.mxu0 %v1371
    %1615 = vmatprep.subr.bf16.mxu0 %v1368
    %1616 = vmatpush2.bf16.msra.mxu0 %v1367
    %1617 = vmatprep.subr.bf16.mxu0 %v1364
    %1618 = vmatpush2.bf16.msra.mxu0 %v1363
    %1619 = vmatprep.mubr.bf16.mxu0 %v114
    %1620 = vmatmul.mubr.bf16.gmra.mxu0 %v113
    %v1621 = vpop.f32.mrf.mxu0
    %v1622 = vadd.f32 %v930, %v1621
    %v1623 = vpop.f32.mrf.mxu0
    %v1624 = vadd.f32 %v934, %v1623
    %v1625 = vpop.f32.mrf.mxu0
    %v1626 = vadd.f32 %v930, %v1625
    %v1627 = vpop.f32.mrf.mxu0
    %v1628 = vadd.f32 %v934, %v1627
    %1629 = vmatprep.mubr.bf16.mxu0 %v118
    %1630 = vmatmul.mubr.bf16.gmra.mxu0 %v117
    %v1631 = vpop.f32.mrf.mxu0
    %v1632 = vadd.f32 %v930, %v1631
    %v1633 = vpop.f32.mrf.mxu0
    %v1634 = vadd.f32 %v934, %v1633
    %v1635 = vpop.f32.mrf.mxu0
    %v1636 = vadd.f32 %v930, %v1635
    %v1637 = vpop.f32.mrf.mxu0
    %v1638 = vadd.f32 %v934, %v1637
    %1639 = vmatprep.mubr.bf16.mxu0 %v122
    %1640 = vmatmul.mubr.bf16.gmra.mxu0 %v121
    %v1641 = vpop.f32.mrf.mxu0
    %v1642 = vadd.f32 %v930, %v1641
    %v1643 = vpop.f32.mrf.mxu0
    %v1644 = vadd.f32 %v934, %v1643
    %v1645 = vpop.f32.mrf.mxu0
    %v1646 = vadd.f32 %v930, %v1645
    %v1647 = vpop.f32.mrf.mxu0
    %v1648 = vadd.f32 %v934, %v1647
    %1649 = vmatprep.mubr.bf16.mxu0 %v126
    %1650 = vmatmul.mubr.bf16.gmra.mxu0 %v125
    %v1651 = vpop.f32.mrf.mxu0
    %v1652 = vadd.f32 %v930, %v1651
    %v1653 = vpop.f32.mrf.mxu0
    %v1654 = vadd.f32 %v934, %v1653
    %v1655 = vpop.f32.mrf.mxu0
    %v1656 = vadd.f32 %v930, %v1655
    %v1657 = vpop.f32.mrf.mxu0
    %v1658 = vadd.f32 %v934, %v1657
    %1659 = vdwg.mxu0
    %1660 = vmatprep.subr.bf16.mxu0 %v1424
    %1661 = vmatpush1.bf16.msra.mxu0 %v1423
    %1662 = vmatprep.subr.bf16.mxu0 %v1420
    %1663 = vmatpush1.bf16.msra.mxu0 %v1419
    %1664 = vmatprep.subr.bf16.mxu0 %v1416
    %1665 = vmatpush1.bf16.msra.mxu0 %v1415
    %1666 = vmatprep.subr.bf16.mxu0 %v1412
    %1667 = vmatpush1.bf16.msra.mxu0 %v1411
    %1668 = vmatprep.subr.bf16.mxu0 %v1408
    %1669 = vmatpush1.bf16.msra.mxu0 %v1407
    %1670 = vmatprep.subr.bf16.mxu0 %v1404
    %1671 = vmatpush1.bf16.msra.mxu0 %v1403
    %1672 = vmatprep.subr.bf16.mxu0 %v1400
    %1673 = vmatpush1.bf16.msra.mxu0 %v1399
    %1674 = vmatprep.subr.bf16.mxu0 %v1396
    %1675 = vmatpush1.bf16.msra.mxu0 %v1395
    %1676 = vmatprep.subr.bf16.mxu0 %v1456
    %1677 = vmatpush2.bf16.msra.mxu0 %v1455
    %1678 = vmatprep.subr.bf16.mxu0 %v1452
    %1679 = vmatpush2.bf16.msra.mxu0 %v1451
    %1680 = vmatprep.subr.bf16.mxu0 %v1448
    %1681 = vmatpush2.bf16.msra.mxu0 %v1447
    %1682 = vmatprep.subr.bf16.mxu0 %v1444
    %1683 = vmatpush2.bf16.msra.mxu0 %v1443
    %1684 = vmatprep.subr.bf16.mxu0 %v1440
    %1685 = vmatpush2.bf16.msra.mxu0 %v1439
    %1686 = vmatprep.subr.bf16.mxu0 %v1436
    %1687 = vmatpush2.bf16.msra.mxu0 %v1435
    %1688 = vmatprep.subr.bf16.mxu0 %v1432
    %1689 = vmatpush2.bf16.msra.mxu0 %v1431
    %1690 = vmatprep.subr.bf16.mxu0 %v1428
    %1691 = vmatpush2.bf16.msra.mxu0 %v1427
    %1692 = vmatprep.mubr.bf16.mxu0 %v116
    %1693 = vmatmul.mubr.bf16.gmra.mxu0 %v115
    %v1694 = vpop.f32.mrf.mxu0
    %v1695 = vadd.f32 %v1622, %v1694
    %v1696 = vpop.f32.mrf.mxu0
    %v1697 = vadd.f32 %v1624, %v1696
    %v1698 = vpop.f32.mrf.mxu0
    %v1699 = vadd.f32 %v1626, %v1698
    %v1700 = vpop.f32.mrf.mxu0
    %v1701 = vadd.f32 %v1628, %v1700
    %1702 = vmatprep.mubr.bf16.mxu0 %v120
    %1703 = vmatmul.mubr.bf16.gmra.mxu0 %v119
    %v1704 = vpop.f32.mrf.mxu0
    %v1705 = vadd.f32 %v1632, %v1704
    %v1706 = vpop.f32.mrf.mxu0
    %v1707 = vadd.f32 %v1634, %v1706
    %v1708 = vpop.f32.mrf.mxu0
    %v1709 = vadd.f32 %v1636, %v1708
    %v1710 = vpop.f32.mrf.mxu0
    %v1711 = vadd.f32 %v1638, %v1710
    %1712 = vmatprep.mubr.bf16.mxu0 %v124
    %1713 = vmatmul.mubr.bf16.gmra.mxu0 %v123
    %v1714 = vpop.f32.mrf.mxu0
    %v1715 = vadd.f32 %v1642, %v1714
    %v1716 = vpop.f32.mrf.mxu0
    %v1717 = vadd.f32 %v1644, %v1716
    %v1718 = vpop.f32.mrf.mxu0
    %v1719 = vadd.f32 %v1646, %v1718
    %v1720 = vpop.f32.mrf.mxu0
    %v1721 = vadd.f32 %v1648, %v1720
    %1722 = vmatprep.mubr.bf16.mxu0 %v128
    %1723 = vmatmul.mubr.bf16.gmra.mxu0 %v127
    %v1724 = vpop.f32.mrf.mxu0
    %v1725 = vadd.f32 %v1652, %v1724
    %v1726 = vpop.f32.mrf.mxu0
    %v1727 = vadd.f32 %v1654, %v1726
    %v1728 = vpop.f32.mrf.mxu0
    %v1729 = vadd.f32 %v1656, %v1728
    %v1730 = vpop.f32.mrf.mxu0
    %v1731 = vadd.f32 %v1658, %v1730
    %1732 = vdwg.mxu0
    %1733 = vmatprep.subr.bf16.mxu0 %v1362
    %1734 = vmatpush1.bf16.msra.mxu0 %v1361
    %1735 = vmatprep.subr.bf16.mxu0 %v1358
    %1736 = vmatpush1.bf16.msra.mxu0 %v1357
    %1737 = vmatprep.subr.bf16.mxu0 %v1354
    %1738 = vmatpush1.bf16.msra.mxu0 %v1353
    %1739 = vmatprep.subr.bf16.mxu0 %v1350
    %1740 = vmatpush1.bf16.msra.mxu0 %v1349
    %1741 = vmatprep.subr.bf16.mxu0 %v1346
    %1742 = vmatpush1.bf16.msra.mxu0 %v1345
    %1743 = vmatprep.subr.bf16.mxu0 %v1342
    %1744 = vmatpush1.bf16.msra.mxu0 %v1341
    %1745 = vmatprep.subr.bf16.mxu0 %v1338
    %1746 = vmatpush1.bf16.msra.mxu0 %v1337
    %1747 = vmatprep.subr.bf16.mxu0 %v1334
    %1748 = vmatpush1.bf16.msra.mxu0 %v1333
    %1749 = vmatprep.subr.bf16.mxu0 %v1394
    %1750 = vmatpush2.bf16.msra.mxu0 %v1393
    %1751 = vmatprep.subr.bf16.mxu0 %v1390
    %1752 = vmatpush2.bf16.msra.mxu0 %v1389
    %1753 = vmatprep.subr.bf16.mxu0 %v1386
    %1754 = vmatpush2.bf16.msra.mxu0 %v1385
    %1755 = vmatprep.subr.bf16.mxu0 %v1382
    %1756 = vmatpush2.bf16.msra.mxu0 %v1381
    %1757 = vmatprep.subr.bf16.mxu0 %v1378
    %1758 = vmatpush2.bf16.msra.mxu0 %v1377
    %1759 = vmatprep.subr.bf16.mxu0 %v1374
    %1760 = vmatpush2.bf16.msra.mxu0 %v1373
    %1761 = vmatprep.subr.bf16.mxu0 %v1370
    %1762 = vmatpush2.bf16.msra.mxu0 %v1369
    %1763 = vmatprep.subr.bf16.mxu0 %v1366
    %1764 = vmatpush2.bf16.msra.mxu0 %v1365
    %1765 = vmatprep.mubr.bf16.mxu0 %v114
    %1766 = vmatmul.mubr.bf16.gmra.mxu0 %v113
    %v1767 = vpop.f32.mrf.mxu0
    %v1768 = vadd.f32 %v938, %v1767
    %v1769 = vpop.f32.mrf.mxu0
    %v1770 = vadd.f32 %v942, %v1769
    %v1771 = vpop.f32.mrf.mxu0
    %v1772 = vadd.f32 %v938, %v1771
    %v1773 = vpop.f32.mrf.mxu0
    %v1774 = vadd.f32 %v942, %v1773
    %1775 = vmatprep.mubr.bf16.mxu0 %v118
    %1776 = vmatmul.mubr.bf16.gmra.mxu0 %v117
    %v1777 = vpop.f32.mrf.mxu0
    %v1778 = vadd.f32 %v938, %v1777
    %v1779 = vpop.f32.mrf.mxu0
    %v1780 = vadd.f32 %v942, %v1779
    %v1781 = vpop.f32.mrf.mxu0
    %v1782 = vadd.f32 %v938, %v1781
    %v1783 = vpop.f32.mrf.mxu0
    %v1784 = vadd.f32 %v942, %v1783
    %1785 = vmatprep.mubr.bf16.mxu0 %v122
    %1786 = vmatmul.mubr.bf16.gmra.mxu0 %v121
    %v1787 = vpop.f32.mrf.mxu0
    %v1788 = vadd.f32 %v938, %v1787
    %v1789 = vpop.f32.mrf.mxu0
    %v1790 = vadd.f32 %v942, %v1789
    %v1791 = vpop.f32.mrf.mxu0
    %v1792 = vadd.f32 %v938, %v1791
    %v1793 = vpop.f32.mrf.mxu0
    %v1794 = vadd.f32 %v942, %v1793
    %1795 = vmatprep.mubr.bf16.mxu0 %v126
    %1796 = vmatmul.mubr.bf16.gmra.mxu0 %v125
    %v1797 = vpop.f32.mrf.mxu0
    %v1798 = vadd.f32 %v938, %v1797
    %v1799 = vpop.f32.mrf.mxu0
    %v1800 = vadd.f32 %v942, %v1799
    %v1801 = vpop.f32.mrf.mxu0
    %v1802 = vadd.f32 %v938, %v1801
    %v1803 = vpop.f32.mrf.mxu0
    %v1804 = vadd.f32 %v942, %v1803
    %1805 = vdwg.mxu0
    %1806 = vmatprep.subr.bf16.mxu0 %v1426
    %1807 = vmatpush1.bf16.msra.mxu0 %v1425
    %1808 = vmatprep.subr.bf16.mxu0 %v1422
    %1809 = vmatpush1.bf16.msra.mxu0 %v1421
    %1810 = vmatprep.subr.bf16.mxu0 %v1418
    %1811 = vmatpush1.bf16.msra.mxu0 %v1417
    %1812 = vmatprep.subr.bf16.mxu0 %v1414
    %1813 = vmatpush1.bf16.msra.mxu0 %v1413
    %1814 = vmatprep.subr.bf16.mxu0 %v1410
    %1815 = vmatpush1.bf16.msra.mxu0 %v1409
    %1816 = vmatprep.subr.bf16.mxu0 %v1406
    %1817 = vmatpush1.bf16.msra.mxu0 %v1405
    %1818 = vmatprep.subr.bf16.mxu0 %v1402
    %1819 = vmatpush1.bf16.msra.mxu0 %v1401
    %1820 = vmatprep.subr.bf16.mxu0 %v1398
    %1821 = vmatpush1.bf16.msra.mxu0 %v1397
    %1822 = vmatprep.subr.bf16.mxu0 %v1458
    %1823 = vmatpush2.bf16.msra.mxu0 %v1457
    %1824 = vmatprep.subr.bf16.mxu0 %v1454
    %1825 = vmatpush2.bf16.msra.mxu0 %v1453
    %1826 = vmatprep.subr.bf16.mxu0 %v1450
    %1827 = vmatpush2.bf16.msra.mxu0 %v1449
    %1828 = vmatprep.subr.bf16.mxu0 %v1446
    %1829 = vmatpush2.bf16.msra.mxu0 %v1445
    %1830 = vmatprep.subr.bf16.mxu0 %v1442
    %1831 = vmatpush2.bf16.msra.mxu0 %v1441
    %1832 = vmatprep.subr.bf16.mxu0 %v1438
    %1833 = vmatpush2.bf16.msra.mxu0 %v1437
    %1834 = vmatprep.subr.bf16.mxu0 %v1434
    %1835 = vmatpush2.bf16.msra.mxu0 %v1433
    %1836 = vmatprep.subr.bf16.mxu0 %v1430
    %1837 = vmatpush2.bf16.msra.mxu0 %v1429
    %1838 = vmatprep.mubr.bf16.mxu0 %v116
    %1839 = vmatmul.mubr.bf16.gmra.mxu0 %v115
    %v1840 = vpop.f32.mrf.mxu0
    %v1841 = vadd.f32 %v1768, %v1840
    %v1842 = vpop.f32.mrf.mxu0
    %v1843 = vadd.f32 %v1770, %v1842
    %v1844 = vpop.f32.mrf.mxu0
    %v1845 = vadd.f32 %v1772, %v1844
    %v1846 = vpop.f32.mrf.mxu0
    %v1847 = vadd.f32 %v1774, %v1846
    %1848 = vmatprep.mubr.bf16.mxu0 %v120
    %1849 = vmatmul.mubr.bf16.gmra.mxu0 %v119
    %v1850 = vpop.f32.mrf.mxu0
    %v1851 = vadd.f32 %v1778, %v1850
    %v1852 = vpop.f32.mrf.mxu0
    %v1853 = vadd.f32 %v1780, %v1852
    %v1854 = vpop.f32.mrf.mxu0
    %v1855 = vadd.f32 %v1782, %v1854
    %v1856 = vpop.f32.mrf.mxu0
    %v1857 = vadd.f32 %v1784, %v1856
    %1858 = vmatprep.mubr.bf16.mxu0 %v124
    %1859 = vmatmul.mubr.bf16.gmra.mxu0 %v123
    %v1860 = vpop.f32.mrf.mxu0
    %v1861 = vadd.f32 %v1788, %v1860
    %v1862 = vpop.f32.mrf.mxu0
    %v1863 = vadd.f32 %v1790, %v1862
    %v1864 = vpop.f32.mrf.mxu0
    %v1865 = vadd.f32 %v1792, %v1864
    %v1866 = vpop.f32.mrf.mxu0
    %v1867 = vadd.f32 %v1794, %v1866
    %1868 = vmatprep.mubr.bf16.mxu0 %v128
    %1869 = vmatmul.mubr.bf16.gmra.mxu0 %v127
    %v1870 = vpop.f32.mrf.mxu0
    %v1871 = vadd.f32 %v1798, %v1870
    %v1872 = vpop.f32.mrf.mxu0
    %v1873 = vadd.f32 %v1800, %v1872
    %v1874 = vpop.f32.mrf.mxu0
    %v1875 = vadd.f32 %v1802, %v1874
    %v1876 = vpop.f32.mrf.mxu0
    %v1877 = vadd.f32 %v1804, %v1876
    %1878 = vdwg.mxu0
    %v1879 = vmax.f32 %v1695, 0.0
    %v1880 = vmax.f32 %v1697, 0.0
    %v1881 = vmax.f32 %v1841, 0.0
    %v1882 = vmax.f32 %v1843, 0.0
    %v1883 = vmax.f32 %v1699, 0.0
    %v1884 = vmax.f32 %v1701, 0.0
    %v1885 = vmax.f32 %v1845, 0.0
    %v1886 = vmax.f32 %v1847, 0.0
    %v1887 = vmax.f32 %v1705, 0.0
    %v1888 = vmax.f32 %v1707, 0.0
    %v1889 = vmax.f32 %v1851, 0.0
    %v1890 = vmax.f32 %v1853, 0.0
    %v1891 = vmax.f32 %v1709, 0.0
    %v1892 = vmax.f32 %v1711, 0.0
    %v1893 = vmax.f32 %v1855, 0.0
    %v1894 = vmax.f32 %v1857, 0.0
    %v1895 = vmax.f32 %v1715, 0.0
    %v1896 = vmax.f32 %v1717, 0.0
    %v1897 = vmax.f32 %v1861, 0.0
    %v1898 = vmax.f32 %v1863, 0.0
    %v1899 = vmax.f32 %v1719, 0.0
    %v1900 = vmax.f32 %v1721, 0.0
    %v1901 = vmax.f32 %v1865, 0.0
    %v1902 = vmax.f32 %v1867, 0.0
    %v1903 = vmax.f32 %v1725, 0.0
    %v1904 = vmax.f32 %v1727, 0.0
    %v1905 = vmax.f32 %v1871, 0.0
    %v1906 = vmax.f32 %v1873, 0.0
    %v1907 = vmax.f32 %v1729, 0.0
    %v1908 = vmax.f32 %v1731, 0.0
    %v1909 = vmax.f32 %v1875, 0.0
    %v1910 = vmax.f32 %v1877, 0.0
    %v1911 = vmul.f32 %v782, %v1879
    %v1912 = vmul.f32 %v782, %v1880
    %v1913 = vmul.f32 %v782, %v1881
    %v1914 = vmul.f32 %v782, %v1882
    %v1915 = vmul.f32 %v784, %v1883
    %v1916 = vmul.f32 %v784, %v1884
    %v1917 = vmul.f32 %v784, %v1885
    %v1918 = vmul.f32 %v784, %v1886
    %v1919 = vmul.f32 %v786, %v1887
    %v1920 = vmul.f32 %v786, %v1888
    %v1921 = vmul.f32 %v786, %v1889
    %v1922 = vmul.f32 %v786, %v1890
    %v1923 = vmul.f32 %v788, %v1891
    %v1924 = vmul.f32 %v788, %v1892
    %v1925 = vmul.f32 %v788, %v1893
    %v1926 = vmul.f32 %v788, %v1894
    %v1927 = vmul.f32 %v790, %v1895
    %v1928 = vmul.f32 %v790, %v1896
    %v1929 = vmul.f32 %v790, %v1897
    %v1930 = vmul.f32 %v790, %v1898
    %v1931 = vmul.f32 %v792, %v1899
    %v1932 = vmul.f32 %v792, %v1900
    %v1933 = vmul.f32 %v792, %v1901
    %v1934 = vmul.f32 %v792, %v1902
    %v1935 = vmul.f32 %v794, %v1903
    %v1936 = vmul.f32 %v794, %v1904
    %v1937 = vmul.f32 %v794, %v1905
    %v1938 = vmul.f32 %v794, %v1906
    %v1939 = vmul.f32 %v796, %v1907
    %v1940 = vmul.f32 %v796, %v1908
    %v1941 = vmul.f32 %v796, %v1909
    %v1942 = vmul.f32 %v796, %v1910
    %v1943 = vadd.f32 %v1911, 0.7
    %v1944 = vadd.f32 %v1912, 0.7
    %v1945 = vadd.f32 %v1913, 0.7
    %v1946 = vadd.f32 %v1914, 0.7
    %v1947 = vadd.f32 %v1915, 0.7
    %v1948 = vadd.f32 %v1916, 0.7
    %v1949 = vadd.f32 %v1917, 0.7
    %v1950 = vadd.f32 %v1918, 0.7
    %v1951 = vadd.f32 %v1919, 0.7
    %v1952 = vadd.f32 %v1920, 0.7
    %v1953 = vadd.f32 %v1921, 0.7
    %v1954 = vadd.f32 %v1922, 0.7
    %v1955 = vadd.f32 %v1923, 0.7
    %v1956 = vadd.f32 %v1924, 0.7
    %v1957 = vadd.f32 %v1925, 0.7
    %v1958 = vadd.f32 %v1926, 0.7
    %v1959 = vadd.f32 %v1927, 0.7
    %v1960 = vadd.f32 %v1928, 0.7
    %v1961 = vadd.f32 %v1929, 0.7
    %v1962 = vadd.f32 %v1930, 0.7
    %v1963 = vadd.f32 %v1931, 0.7
    %v1964 = vadd.f32 %v1932, 0.7
    %v1965 = vadd.f32 %v1933, 0.7
    %v1966 = vadd.f32 %v1934, 0.7
    %v1967 = vadd.f32 %v1935, 0.7
    %v1968 = vadd.f32 %v1936, 0.7
    %v1969 = vadd.f32 %v1937, 0.7
    %v1970 = vadd.f32 %v1938, 0.7
    %v1971 = vadd.f32 %v1939, 0.7
    %v1972 = vadd.f32 %v1940, 0.7
    %v1973 = vadd.f32 %v1941, 0.7
    %v1974 = vadd.f32 %v1942, 0.7
    %v1975 = vmul.f32 %v81, %v1943
    %v1976 = vmul.f32 %v82, %v1944
    %v1977 = vmul.f32 %v83, %v1945
    %v1978 = vmul.f32 %v84, %v1946
    %v1979 = vmul.f32 %v85, %v1947
    %v1980 = vmul.f32 %v86, %v1948
    %v1981 = vmul.f32 %v87, %v1949
    %v1982 = vmul.f32 %v88, %v1950
    %v1983 = vmul.f32 %v89, %v1951
    %v1984 = vmul.f32 %v90, %v1952
    %v1985 = vmul.f32 %v91, %v1953
    %v1986 = vmul.f32 %v92, %v1954
    %v1987 = vmul.f32 %v93, %v1955
    %v1988 = vmul.f32 %v94, %v1956
    %v1989 = vmul.f32 %v95, %v1957
    %v1990 = vmul.f32 %v96, %v1958
    %v1991 = vmul.f32 %v97, %v1959
    %v1992 = vmul.f32 %v98, %v1960
    %v1993 = vmul.f32 %v99, %v1961
    %v1994 = vmul.f32 %v100, %v1962
    %v1995 = vmul.f32 %v101, %v1963
    %v1996 = vmul.f32 %v102, %v1964
    %v1997 = vmul.f32 %v103, %v1965
    %v1998 = vmul.f32 %v104, %v1966
    %v1999 = vmul.f32 %v105, %v1967
    %v2000 = vmul.f32 %v106, %v1968
    %v2001 = vmul.f32 %v107, %v1969
    %v2002 = vmul.f32 %v108, %v1970
    %v2003 = vmul.f32 %v109, %v1971
    %v2004 = vmul.f32 %v110, %v1972
    %v2005 = vmul.f32 %v111, %v1973
    %v2006 = vmul.f32 %v112, %v1974
    %v2007 = vmul.f32 %v1879, 0.3
    %v2008 = vmul.f32 %v1880, 0.3
    %v2009 = vmul.f32 %v1881, 0.3
    %v2010 = vmul.f32 %v1882, 0.3
    %v2011 = vmul.f32 %v1883, 0.3
    %v2012 = vmul.f32 %v1884, 0.3
    %v2013 = vmul.f32 %v1885, 0.3
    %v2014 = vmul.f32 %v1886, 0.3
    %v2015 = vmul.f32 %v1887, 0.3
    %v2016 = vmul.f32 %v1888, 0.3
    %v2017 = vmul.f32 %v1889, 0.3
    %v2018 = vmul.f32 %v1890, 0.3
    %v2019 = vmul.f32 %v1891, 0.3
    %v2020 = vmul.f32 %v1892, 0.3
    %v2021 = vmul.f32 %v1893, 0.3
    %v2022 = vmul.f32 %v1894, 0.3
    %v2023 = vmul.f32 %v1895, 0.3
    %v2024 = vmul.f32 %v1896, 0.3
    %v2025 = vmul.f32 %v1897, 0.3
    %v2026 = vmul.f32 %v1898, 0.3
    %v2027 = vmul.f32 %v1899, 0.3
    %v2028 = vmul.f32 %v1900, 0.3
    %v2029 = vmul.f32 %v1901, 0.3
    %v2030 = vmul.f32 %v1902, 0.3
    %v2031 = vmul.f32 %v1903, 0.3
    %v2032 = vmul.f32 %v1904, 0.3
    %v2033 = vmul.f32 %v1905, 0.3
    %v2034 = vmul.f32 %v1906, 0.3
    %v2035 = vmul.f32 %v1907, 0.3
    %v2036 = vmul.f32 %v1908, 0.3
    %v2037 = vmul.f32 %v1909, 0.3
    %v2038 = vmul.f32 %v1910, 0.3
    %v2039 = vadd.f32 %v1975, %v2007
    %v2040 = vadd.f32 %v1976, %v2008
    %v2041 = vadd.f32 %v1977, %v2009
    %v2042 = vadd.f32 %v1978, %v2010
    %v2043 = vadd.f32 %v1979, %v2011
    %v2044 = vadd.f32 %v1980, %v2012
    %v2045 = vadd.f32 %v1981, %v2013
    %v2046 = vadd.f32 %v1982, %v2014
    %v2047 = vadd.f32 %v1983, %v2015
    %v2048 = vadd.f32 %v1984, %v2016
    %v2049 = vadd.f32 %v1985, %v2017
    %v2050 = vadd.f32 %v1986, %v2018
    %v2051 = vadd.f32 %v1987, %v2019
    %v2052 = vadd.f32 %v1988, %v2020
    %v2053 = vadd.f32 %v1989, %v2021
    %v2054 = vadd.f32 %v1990, %v2022
    %v2055 = vadd.f32 %v1991, %v2023
    %v2056 = vadd.f32 %v1992, %v2024
    %v2057 = vadd.f32 %v1993, %v2025
    %v2058 = vadd.f32 %v1994, %v2026
    %v2059 = vadd.f32 %v1995, %v2027
    %v2060 = vadd.f32 %v1996, %v2028
    %v2061 = vadd.f32 %v1997, %v2029
    %v2062 = vadd.f32 %v1998, %v2030
    %v2063 = vadd.f32 %v1999, %v2031
    %v2064 = vadd.f32 %v2000, %v2032
    %v2065 = vadd.f32 %v2001, %v2033
    %v2066 = vadd.f32 %v2002, %v2034
    %v2067 = vadd.f32 %v2003, %v2035
    %v2068 = vadd.f32 %v2004, %v2036
    %v2069 = vadd.f32 %v2005, %v2037
    %v2070 = vadd.f32 %v2006, %v2038
    %2071 = vst [vmem:[#allocation12] sm:$0xff] %v2039
    %2072 = vst [vmem:[#allocation12 + $0x8] sm:$0xff] %v2040
    %2073 = vst [vmem:[#allocation12 + $0x10] sm:$0xff] %v2041
    %2074 = vst [vmem:[#allocation12 + $0x18] sm:$0xff] %v2042
    %2075 = vst [vmem:[#allocation12 + $0x20] sm:$0xff] %v2043
    %2076 = vst [vmem:[#allocation12 + $0x28] sm:$0xff] %v2044
    %2077 = vst [vmem:[#allocation12 + $0x30] sm:$0xff] %v2045
    %2078 = vst [vmem:[#allocation12 + $0x38] sm:$0xff] %v2046
    %2079 = vst [vmem:[#allocation12 + $0x40] sm:$0xff] %v2047
    %2080 = vst [vmem:[#allocation12 + $0x48] sm:$0xff] %v2048
    %2081 = vst [vmem:[#allocation12 + $0x50] sm:$0xff] %v2049
    %2082 = vst [vmem:[#allocation12 + $0x58] sm:$0xff] %v2050
    %2083 = vst [vmem:[#allocation12 + $0x60] sm:$0xff] %v2051
    %2084 = vst [vmem:[#allocation12 + $0x68] sm:$0xff] %v2052
    %2085 = vst [vmem:[#allocation12 + $0x70] sm:$0xff] %v2053
    %2086 = vst [vmem:[#allocation12 + $0x78] sm:$0xff] %v2054
    %2087 = vst [vmem:[#allocation12 + $0x80] sm:$0xff] %v2055
    %2088 = vst [vmem:[#allocation12 + $0x88] sm:$0xff] %v2056
    %2089 = vst [vmem:[#allocation12 + $0x90] sm:$0xff] %v2057
    %2090 = vst [vmem:[#allocation12 + $0x98] sm:$0xff] %v2058
    %2091 = vst [vmem:[#allocation12 + $0xa0] sm:$0xff] %v2059
    %2092 = vst [vmem:[#allocation12 + $0xa8] sm:$0xff] %v2060
    %2093 = vst [vmem:[#allocation12 + $0xb0] sm:$0xff] %v2061
    %2094 = vst [vmem:[#allocation12 + $0xb8] sm:$0xff] %v2062
    %2095 = vst [vmem:[#allocation12 + $0xc0] sm:$0xff] %v2063
    %2096 = vst [vmem:[#allocation12 + $0xc8] sm:$0xff] %v2064
    %2097 = vst [vmem:[#allocation12 + $0xd0] sm:$0xff] %v2065
    %2098 = vst [vmem:[#allocation12 + $0xd8] sm:$0xff] %v2066
    %2099 = vst [vmem:[#allocation12 + $0xe0] sm:$0xff] %v2067
    %2100 = vst [vmem:[#allocation12 + $0xe8] sm:$0xff] %v2068
    %2101 = vst [vmem:[#allocation12 + $0xf0] sm:$0xff] %v2069
    %2102 = vst [vmem:[#allocation12 + $0xf8] sm:$0xff] %v2070
    // Predicated region
    $region46: #{tpu_custom_call.1} parent=1 // pred_check
      _
    $region47: #{tpu_custom_call.1} parent=1 // pred_check_branch
      %2104 = sbr.rel (0) target = $region49
    $region48: #{tpu_custom_call.1} parent=1 // pred_region
      %s2106 = ssub.s32 4096, 4096
      %2107 = vsyncadd [#allocation6], %s2106
      %s2108 = sshll.u32 [#allocation12], 4
      %s2109 = int_to_ptr.vmem [resolvable:$true] %s2108
      %2114 = dma.vmem_to_hbm [thread:$0]  %s2109, 4096, %s7, [#allocation6], 512, 512, 32
    $region49: #{tpu_custom_call.1} parent=1 // pred_fallthru
      _
    // Predicated region
    $region50: #{tpu_custom_call.1} parent=1 // pred_check
      _
    $region51: #{tpu_custom_call.1} parent=1 // pred_check_branch
      %2116 = sbr.rel (0) target = $region53
    $region52: #{tpu_custom_call.1} parent=1 // pred_region
      %2117 = dma.done [#allocation6], 4096
    $region53: #{tpu_custom_call.1} parent=1 // pred_fallthru
      _
    %2118 = vsyncpa [#allocation5], 1
    %2119 = vsyncpa [#allocation8], 1
    %2120 = vsyncpa [#allocation11], 1
    %2121 = vsyncpa [#allocation6], 1

// kernel: tpu_custom_call.1
$region0: #{tpu_custom_call.1}
  #allocation0 [shape = 'u32[]', space=smem, size = 0x4, offset = 0x4, fixed_abs, tag = 'smem constant byte address 0x4 - core index']
  #allocation1 [shape = 'u32[144,128]{1,0:T(1,128)}', space=vmem, size = 0x12000, scoped, tag = 'internal scratch']
  #allocation2 [shape = 'f32[64,1]{1,0:T(8,128)}', space=vmem, size = 0x8000, scoped, tag = 'scratch operand']
  #allocation3 [shape = 'f32[1,1]{1,0:T(1,128)S(6)}', space=smem, size = 0x200, scoped, tag = 'scoped memory for tpu_custom_call.1']
  %s0 = inlined_call_operand.hbm [shape: f32[64,512], index: 0, kind: input, shape index: {}]
  %s1 = inlined_call_operand.hbm [shape: bf16[512,256], index: 1, kind: input, shape index: {}]
  %s2 = inlined_call_operand.vmem [shape: f32[1,256], index: 2, kind: input, shape index: {}]
  %s3 = inlined_call_operand.hbm [shape: f32[1,256], index: 3, kind: input, shape index: {}]
  %s4 = inlined_call_operand.<no memory space> [shape: f32[1,1], index: 4, kind: input, shape index: {}]
  %s5 = inlined_call_operand.hbm [shape: bf16[512,512], index: 5, kind: input, shape index: {}]
  %s6 = inlined_call_operand.vmem [shape: f32[1,512], index: 6, kind: input, shape index: {}]
  %s7 = inlined_call_operand.hbm [shape: f32[64,512], index: 7, kind: output, shape index: {}]
  %s8 = sld [smem:[#allocation0]]
  $region54: #{tpu_custom_call.1} parent=0
    _
  %s10 = ssub.s32 1, %s8
  %s11 = scalar_select 0, %s10, %s8
  %12 = sst [smem:[#allocation3]] %s4
  $region1: #{tpu_custom_call.1} parent=0
    #allocation4 [shape = 'u8[131072]{0}', space=vmem, size = 0x20000, scoped, tag = 'input window, operand 0, single buffered']
    #allocation5 [shape = 's32[1]{0}', space=sflag, size = 0x4, scoped, tag = 'scoped memory for tpu_custom_call.1']
    #allocation6 [shape = 's32[1]{0}', space=sflag, size = 0x4, scoped, tag = 'scoped memory for tpu_custom_call.1']
    #allocation7 [shape = 'u8[262144]{0}', space=vmem, size = 0x40000, scoped, tag = 'input window, operand 1, single buffered']
    #allocation8 [shape = 's32[1]{0}', space=sflag, size = 0x4, scoped, tag = 'scoped memory for tpu_custom_call.1']
    #allocation9 [shape = 'u8[1024]{0}', space=vmem, size = 0x400, scoped, tag = 'input window, operand 3, single buffered']
    #allocation10 [shape = 'u8[524288]{0}', space=vmem, size = 0x80000, scoped, tag = 'input window, operand 5, single buffered']
    #allocation11 [shape = 's32[1]{0}', space=sflag, size = 0x4, scoped, tag = 'scoped memory for tpu_custom_call.1']
    #allocation12 [shape = 'u8[131072]{0}', space=vmem, size = 0x20000, scoped, tag = 'output window, operand 0, single buffered']
    %13 = vsyncpa [#allocation5], 0
    %14 = vsyncpa [#allocation8], 0
    %15 = vsyncpa [#allocation11], 0
    %16 = vsyncpa [#allocation6], 0
    // Predicated region
    $region2: #{tpu_custom_call.1} parent=1 // pred_check
      _
    $region3: #{tpu_custom_call.1} parent=1 // pred_check_branch
      %18 = sbr.rel (0) target = $region5
    $region4: #{tpu_custom_call.1} parent=1 // pred_region
      %s20 = ssub.s32 4096, 4096
      %21 = vsyncadd [#allocation5], %s20
      %s22 = sshll.u32 [#allocation4], 4
      %s23 = int_to_ptr.vmem [resolvable:$true] %s22
      %28 = dma.hbm_to_vmem [thread:$0]  %s0, 4096, %s23, [#allocation5], 512, 512, 32
    $region5: #{tpu_custom_call.1} parent=1 // pred_fallthru
      _
    // Predicated region
    $region6: #{tpu_custom_call.1} parent=1 // pred_check
      _
    $region7: #{tpu_custom_call.1} parent=1 // pred_check_branch
      %30 = sbr.rel (0) target = $region9
    $region8: #{tpu_custom_call.1} parent=1 // pred_region
      %s32 = ssub.s32 8192, 8192
      %33 = vsyncadd [#allocation8], %s32
      %s34 = sshll.u32 [#allocation7], 4
      %s35 = int_to_ptr.vmem [resolvable:$true] %s34
      %40 = dma.hbm_to_vmem [thread:$0]  %s1, 8192, %s35, [#allocation8], 128, 128, 8
    $region9: #{tpu_custom_call.1} parent=1 // pred_fallthru
      _
    // Predicated region
    $region10: #{tpu_custom_call.1} parent=1 // pred_check
      _
    $region11: #{tpu_custom_call.1} parent=1 // pred_check_branch
      %42 = sbr.rel (0) target = $region13
    $region12: #{tpu_custom_call.1} parent=1 // pred_region
      _
    $region13: #{tpu_custom_call.1} parent=1 // pred_fallthru
      _
    // Predicated region
    $region14: #{tpu_custom_call.1} parent=1 // pred_check
      _
    $region15: #{tpu_custom_call.1} parent=1 // pred_check_branch
      %44 = sbr.rel (0) target = $region17
    $region16: #{tpu_custom_call.1} parent=1 // pred_region
      %s46 = ssub.s32 32, 32
      %47 = vsyncadd [#allocation8], %s46
      %s49 = sshll.u32 [#allocation9], 4
      %s50 = int_to_ptr.vmem [resolvable:$true] %s49
      %52 = dma.hbm_to_vmem [thread:$0]  %s3, 32, %s50, [#allocation8]
    $region17: #{tpu_custom_call.1} parent=1 // pred_fallthru
      _
    // Predicated region
    $region18: #{tpu_custom_call.1} parent=1 // pred_check
      _
    $region19: #{tpu_custom_call.1} parent=1 // pred_check_branch
      %54 = sbr.rel (0) target = $region21
    $region20: #{tpu_custom_call.1} parent=1 // pred_region
      _
    $region21: #{tpu_custom_call.1} parent=1 // pred_fallthru
      _
    // Predicated region
    $region22: #{tpu_custom_call.1} parent=1 // pred_check
      _
    $region23: #{tpu_custom_call.1} parent=1 // pred_check_branch
      %56 = sbr.rel (0) target = $region25
    $region24: #{tpu_custom_call.1} parent=1 // pred_region
      %s58 = ssub.s32 16384, 16384
      %59 = vsyncadd [#allocation11], %s58
      %s60 = sshll.u32 [#allocation10], 4
      %s61 = int_to_ptr.vmem [resolvable:$true] %s60
      %66 = dma.hbm_to_vmem [thread:$0]  %s5, 16384, %s61, [#allocation11], 256, 256, 16
    $region25: #{tpu_custom_call.1} parent=1 // pred_fallthru
      _
    // Predicated region
    $region26: #{tpu_custom_call.1} parent=1 // pred_check
      _
    $region27: #{tpu_custom_call.1} parent=1 // pred_check_branch
      %68 = sbr.rel (0) target = $region29
    $region28: #{tpu_custom_call.1} parent=1 // pred_region
      _
    $region29: #{tpu_custom_call.1} parent=1 // pred_fallthru
      _
    // Predicated region
    $region30: #{tpu_custom_call.1} parent=1 // pred_check
      _
    $region31: #{tpu_custom_call.1} parent=1 // pred_check_branch
      %70 = sbr.rel (0) target = $region33
    $region32: #{tpu_custom_call.1} parent=1 // pred_region
      %71 = dma.done [#allocation5], 4096
    $region33: #{tpu_custom_call.1} parent=1 // pred_fallthru
      _
    // Predicated region
    $region34: #{tpu_custom_call.1} parent=1 // pred_check
      _
    $region35: #{tpu_custom_call.1} parent=1 // pred_check_branch
      %73 = sbr.rel (0) target = $region37
    $region36: #{tpu_custom_call.1} parent=1 // pred_region
      %74 = dma.done [#allocation8], 8192
    $region37: #{tpu_custom_call.1} parent=1 // pred_fallthru
      _
    // Predicated region
    $region38: #{tpu_custom_call.1} parent=1 // pred_check
      _
    $region39: #{tpu_custom_call.1} parent=1 // pred_check_branch
      %76 = sbr.rel (0) target = $region41
    $region40: #{tpu_custom_call.1} parent=1 // pred_region
      %77 = dma.done [#allocation8], 32
    $region41: #{tpu_custom_call.1} parent=1 // pred_fallthru
      _
    // Predicated region
    $region42: #{tpu_custom_call.1} parent=1 // pred_check
      _
    $region43: #{tpu_custom_call.1} parent=1 // pred_check_branch
      %79 = sbr.rel (0) target = $region45
    $region44: #{tpu_custom_call.1} parent=1 // pred_region
      %80 = dma.done [#allocation11], 16384
    $region45: #{tpu_custom_call.1} parent=1 // pred_fallthru
      _
    %v81 = vld [vmem:[#allocation4] sm:$0xff]
    %v82 = vld [vmem:[#allocation4 + $0x8] sm:$0xff]
    %v83 = vld [vmem:[#allocation4 + $0x10] sm:$0xff]
    %v84 = vld [vmem:[#allocation4 + $0x18] sm:$0xff]
    %v85 = vld [vmem:[#allocation4 + $0x20] sm:$0xff]
    %v86 = vld [vmem:[#allocation4 + $0x28] sm:$0xff]
    %v87 = vld [vmem:[#allocation4 + $0x30] sm:$0xff]
    %v88 = vld [vmem:[#allocation4 + $0x38] sm:$0xff]
    %v89 = vld [vmem:[#allocation4 + $0x40] sm:$0xff]
    %v90 = vld [vmem:[#allocation4 + $0x48] sm:$0xff]
    %v91 = vld [vmem:[#allocation4 + $0x50] sm:$0xff]
    %v92 = vld [vmem:[#allocation4 + $0x58] sm:$0xff]
    %v93 = vld [vmem:[#allocation4 + $0x60] sm:$0xff]
    %v94 = vld [vmem:[#allocation4 + $0x68] sm:$0xff]
    %v95 = vld [vmem:[#allocation4 + $0x70] sm:$0xff]
    %v96 = vld [vmem:[#allocation4 + $0x78] sm:$0xff]
    %v97 = vld [vmem:[#allocation4 + $0x80] sm:$0xff]
    %v98 = vld [vmem:[#allocation4 + $0x88] sm:$0xff]
    %v99 = vld [vmem:[#allocation4 + $0x90] sm:$0xff]
    %v100 = vld [vmem:[#allocation4 + $0x98] sm:$0xff]
    %v101 = vld [vmem:[#allocation4 + $0xa0] sm:$0xff]
    %v102 = vld [vmem:[#allocation4 + $0xa8] sm:$0xff]
    %v103 = vld [vmem:[#allocation4 + $0xb0] sm:$0xff]
    %v104 = vld [vmem:[#allocation4 + $0xb8] sm:$0xff]
    %v105 = vld [vmem:[#allocation4 + $0xc0] sm:$0xff]
    %v106 = vld [vmem:[#allocation4 + $0xc8] sm:$0xff]
    %v107 = vld [vmem:[#allocation4 + $0xd0] sm:$0xff]
    %v108 = vld [vmem:[#allocation4 + $0xd8] sm:$0xff]
    %v109 = vld [vmem:[#allocation4 + $0xe0] sm:$0xff]
    %v110 = vld [vmem:[#allocation4 + $0xe8] sm:$0xff]
    %v111 = vld [vmem:[#allocation4 + $0xf0] sm:$0xff]
    %v112 = vld [vmem:[#allocation4 + $0xf8] sm:$0xff]
    %v113 = vpack.c.bf16 %v85, %v81
    %v114 = vpack.c.bf16 %v86, %v82
    %v115 = vpack.c.bf16 %v87, %v83
    %v116 = vpack.c.bf16 %v88, %v84
    %v117 = vpack.c.bf16 %v93, %v89
    %v118 = vpack.c.bf16 %v94, %v90
    %v119 = vpack.c.bf16 %v95, %v91
    %v120 = vpack.c.bf16 %v96, %v92
    %v121 = vpack.c.bf16 %v101, %v97
    %v122 = vpack.c.bf16 %v102, %v98
    %v123 = vpack.c.bf16 %v103, %v99
    %v124 = vpack.c.bf16 %v104, %v100
    %v125 = vpack.c.bf16 %v109, %v105
    %v126 = vpack.c.bf16 %v110, %v106
    %v127 = vpack.c.bf16 %v111, %v107
    %v128 = vpack.c.bf16 %v112, %v108
    %v129 = vld [vmem:[#allocation7] sm:$0xff]
    %v130 = vld [vmem:[#allocation7 + $0x8] sm:$0xff]
    %v131 = vld [vmem:[#allocation7 + $0x10] sm:$0xff]
    %v132 = vld [vmem:[#allocation7 + $0x18] sm:$0xff]
    %v133 = vld [vmem:[#allocation7 + $0x20] sm:$0xff]
    %v134 = vld [vmem:[#allocation7 + $0x28] sm:$0xff]
    %v135 = vld [vmem:[#allocation7 + $0x30] sm:$0xff]
    %v136 = vld [vmem:[#allocation7 + $0x38] sm:$0xff]
    %v137 = vld [vmem:[#allocation7 + $0x40] sm:$0xff]
    %v138 = vld [vmem:[#allocation7 + $0x48] sm:$0xff]
    %v139 = vld [vmem:[#allocation7 + $0x50] sm:$0xff]
    %v140 = vld [vmem:[#allocation7 + $0x58] sm:$0xff]
    %v141 = vld [vmem:[#allocation7 + $0x60] sm:$0xff]
    %v142 = vld [vmem:[#allocation7 + $0x68] sm:$0xff]
    %v143 = vld [vmem:[#allocation7 + $0x70] sm:$0xff]
    %v144 = vld [vmem:[#allocation7 + $0x78] sm:$0xff]
    %v145 = vld [vmem:[#allocation7 + $0x80] sm:$0xff]
    %v146 = vld [vmem:[#allocation7 + $0x88] sm:$0xff]
    %v147 = vld [vmem:[#allocation7 + $0x90] sm:$0xff]
    %v148 = vld [vmem:[#allocation7 + $0x98] sm:$0xff]
    %v149 = vld [vmem:[#allocation7 + $0xa0] sm:$0xff]
    %v150 = vld [vmem:[#allocation7 + $0xa8] sm:$0xff]
    %v151 = vld [vmem:[#allocation7 + $0xb0] sm:$0xff]
    %v152 = vld [vmem:[#allocation7 + $0xb8] sm:$0xff]
    %v153 = vld [vmem:[#allocation7 + $0xc0] sm:$0xff]
    %v154 = vld [vmem:[#allocation7 + $0xc8] sm:$0xff]
    %v155 = vld [vmem:[#allocation7 + $0xd0] sm:$0xff]
    %v156 = vld [vmem:[#allocation7 + $0xd8] sm:$0xff]
    %v157 = vld [vmem:[#allocation7 + $0xe0] sm:$0xff]
    %v158 = vld [vmem:[#allocation7 + $0xe8] sm:$0xff]
    %v159 = vld [vmem:[#allocation7 + $0xf0] sm:$0xff]
    %v160 = vld [vmem:[#allocation7 + $0xf8] sm:$0xff]
    %v161 = vld [vmem:[#allocation7 + $0x100] sm:$0xff]
    %v162 = vld [vmem:[#allocation7 + $0x108] sm:$0xff]
    %v163 = vld [vmem:[#allocation7 + $0x110] sm:$0xff]
    %v164 = vld [vmem:[#allocation7 + $0x118] sm:$0xff]
    %v165 = vld [vmem:[#allocation7 + $0x120] sm:$0xff]
    %v166 = vld [vmem:[#allocation7 + $0x128] sm:$0xff]
    %v167 = vld [vmem:[#allocation7 + $0x130] sm:$0xff]
    %v168 = vld [vmem:[#allocation7 + $0x138] sm:$0xff]
    %v169 = vld [vmem:[#allocation7 + $0x140] sm:$0xff]
    %v170 = vld [vmem:[#allocation7 + $0x148] sm:$0xff]
    %v171 = vld [vmem:[#allocation7 + $0x150] sm:$0xff]
    %v172 = vld [vmem:[#allocation7 + $0x158] sm:$0xff]
    %v173 = vld [vmem:[#allocation7 + $0x160] sm:$0xff]
    %v174 = vld [vmem:[#allocation7 + $0x168] sm:$0xff]
    %v175 = vld [vmem:[#allocation7 + $0x170] sm:$0xff]
    %v176 = vld [vmem:[#allocation7 + $0x178] sm:$0xff]
    %v177 = vld [vmem:[#allocation7 + $0x180] sm:$0xff]
    %v178 = vld [vmem:[#allocation7 + $0x188] sm:$0xff]
    %v179 = vld [vmem:[#allocation7 + $0x190] sm:$0xff]
    %v180 = vld [vmem:[#allocation7 + $0x198] sm:$0xff]
    %v181 = vld [vmem:[#allocation7 + $0x1a0] sm:$0xff]
    %v182 = vld [vmem:[#allocation7 + $0x1a8] sm:$0xff]
    %v183 = vld [vmem:[#allocation7 + $0x1b0] sm:$0xff]
    %v184 = vld [vmem:[#allocation7 + $0x1b8] sm:$0xff]
    %v185 = vld [vmem:[#allocation7 + $0x1c0] sm:$0xff]
    %v186 = vld [vmem:[#allocation7 + $0x1c8] sm:$0xff]
    %v187 = vld [vmem:[#allocation7 + $0x1d0] sm:$0xff]
    %v188 = vld [vmem:[#allocation7 + $0x1d8] sm:$0xff]
    %v189 = vld [vmem:[#allocation7 + $0x1e0] sm:$0xff]
    %v190 = vld [vmem:[#allocation7 + $0x1e8] sm:$0xff]
    %v191 = vld [vmem:[#allocation7 + $0x1f0] sm:$0xff]
    %v192 = vld [vmem:[#allocation7 + $0x1f8] sm:$0xff]
    %v193 = vld [vmem:[%s2] sm:$0x3]
    %v195 = vlaneseq
    %v196 = vshrl.u32 %v195, 7
    %v197 = vsub.s32 0, %v196
    %v198 = vrot.slane %v193, %v197
    %v199 = vlaneseq
    %v200 = vshrl.u32 %v199, 7
    %v201 = vsub.s32 1, %v200
    %v202 = vrot.slane %v193, %v201
    %v269 = vunpack.c.l.b16 %v129
    %v270 = vunpack.c.h.b16 %v129
    %v271 = vunpack.c.l.b16 %v130
    %v272 = vunpack.c.h.b16 %v130
    %v273 = vunpack.c.l.b16 %v131
    %v274 = vunpack.c.h.b16 %v131
    %v275 = vunpack.c.l.b16 %v132
    %v276 = vunpack.c.h.b16 %v132
    %v277 = vunpack.c.l.b16 %v133
    %v278 = vunpack.c.h.b16 %v133
    %v279 = vunpack.c.l.b16 %v134
    %v280 = vunpack.c.h.b16 %v134
    %v281 = vunpack.c.l.b16 %v135
    %v282 = vunpack.c.h.b16 %v135
    %v283 = vunpack.c.l.b16 %v136
    %v284 = vunpack.c.h.b16 %v136
    %v285 = vunpack.c.l.b16 %v137
    %v286 = vunpack.c.h.b16 %v137
    %v287 = vunpack.c.l.b16 %v138
    %v288 = vunpack.c.h.b16 %v138
    %v289 = vunpack.c.l.b16 %v139
    %v290 = vunpack.c.h.b16 %v139
    %v291 = vunpack.c.l.b16 %v140
    %v292 = vunpack.c.h.b16 %v140
    %v293 = vunpack.c.l.b16 %v141
    %v294 = vunpack.c.h.b16 %v141
    %v295 = vunpack.c.l.b16 %v142
    %v296 = vunpack.c.h.b16 %v142
    %v297 = vunpack.c.l.b16 %v143
    %v298 = vunpack.c.h.b16 %v143
    %v299 = vunpack.c.l.b16 %v144
    %v300 = vunpack.c.h.b16 %v144
    %v301 = vunpack.c.l.b16 %v145
    %v302 = vunpack.c.h.b16 %v145
    %v303 = vunpack.c.l.b16 %v146
    %v304 = vunpack.c.h.b16 %v146
    %v305 = vunpack.c.l.b16 %v147
    %v306 = vunpack.c.h.b16 %v147
    %v307 = vunpack.c.l.b16 %v148
    %v308 = vunpack.c.h.b16 %v148
    %v309 = vunpack.c.l.b16 %v149
    %v310 = vunpack.c.h.b16 %v149
    %v311 = vunpack.c.l.b16 %v150
    %v312 = vunpack.c.h.b16 %v150
    %v313 = vunpack.c.l.b16 %v151
    %v314 = vunpack.c.h.b16 %v151
    %v315 = vunpack.c.l.b16 %v152
    %v316 = vunpack.c.h.b16 %v152
    %v317 = vunpack.c.l.b16 %v153
    %v318 = vunpack.c.h.b16 %v153
    %v319 = vunpack.c.l.b16 %v154
    %v320 = vunpack.c.h.b16 %v154
    %v321 = vunpack.c.l.b16 %v155
    %v322 = vunpack.c.h.b16 %v155
    %v323 = vunpack.c.l.b16 %v156
    %v324 = vunpack.c.h.b16 %v156
    %v325 = vunpack.c.l.b16 %v157
    %v326 = vunpack.c.h.b16 %v157
    %v327 = vunpack.c.l.b16 %v158
    %v328 = vunpack.c.h.b16 %v158
    %v329 = vunpack.c.l.b16 %v159
    %v330 = vunpack.c.h.b16 %v159
    %v331 = vunpack.c.l.b16 %v160
    %v332 = vunpack.c.h.b16 %v160
    %v333 = vunpack.c.l.b16 %v161
    %v334 = vunpack.c.h.b16 %v161
    %v335 = vunpack.c.l.b16 %v162
    %v336 = vunpack.c.h.b16 %v162
    %v337 = vunpack.c.l.b16 %v163
    %v338 = vunpack.c.h.b16 %v163
    %v339 = vunpack.c.l.b16 %v164
    %v340 = vunpack.c.h.b16 %v164
    %v341 = vunpack.c.l.b16 %v165
    %v342 = vunpack.c.h.b16 %v165
    %v343 = vunpack.c.l.b16 %v166
    %v344 = vunpack.c.h.b16 %v166
    %v345 = vunpack.c.l.b16 %v167
    %v346 = vunpack.c.h.b16 %v167
    %v347 = vunpack.c.l.b16 %v168
    %v348 = vunpack.c.h.b16 %v168
    %v349 = vunpack.c.l.b16 %v169
    %v350 = vunpack.c.h.b16 %v169
    %v351 = vunpack.c.l.b16 %v170
    %v352 = vunpack.c.h.b16 %v170
    %v353 = vunpack.c.l.b16 %v171
    %v354 = vunpack.c.h.b16 %v171
    %v355 = vunpack.c.l.b16 %v172
    %v356 = vunpack.c.h.b16 %v172
    %v357 = vunpack.c.l.b16 %v173
    %v358 = vunpack.c.h.b16 %v173
    %v359 = vunpack.c.l.b16 %v174
    %v360 = vunpack.c.h.b16 %v174
    %v361 = vunpack.c.l.b16 %v175
    %v362 = vunpack.c.h.b16 %v175
    %v363 = vunpack.c.l.b16 %v176
    %v364 = vunpack.c.h.b16 %v176
    %v365 = vunpack.c.l.b16 %v177
    %v366 = vunpack.c.h.b16 %v177
    %v367 = vunpack.c.l.b16 %v178
    %v368 = vunpack.c.h.b16 %v178
    %v369 = vunpack.c.l.b16 %v179
    %v370 = vunpack.c.h.b16 %v179
    %v371 = vunpack.c.l.b16 %v180
    %v372 = vunpack.c.h.b16 %v180
    %v373 = vunpack.c.l.b16 %v181
    %v374 = vunpack.c.h.b16 %v181
    %v375 = vunpack.c.l.b16 %v182
    %v376 = vunpack.c.h.b16 %v182
    %v377 = vunpack.c.l.b16 %v183
    %v378 = vunpack.c.h.b16 %v183
    %v379 = vunpack.c.l.b16 %v184
    %v380 = vunpack.c.h.b16 %v184
    %v381 = vunpack.c.l.b16 %v185
    %v382 = vunpack.c.h.b16 %v185
    %v383 = vunpack.c.l.b16 %v186
    %v384 = vunpack.c.h.b16 %v186
    %v385 = vunpack.c.l.b16 %v187
    %v386 = vunpack.c.h.b16 %v187
    %v387 = vunpack.c.l.b16 %v188
    %v388 = vunpack.c.h.b16 %v188
    %v389 = vunpack.c.l.b16 %v189
    %v390 = vunpack.c.h.b16 %v189
    %v391 = vunpack.c.l.b16 %v190
    %v392 = vunpack.c.h.b16 %v190
    %v393 = vunpack.c.l.b16 %v191
    %v394 = vunpack.c.h.b16 %v191
    %v395 = vunpack.c.l.b16 %v192
    %v396 = vunpack.c.h.b16 %v192
    %v397 = vpack.c.b16 %v271, %v269
    %v398 = vpack.c.b16 %v272, %v270
    %v399 = vpack.c.b16 %v275, %v273
    %v400 = vpack.c.b16 %v276, %v274
    %v401 = vpack.c.b16 %v279, %v277
    %v402 = vpack.c.b16 %v280, %v278
    %v403 = vpack.c.b16 %v283, %v281
    %v404 = vpack.c.b16 %v284, %v282
    %v405 = vpack.c.b16 %v287, %v285
    %v406 = vpack.c.b16 %v288, %v286
    %v407 = vpack.c.b16 %v291, %v289
    %v408 = vpack.c.b16 %v292, %v290
    %v409 = vpack.c.b16 %v295, %v293
    %v410 = vpack.c.b16 %v296, %v294
    %v411 = vpack.c.b16 %v299, %v297
    %v412 = vpack.c.b16 %v300, %v298
    %v413 = vpack.c.b16 %v303, %v301
    %v414 = vpack.c.b16 %v304, %v302
    %v415 = vpack.c.b16 %v307, %v305
    %v416 = vpack.c.b16 %v308, %v306
    %v417 = vpack.c.b16 %v311, %v309
    %v418 = vpack.c.b16 %v312, %v310
    %v419 = vpack.c.b16 %v315, %v313
    %v420 = vpack.c.b16 %v316, %v314
    %v421 = vpack.c.b16 %v319, %v317
    %v422 = vpack.c.b16 %v320, %v318
    %v423 = vpack.c.b16 %v323, %v321
    %v424 = vpack.c.b16 %v324, %v322
    %v425 = vpack.c.b16 %v327, %v325
    %v426 = vpack.c.b16 %v328, %v326
    %v427 = vpack.c.b16 %v331, %v329
    %v428 = vpack.c.b16 %v332, %v330
    %v429 = vpack.c.b16 %v335, %v333
    %v430 = vpack.c.b16 %v336, %v334
    %v431 = vpack.c.b16 %v339, %v337
    %v432 = vpack.c.b16 %v340, %v338
    %v433 = vpack.c.b16 %v343, %v341
    %v434 = vpack.c.b16 %v344, %v342
    %v435 = vpack.c.b16 %v347, %v345
    %v436 = vpack.c.b16 %v348, %v346
    %v437 = vpack.c.b16 %v351, %v349
    %v438 = vpack.c.b16 %v352, %v350
    %v439 = vpack.c.b16 %v355, %v353
    %v440 = vpack.c.b16 %v356, %v354
    %v441 = vpack.c.b16 %v359, %v357
    %v442 = vpack.c.b16 %v360, %v358
    %v443 = vpack.c.b16 %v363, %v361
    %v444 = vpack.c.b16 %v364, %v362
    %v445 = vpack.c.b16 %v367, %v365
    %v446 = vpack.c.b16 %v368, %v366
    %v447 = vpack.c.b16 %v371, %v369
    %v448 = vpack.c.b16 %v372, %v370
    %v449 = vpack.c.b16 %v375, %v373
    %v450 = vpack.c.b16 %v376, %v374
    %v451 = vpack.c.b16 %v379, %v377
    %v452 = vpack.c.b16 %v380, %v378
    %v453 = vpack.c.b16 %v383, %v381
    %v454 = vpack.c.b16 %v384, %v382
    %v455 = vpack.c.b16 %v387, %v385
    %v456 = vpack.c.b16 %v388, %v386
    %v457 = vpack.c.b16 %v391, %v389
    %v458 = vpack.c.b16 %v392, %v390
    %v459 = vpack.c.b16 %v395, %v393
    %v460 = vpack.c.b16 %v396, %v394
    %525 = vmatprep.subr.bf16.mxu0 %v412
    %526 = vmatpush1.bf16.msra.mxu0 %v411
    %527 = vmatprep.subr.bf16.mxu0 %v410
    %528 = vmatpush1.bf16.msra.mxu0 %v409
    %529 = vmatprep.subr.bf16.mxu0 %v408
    %530 = vmatpush1.bf16.msra.mxu0 %v407
    %531 = vmatprep.subr.bf16.mxu0 %v406
    %532 = vmatpush1.bf16.msra.mxu0 %v405
    %533 = vmatprep.subr.bf16.mxu0 %v404
    %534 = vmatpush1.bf16.msra.mxu0 %v403
    %535 = vmatprep.subr.bf16.mxu0 %v402
    %536 = vmatpush1.bf16.msra.mxu0 %v401
    %537 = vmatprep.subr.bf16.mxu0 %v400
    %538 = vmatpush1.bf16.msra.mxu0 %v399
    %539 = vmatprep.subr.bf16.mxu0 %v398
    %540 = vmatpush1.bf16.msra.mxu0 %v397
    %541 = vmatprep.subr.bf16.mxu0 %v428
    %542 = vmatpush2.bf16.msra.mxu0 %v427
    %543 = vmatprep.subr.bf16.mxu0 %v426
    %544 = vmatpush2.bf16.msra.mxu0 %v425
    %545 = vmatprep.subr.bf16.mxu0 %v424
    %546 = vmatpush2.bf16.msra.mxu0 %v423
    %547 = vmatprep.subr.bf16.mxu0 %v422
    %548 = vmatpush2.bf16.msra.mxu0 %v421
    %549 = vmatprep.subr.bf16.mxu0 %v420
    %550 = vmatpush2.bf16.msra.mxu0 %v419
    %551 = vmatprep.subr.bf16.mxu0 %v418
    %552 = vmatpush2.bf16.msra.mxu0 %v417
    %553 = vmatprep.subr.bf16.mxu0 %v416
    %554 = vmatpush2.bf16.msra.mxu0 %v415
    %555 = vmatprep.subr.bf16.mxu0 %v414
    %556 = vmatpush2.bf16.msra.mxu0 %v413
    %557 = vmatprep.mubr.bf16.mxu0 %v114
    %558 = vmatmul.mubr.bf16.gmra.mxu0 %v113
    %v559 = vpop.f32.mrf.mxu0
    %v560 = vadd.f32 %v198, %v559
    %v561 = vpop.f32.mrf.mxu0
    %v562 = vadd.f32 %v202, %v561
    %v563 = vpop.f32.mrf.mxu0
    %v564 = vadd.f32 %v198, %v563
    %v565 = vpop.f32.mrf.mxu0
    %v566 = vadd.f32 %v202, %v565
    %567 = vmatprep.mubr.bf16.mxu0 %v118
    %568 = vmatmul.mubr.bf16.gmra.mxu0 %v117
    %v569 = vpop.f32.mrf.mxu0
    %v570 = vadd.f32 %v198, %v569
    %v571 = vpop.f32.mrf.mxu0
    %v572 = vadd.f32 %v202, %v571
    %v573 = vpop.f32.mrf.mxu0
    %v574 = vadd.f32 %v198, %v573
    %v575 = vpop.f32.mrf.mxu0
    %v576 = vadd.f32 %v202, %v575
    %577 = vmatprep.mubr.bf16.mxu0 %v122
    %578 = vmatmul.mubr.bf16.gmra.mxu0 %v121
    %v579 = vpop.f32.mrf.mxu0
    %v580 = vadd.f32 %v198, %v579
    %v581 = vpop.f32.mrf.mxu0
    %v582 = vadd.f32 %v202, %v581
    %v583 = vpop.f32.mrf.mxu0
    %v584 = vadd.f32 %v198, %v583
    %v585 = vpop.f32.mrf.mxu0
    %v586 = vadd.f32 %v202, %v585
    %587 = vmatprep.mubr.bf16.mxu0 %v126
    %588 = vmatmul.mubr.bf16.gmra.mxu0 %v125
    %v589 = vpop.f32.mrf.mxu0
    %v590 = vadd.f32 %v198, %v589
    %v591 = vpop.f32.mrf.mxu0
    %v592 = vadd.f32 %v202, %v591
    %v593 = vpop.f32.mrf.mxu0
    %v594 = vadd.f32 %v198, %v593
    %v595 = vpop.f32.mrf.mxu0
    %v596 = vadd.f32 %v202, %v595
    %597 = vdwg.mxu0
    %598 = vmatprep.subr.bf16.mxu0 %v444
    %599 = vmatpush1.bf16.msra.mxu0 %v443
    %600 = vmatprep.subr.bf16.mxu0 %v442
    %601 = vmatpush1.bf16.msra.mxu0 %v441
    %602 = vmatprep.subr.bf16.mxu0 %v440
    %603 = vmatpush1.bf16.msra.mxu0 %v439
    %604 = vmatprep.subr.bf16.mxu0 %v438
    %605 = vmatpush1.bf16.msra.mxu0 %v437
    %606 = vmatprep.subr.bf16.mxu0 %v436
    %607 = vmatpush1.bf16.msra.mxu0 %v435
    %608 = vmatprep.subr.bf16.mxu0 %v434
    %609 = vmatpush1.bf16.msra.mxu0 %v433
    %610 = vmatprep.subr.bf16.mxu0 %v432
    %611 = vmatpush1.bf16.msra.mxu0 %v431
    %612 = vmatprep.subr.bf16.mxu0 %v430
    %613 = vmatpush1.bf16.msra.mxu0 %v429
    %614 = vmatprep.subr.bf16.mxu0 %v460
    %615 = vmatpush2.bf16.msra.mxu0 %v459
    %616 = vmatprep.subr.bf16.mxu0 %v458
    %617 = vmatpush2.bf16.msra.mxu0 %v457
    %618 = vmatprep.subr.bf16.mxu0 %v456
    %619 = vmatpush2.bf16.msra.mxu0 %v455
    %620 = vmatprep.subr.bf16.mxu0 %v454
    %621 = vmatpush2.bf16.msra.mxu0 %v453
    %622 = vmatprep.subr.bf16.mxu0 %v452
    %623 = vmatpush2.bf16.msra.mxu0 %v451
    %624 = vmatprep.subr.bf16.mxu0 %v450
    %625 = vmatpush2.bf16.msra.mxu0 %v449
    %626 = vmatprep.subr.bf16.mxu0 %v448
    %627 = vmatpush2.bf16.msra.mxu0 %v447
    %628 = vmatprep.subr.bf16.mxu0 %v446
    %629 = vmatpush2.bf16.msra.mxu0 %v445
    %630 = vmatprep.mubr.bf16.mxu0 %v116
    %631 = vmatmul.mubr.bf16.gmra.mxu0 %v115
    %v632 = vpop.f32.mrf.mxu0
    %v633 = vadd.f32 %v560, %v632
    %v634 = vpop.f32.mrf.mxu0
    %v635 = vadd.f32 %v562, %v634
    %v636 = vpop.f32.mrf.mxu0
    %v637 = vadd.f32 %v564, %v636
    %v638 = vpop.f32.mrf.mxu0
    %v639 = vadd.f32 %v566, %v638
    %640 = vmatprep.mubr.bf16.mxu0 %v120
    %641 = vmatmul.mubr.bf16.gmra.mxu0 %v119
    %v642 = vpop.f32.mrf.mxu0
    %v643 = vadd.f32 %v570, %v642
    %v644 = vpop.f32.mrf.mxu0
    %v645 = vadd.f32 %v572, %v644
    %v646 = vpop.f32.mrf.mxu0
    %v647 = vadd.f32 %v574, %v646
    %v648 = vpop.f32.mrf.mxu0
    %v649 = vadd.f32 %v576, %v648
    %650 = vmatprep.mubr.bf16.mxu0 %v124
    %651 = vmatmul.mubr.bf16.gmra.mxu0 %v123
    %v652 = vpop.f32.mrf.mxu0
    %v653 = vadd.f32 %v580, %v652
    %v654 = vpop.f32.mrf.mxu0
    %v655 = vadd.f32 %v582, %v654
    %v656 = vpop.f32.mrf.mxu0
    %v657 = vadd.f32 %v584, %v656
    %v658 = vpop.f32.mrf.mxu0
    %v659 = vadd.f32 %v586, %v658
    %660 = vmatprep.mubr.bf16.mxu0 %v128
    %661 = vmatmul.mubr.bf16.gmra.mxu0 %v127
    %v662 = vpop.f32.mrf.mxu0
    %v663 = vadd.f32 %v590, %v662
    %v664 = vpop.f32.mrf.mxu0
    %v665 = vadd.f32 %v592, %v664
    %v666 = vpop.f32.mrf.mxu0
    %v667 = vadd.f32 %v594, %v666
    %v668 = vpop.f32.mrf.mxu0
    %v669 = vadd.f32 %v596, %v668
    %670 = vdwg.mxu0
    %v671 = vmax.f32 %v633, 0.0
    %v672 = vmax.f32 %v635, 0.0
    %v673 = vmax.f32 %v637, 0.0
    %v674 = vmax.f32 %v639, 0.0
    %v675 = vmax.f32 %v643, 0.0
    %v676 = vmax.f32 %v645, 0.0
    %v677 = vmax.f32 %v647, 0.0
    %v678 = vmax.f32 %v649, 0.0
    %v679 = vmax.f32 %v653, 0.0
    %v680 = vmax.f32 %v655, 0.0
    %v681 = vmax.f32 %v657, 0.0
    %v682 = vmax.f32 %v659, 0.0
    %v683 = vmax.f32 %v663, 0.0
    %v684 = vmax.f32 %v665, 0.0
    %v685 = vmax.f32 %v667, 0.0
    %v686 = vmax.f32 %v669, 0.0
    %v687 = vld [vmem:[#allocation9] sm:$0x3]
    %v689 = vlaneseq
    %v690 = vshrl.u32 %v689, 7
    %v691 = vsub.s32 0, %v690
    %v692 = vrot.slane %v687, %v691
    %v693 = vlaneseq
    %v694 = vshrl.u32 %v693, 7
    %v695 = vsub.s32 1, %v694
    %v696 = vrot.slane %v687, %v695
    %v699 = vmul.f32 %v671, %v692
    %v700 = vmul.f32 %v672, %v696
    %v701 = vmul.f32 %v673, %v692
    %v702 = vmul.f32 %v674, %v696
    %v703 = vmul.f32 %v675, %v692
    %v704 = vmul.f32 %v676, %v696
    %v705 = vmul.f32 %v677, %v692
    %v706 = vmul.f32 %v678, %v696
    %v707 = vmul.f32 %v679, %v692
    %v708 = vmul.f32 %v680, %v696
    %v709 = vmul.f32 %v681, %v692
    %v710 = vmul.f32 %v682, %v696
    %v711 = vmul.f32 %v683, %v692
    %v712 = vmul.f32 %v684, %v696
    %v713 = vmul.f32 %v685, %v692
    %v714 = vmul.f32 %v686, %v696
    %v715 = vadd.f32 %v699, %v700
    %716 = vadd.xlane.f32.xlu0 %v715
    %v717 = vpop.xlane.xlu0 %716
    %v718 = vadd.f32 %v701, %v702
    %719 = vadd.xlane.f32.xlu0 %v718
    %v720 = vpop.xlane.xlu0 %719
    %v721 = vadd.f32 %v703, %v704
    %722 = vadd.xlane.f32.xlu0 %v721
    %v723 = vpop.xlane.xlu0 %722
    %v724 = vadd.f32 %v705, %v706
    %725 = vadd.xlane.f32.xlu0 %v724
    %v726 = vpop.xlane.xlu0 %725
    %v727 = vadd.f32 %v707, %v708
    %728 = vadd.xlane.f32.xlu0 %v727
    %v729 = vpop.xlane.xlu0 %728
    %v730 = vadd.f32 %v709, %v710
    %731 = vadd.xlane.f32.xlu0 %v730
    %v732 = vpop.xlane.xlu0 %731
    %v733 = vadd.f32 %v711, %v712
    %734 = vadd.xlane.f32.xlu0 %v733
    %v735 = vpop.xlane.xlu0 %734
    %v736 = vadd.f32 %v713, %v714
    %737 = vadd.xlane.f32.xlu0 %v736
    %v738 = vpop.xlane.xlu0 %737
    %s739 = sld [smem:[#allocation3]]
    %v740 = vstv %s739
    %v741 = vadd.f32 %v717, %v740
    %v742 = vadd.f32 %v720, %v740
    %v743 = vadd.f32 %v723, %v740
    %v744 = vadd.f32 %v726, %v740
    %v745 = vadd.f32 %v729, %v740
    %v746 = vadd.f32 %v732, %v740
    %v747 = vadd.f32 %v735, %v740
    %v748 = vadd.f32 %v738, %v740
    %v749 = vxor.u32 %v741, 2147483648
    %v750 = vxor.u32 %v742, 2147483648
    %v751 = vxor.u32 %v743, 2147483648
    %v752 = vxor.u32 %v744, 2147483648
    %v753 = vxor.u32 %v745, 2147483648
    %v754 = vxor.u32 %v746, 2147483648
    %v755 = vxor.u32 %v747, 2147483648
    %v756 = vxor.u32 %v748, 2147483648
    %v757 = vmul.f32 %v749, 1.442695
    %v758 = vpow.pop %v757
    %v759 = vmul.f32 %v750, 1.442695
    %v760 = vpow.pop %v759
    %v761 = vmul.f32 %v751, 1.442695
    %v762 = vpow.pop %v761
    %v763 = vmul.f32 %v752, 1.442695
    %v764 = vpow.pop %v763
    %v765 = vmul.f32 %v753, 1.442695
    %v766 = vpow.pop %v765
    %v767 = vmul.f32 %v754, 1.442695
    %v768 = vpow.pop %v767
    %v769 = vmul.f32 %v755, 1.442695
    %v770 = vpow.pop %v769
    %v771 = vmul.f32 %v756, 1.442695
    %v772 = vpow.pop %v771
    %v773 = vadd.f32 %v758, 1.0
    %v774 = vadd.f32 %v760, 1.0
    %v775 = vadd.f32 %v762, 1.0
    %v776 = vadd.f32 %v764, 1.0
    %v777 = vadd.f32 %v766, 1.0
    %v778 = vadd.f32 %v768, 1.0
    %v779 = vadd.f32 %v770, 1.0
    %v780 = vadd.f32 %v772, 1.0
    %v781 = vrcp.pop %v773
    %v782 = vmul.f32 1.0, %v781
    %v783 = vrcp.pop %v774
    %v784 = vmul.f32 1.0, %v783
    %v785 = vrcp.pop %v775
    %v786 = vmul.f32 1.0, %v785
    %v787 = vrcp.pop %v776
    %v788 = vmul.f32 1.0, %v787
    %v789 = vrcp.pop %v777
    %v790 = vmul.f32 1.0, %v789
    %v791 = vrcp.pop %v778
    %v792 = vmul.f32 1.0, %v791
    %v793 = vrcp.pop %v779
    %v794 = vmul.f32 1.0, %v793
    %v795 = vrcp.pop %v780
    %v796 = vmul.f32 1.0, %v795
    %v797 = vld [vmem:[#allocation10] sm:$0xff]
    %v798 = vld [vmem:[#allocation10 + $0x8] sm:$0xff]
    %v799 = vld [vmem:[#allocation10 + $0x10] sm:$0xff]
    %v800 = vld [vmem:[#allocation10 + $0x18] sm:$0xff]
    %v801 = vld [vmem:[#allocation10 + $0x20] sm:$0xff]
    %v802 = vld [vmem:[#allocation10 + $0x28] sm:$0xff]
    %v803 = vld [vmem:[#allocation10 + $0x30] sm:$0xff]
    %v804 = vld [vmem:[#allocation10 + $0x38] sm:$0xff]
    %v805 = vld [vmem:[#allocation10 + $0x40] sm:$0xff]
    %v806 = vld [vmem:[#allocation10 + $0x48] sm:$0xff]
    %v807 = vld [vmem:[#allocation10 + $0x50] sm:$0xff]
    %v808 = vld [vmem:[#allocation10 + $0x58] sm:$0xff]
    %v809 = vld [vmem:[#allocation10 + $0x60] sm:$0xff]
    %v810 = vld [vmem:[#allocation10 + $0x68] sm:$0xff]
    %v811 = vld [vmem:[#allocation10 + $0x70] sm:$0xff]
    %v812 = vld [vmem:[#allocation10 + $0x78] sm:$0xff]
    %v813 = vld [vmem:[#allocation10 + $0x80] sm:$0xff]
    %v814 = vld [vmem:[#allocation10 + $0x88] sm:$0xff]
    %v815 = vld [vmem:[#allocation10 + $0x90] sm:$0xff]
    %v816 = vld [vmem:[#allocation10 + $0x98] sm:$0xff]
    %v817 = vld [vmem:[#allocation10 + $0xa0] sm:$0xff]
    %v818 = vld [vmem:[#allocation10 + $0xa8] sm:$0xff]
    %v819 = vld [vmem:[#allocation10 + $0xb0] sm:$0xff]
    %v820 = vld [vmem:[#allocation10 + $0xb8] sm:$0xff]
    %v821 = vld [vmem:[#allocation10 + $0xc0] sm:$0xff]
    %v822 = vld [vmem:[#allocation10 + $0xc8] sm:$0xff]
    %v823 = vld [vmem:[#allocation10 + $0xd0] sm:$0xff]
    %v824 = vld [vmem:[#allocation10 + $0xd8] sm:$0xff]
    %v825 = vld [vmem:[#allocation10 + $0xe0] sm:$0xff]
    %v826 = vld [vmem:[#allocation10 + $0xe8] sm:$0xff]
    %v827 = vld [vmem:[#allocation10 + $0xf0] sm:$0xff]
    %v828 = vld [vmem:[#allocation10 + $0xf8] sm:$0xff]
    %v829 = vld [vmem:[#allocation10 + $0x100] sm:$0xff]
    %v830 = vld [vmem:[#allocation10 + $0x108] sm:$0xff]
    %v831 = vld [vmem:[#allocation10 + $0x110] sm:$0xff]
    %v832 = vld [vmem:[#allocation10 + $0x118] sm:$0xff]
    %v833 = vld [vmem:[#allocation10 + $0x120] sm:$0xff]
    %v834 = vld [vmem:[#allocation10 + $0x128] sm:$0xff]
    %v835 = vld [vmem:[#allocation10 + $0x130] sm:$0xff]
    %v836 = vld [vmem:[#allocation10 + $0x138] sm:$0xff]
    %v837 = vld [vmem:[#allocation10 + $0x140] sm:$0xff]
    %v838 = vld [vmem:[#allocation10 + $0x148] sm:$0xff]
    %v839 = vld [vmem:[#allocation10 + $0x150] sm:$0xff]
    %v840 = vld [vmem:[#allocation10 + $0x158] sm:$0xff]
    %v841 = vld [vmem:[#allocation10 + $0x160] sm:$0xff]
    %v842 = vld [vmem:[#allocation10 + $0x168] sm:$0xff]
    %v843 = vld [vmem:[#allocation10 + $0x170] sm:$0xff]
    %v844 = vld [vmem:[#allocation10 + $0x178] sm:$0xff]
    %v845 = vld [vmem:[#allocation10 + $0x180] sm:$0xff]
    %v846 = vld [vmem:[#allocation10 + $0x188] sm:$0xff]
    %v847 = vld [vmem:[#allocation10 + $0x190] sm:$0xff]
    %v848 = vld [vmem:[#allocation10 + $0x198] sm:$0xff]
    %v849 = vld [vmem:[#allocation10 + $0x1a0] sm:$0xff]
    %v850 = vld [vmem:[#allocation10 + $0x1a8] sm:$0xff]
    %v851 = vld [vmem:[#allocation10 + $0x1b0] sm:$0xff]
    %v852 = vld [vmem:[#allocation10 + $0x1b8] sm:$0xff]
    %v853 = vld [vmem:[#allocation10 + $0x1c0] sm:$0xff]
    %v854 = vld [vmem:[#allocation10 + $0x1c8] sm:$0xff]
    %v855 = vld [vmem:[#allocation10 + $0x1d0] sm:$0xff]
    %v856 = vld [vmem:[#allocation10 + $0x1d8] sm:$0xff]
    %v857 = vld [vmem:[#allocation10 + $0x1e0] sm:$0xff]
    %v858 = vld [vmem:[#allocation10 + $0x1e8] sm:$0xff]
    %v859 = vld [vmem:[#allocation10 + $0x1f0] sm:$0xff]
    %v860 = vld [vmem:[#allocation10 + $0x1f8] sm:$0xff]
    %v861 = vld [vmem:[#allocation10 + $0x200] sm:$0xff]
    %v862 = vld [vmem:[#allocation10 + $0x208] sm:$0xff]
    %v863 = vld [vmem:[#allocation10 + $0x210] sm:$0xff]
    %v864 = vld [vmem:[#allocation10 + $0x218] sm:$0xff]
    %v865 = vld [vmem:[#allocation10 + $0x220] sm:$0xff]
    %v866 = vld [vmem:[#allocation10 + $0x228] sm:$0xff]
    %v867 = vld [vmem:[#allocation10 + $0x230] sm:$0xff]
    %v868 = vld [vmem:[#allocation10 + $0x238] sm:$0xff]
    %v869 = vld [vmem:[#allocation10 + $0x240] sm:$0xff]
    %v870 = vld [vmem:[#allocation10 + $0x248] sm:$0xff]
    %v871 = vld [vmem:[#allocation10 + $0x250] sm:$0xff]
    %v872 = vld [vmem:[#allocation10 + $0x258] sm:$0xff]
    %v873 = vld [vmem:[#allocation10 + $0x260] sm:$0xff]
    %v874 = vld [vmem:[#allocation10 + $0x268] sm:$0xff]
    %v875 = vld [vmem:[#allocation10 + $0x270] sm:$0xff]
    %v876 = vld [vmem:[#allocation10 + $0x278] sm:$0xff]
    %v877 = vld [vmem:[#allocation10 + $0x280] sm:$0xff]
    %v878 = vld [vmem:[#allocation10 + $0x288] sm:$0xff]
    %v879 = vld [vmem:[#allocation10 + $0x290] sm:$0xff]
    %v880 = vld [vmem:[#allocation10 + $0x298] sm:$0xff]
    %v881 = vld [vmem:[#allocation10 + $0x2a0] sm:$0xff]
    %v882 = vld [vmem:[#allocation10 + $0x2a8] sm:$0xff]
    %v883 = vld [vmem:[#allocation10 + $0x2b0] sm:$0xff]
    %v884 = vld [vmem:[#allocation10 + $0x2b8] sm:$0xff]
    %v885 = vld [vmem:[#allocation10 + $0x2c0] sm:$0xff]
    %v886 = vld [vmem:[#allocation10 + $0x2c8] sm:$0xff]
    %v887 = vld [vmem:[#allocation10 + $0x2d0] sm:$0xff]
    %v888 = vld [vmem:[#allocation10 + $0x2d8] sm:$0xff]
    %v889 = vld [vmem:[#allocation10 + $0x2e0] sm:$0xff]
    %v890 = vld [vmem:[#allocation10 + $0x2e8] sm:$0xff]
    %v891 = vld [vmem:[#allocation10 + $0x2f0] sm:$0xff]
    %v892 = vld [vmem:[#allocation10 + $0x2f8] sm:$0xff]
    %v893 = vld [vmem:[#allocation10 + $0x300] sm:$0xff]
    %v894 = vld [vmem:[#allocation10 + $0x308] sm:$0xff]
    %v895 = vld [vmem:[#allocation10 + $0x310] sm:$0xff]
    %v896 = vld [vmem:[#allocation10 + $0x318] sm:$0xff]
    %v897 = vld [vmem:[#allocation10 + $0x320] sm:$0xff]
    %v898 = vld [vmem:[#allocation10 + $0x328] sm:$0xff]
    %v899 = vld [vmem:[#allocation10 + $0x330] sm:$0xff]
    %v900 = vld [vmem:[#allocation10 + $0x338] sm:$0xff]
    %v901 = vld [vmem:[#allocation10 + $0x340] sm:$0xff]
    %v902 = vld [vmem:[#allocation10 + $0x348] sm:$0xff]
    %v903 = vld [vmem:[#allocation10 + $0x350] sm:$0xff]
    %v904 = vld [vmem:[#allocation10 + $0x358] sm:$0xff]
    %v905 = vld [vmem:[#allocation10 + $0x360] sm:$0xff]
    %v906 = vld [vmem:[#allocation10 + $0x368] sm:$0xff]
    %v907 = vld [vmem:[#allocation10 + $0x370] sm:$0xff]
    %v908 = vld [vmem:[#allocation10 + $0x378] sm:$0xff]
    %v909 = vld [vmem:[#allocation10 + $0x380] sm:$0xff]
    %v910 = vld [vmem:[#allocation10 + $0x388] sm:$0xff]
    %v911 = vld [vmem:[#allocation10 + $0x390] sm:$0xff]
    %v912 = vld [vmem:[#allocation10 + $0x398] sm:$0xff]
    %v913 = vld [vmem:[#allocation10 + $0x3a0] sm:$0xff]
    %v914 = vld [vmem:[#allocation10 + $0x3a8] sm:$0xff]
    %v915 = vld [vmem:[#allocation10 + $0x3b0] sm:$0xff]
    %v916 = vld [vmem:[#allocation10 + $0x3b8] sm:$0xff]
    %v917 = vld [vmem:[#allocation10 + $0x3c0] sm:$0xff]
    %v918 = vld [vmem:[#allocation10 + $0x3c8] sm:$0xff]
    %v919 = vld [vmem:[#allocation10 + $0x3d0] sm:$0xff]
    %v920 = vld [vmem:[#allocation10 + $0x3d8] sm:$0xff]
    %v921 = vld [vmem:[#allocation10 + $0x3e0] sm:$0xff]
    %v922 = vld [vmem:[#allocation10 + $0x3e8] sm:$0xff]
    %v923 = vld [vmem:[#allocation10 + $0x3f0] sm:$0xff]
    %v924 = vld [vmem:[#allocation10 + $0x3f8] sm:$0xff]
    %v925 = vld [vmem:[%s6] sm:$0xf]
    %v927 = vlaneseq
    %v928 = vshrl.u32 %v927, 7
    %v929 = vsub.s32 0, %v928
    %v930 = vrot.slane %v925, %v929
    %v931 = vlaneseq
    %v932 = vshrl.u32 %v931, 7
    %v933 = vsub.s32 1, %v932
    %v934 = vrot.slane %v925, %v933
    %v935 = vlaneseq
    %v936 = vshrl.u32 %v935, 7
    %v937 = vsub.s32 2, %v936
    %v938 = vrot.slane %v925, %v937
    %v939 = vlaneseq
    %v940 = vshrl.u32 %v939, 7
    %v941 = vsub.s32 3, %v940
    %v942 = vrot.slane %v925, %v941
    %v1075 = vunpack.c.l.b16 %v797
    %v1076 = vunpack.c.h.b16 %v797
    %v1077 = vunpack.c.l.b16 %v798
    %v1078 = vunpack.c.h.b16 %v798
    %v1079 = vunpack.c.l.b16 %v799
    %v1080 = vunpack.c.h.b16 %v799
    %v1081 = vunpack.c.l.b16 %v800
    %v1082 = vunpack.c.h.b16 %v800
    %v1083 = vunpack.c.l.b16 %v801
    %v1084 = vunpack.c.h.b16 %v801
    %v1085 = vunpack.c.l.b16 %v802
    %v1086 = vunpack.c.h.b16 %v802
    %v1087 = vunpack.c.l.b16 %v803
    %v1088 = vunpack.c.h.b16 %v803
    %v1089 = vunpack.c.l.b16 %v804
    %v1090 = vunpack.c.h.b16 %v804
    %v1091 = vunpack.c.l.b16 %v805
    %v1092 = vunpack.c.h.b16 %v805
    %v1093 = vunpack.c.l.b16 %v806
    %v1094 = vunpack.c.h.b16 %v806
    %v1095 = vunpack.c.l.b16 %v807
    %v1096 = vunpack.c.h.b16 %v807
    %v1097 = vunpack.c.l.b16 %v808
    %v1098 = vunpack.c.h.b16 %v808
    %v1099 = vunpack.c.l.b16 %v809
    %v1100 = vunpack.c.h.b16 %v809
    %v1101 = vunpack.c.l.b16 %v810
    %v1102 = vunpack.c.h.b16 %v810
    %v1103 = vunpack.c.l.b16 %v811
    %v1104 = vunpack.c.h.b16 %v811
    %v1105 = vunpack.c.l.b16 %v812
    %v1106 = vunpack.c.h.b16 %v812
    %v1107 = vunpack.c.l.b16 %v813
    %v1108 = vunpack.c.h.b16 %v813
    %v1109 = vunpack.c.l.b16 %v814
    %v1110 = vunpack.c.h.b16 %v814
    %v1111 = vunpack.c.l.b16 %v815
    %v1112 = vunpack.c.h.b16 %v815
    %v1113 = vunpack.c.l.b16 %v816
    %v1114 = vunpack.c.h.b16 %v816
    %v1115 = vunpack.c.l.b16 %v817
    %v1116 = vunpack.c.h.b16 %v817
    %v1117 = vunpack.c.l.b16 %v818
    %v1118 = vunpack.c.h.b16 %v818
    %v1119 = vunpack.c.l.b16 %v819
    %v1120 = vunpack.c.h.b16 %v819
    %v1121 = vunpack.c.l.b16 %v820
    %v1122 = vunpack.c.h.b16 %v820
    %v1123 = vunpack.c.l.b16 %v821
    %v1124 = vunpack.c.h.b16 %v821
    %v1125 = vunpack.c.l.b16 %v822
    %v1126 = vunpack.c.h.b16 %v822
    %v1127 = vunpack.c.l.b16 %v823
    %v1128 = vunpack.c.h.b16 %v823
    %v1129 = vunpack.c.l.b16 %v824
    %v1130 = vunpack.c.h.b16 %v824
    %v1131 = vunpack.c.l.b16 %v825
    %v1132 = vunpack.c.h.b16 %v825
    %v1133 = vunpack.c.l.b16 %v826
    %v1134 = vunpack.c.h.b16 %v826
    %v1135 = vunpack.c.l.b16 %v827
    %v1136 = vunpack.c.h.b16 %v827
    %v1137 = vunpack.c.l.b16 %v828
    %v1138 = vunpack.c.h.b16 %v828
    %v1139 = vunpack.c.l.b16 %v829
    %v1140 = vunpack.c.h.b16 %v829
    %v1141 = vunpack.c.l.b16 %v830
    %v1142 = vunpack.c.h.b16 %v830
    %v1143 = vunpack.c.l.b16 %v831
    %v1144 = vunpack.c.h.b16 %v831
    %v1145 = vunpack.c.l.b16 %v832
    %v1146 = vunpack.c.h.b16 %v832
    %v1147 = vunpack.c.l.b16 %v833
    %v1148 = vunpack.c.h.b16 %v833
    %v1149 = vunpack.c.l.b16 %v834
    %v1150 = vunpack.c.h.b16 %v834
    %v1151 = vunpack.c.l.b16 %v835
    %v1152 = vunpack.c.h.b16 %v835
    %v1153 = vunpack.c.l.b16 %v836
    %v1154 = vunpack.c.h.b16 %v836
    %v1155 = vunpack.c.l.b16 %v837
    %v1156 = vunpack.c.h.b16 %v837
    %v1157 = vunpack.c.l.b16 %v838
    %v1158 = vunpack.c.h.b16 %v838
    %v1159 = vunpack.c.l.b16 %v839
    %v1160 = vunpack.c.h.b16 %v839
    %v1161 = vunpack.c.l.b16 %v840
    %v1162 = vunpack.c.h.b16 %v840
    %v1163 = vunpack.c.l.b16 %v841
    %v1164 = vunpack.c.h.b16 %v841
    %v1165 = vunpack.c.l.b16 %v842
    %v1166 = vunpack.c.h.b16 %v842
    %v1167 = vunpack.c.l.b16 %v843
    %v1168 = vunpack.c.h.b16 %v843
    %v1169 = vunpack.c.l.b16 %v844
    %v1170 = vunpack.c.h.b16 %v844
    %v1171 = vunpack.c.l.b16 %v845
    %v1172 = vunpack.c.h.b16 %v845
    %v1173 = vunpack.c.l.b16 %v846
    %v1174 = vunpack.c.h.b16 %v846
    %v1175 = vunpack.c.l.b16 %v847
    %v1176 = vunpack.c.h.b16 %v847
    %v1177 = vunpack.c.l.b16 %v848
    %v1178 = vunpack.c.h.b16 %v848
    %v1179 = vunpack.c.l.b16 %v849
    %v1180 = vunpack.c.h.b16 %v849
    %v1181 = vunpack.c.l.b16 %v850
    %v1182 = vunpack.c.h.b16 %v850
    %v1183 = vunpack.c.l.b16 %v851
    %v1184 = vunpack.c.h.b16 %v851
    %v1185 = vunpack.c.l.b16 %v852
    %v1186 = vunpack.c.h.b16 %v852
    %v1187 = vunpack.c.l.b16 %v853
    %v1188 = vunpack.c.h.b16 %v853
    %v1189 = vunpack.c.l.b16 %v854
    %v1190 = vunpack.c.h.b16 %v854
    %v1191 = vunpack.c.l.b16 %v855
    %v1192 = vunpack.c.h.b16 %v855
    %v1193 = vunpack.c.l.b16 %v856
    %v1194 = vunpack.c.h.b16 %v856
    %v1195 = vunpack.c.l.b16 %v857
    %v1196 = vunpack.c.h.b16 %v857
    %v1197 = vunpack.c.l.b16 %v858
    %v1198 = vunpack.c.h.b16 %v858
    %v1199 = vunpack.c.l.b16 %v859
    %v1200 = vunpack.c.h.b16 %v859
    %v1201 = vunpack.c.l.b16 %v860
    %v1202 = vunpack.c.h.b16 %v860
    %v1203 = vunpack.c.l.b16 %v861
    %v1204 = vunpack.c.h.b16 %v861
    %v1205 = vunpack.c.l.b16 %v862
    %v1206 = vunpack.c.h.b16 %v862
    %v1207 = vunpack.c.l.b16 %v863
    %v1208 = vunpack.c.h.b16 %v863
    %v1209 = vunpack.c.l.b16 %v864
    %v1210 = vunpack.c.h.b16 %v864
    %v1211 = vunpack.c.l.b16 %v865
    %v1212 = vunpack.c.h.b16 %v865
    %v1213 = vunpack.c.l.b16 %v866
    %v1214 = vunpack.c.h.b16 %v866
    %v1215 = vunpack.c.l.b16 %v867
    %v1216 = vunpack.c.h.b16 %v867
    %v1217 = vunpack.c.l.b16 %v868
    %v1218 = vunpack.c.h.b16 %v868
    %v1219 = vunpack.c.l.b16 %v869
    %v1220 = vunpack.c.h.b16 %v869
    %v1221 = vunpack.c.l.b16 %v870
    %v1222 = vunpack.c.h.b16 %v870
    %v1223 = vunpack.c.l.b16 %v871
    %v1224 = vunpack.c.h.b16 %v871
    %v1225 = vunpack.c.l.b16 %v872
    %v1226 = vunpack.c.h.b16 %v872
    %v1227 = vunpack.c.l.b16 %v873
    %v1228 = vunpack.c.h.b16 %v873
    %v1229 = vunpack.c.l.b16 %v874
    %v1230 = vunpack.c.h.b16 %v874
    %v1231 = vunpack.c.l.b16 %v875
    %v1232 = vunpack.c.h.b16 %v875
    %v1233 = vunpack.c.l.b16 %v876
    %v1234 = vunpack.c.h.b16 %v876
    %v1235 = vunpack.c.l.b16 %v877
    %v1236 = vunpack.c.h.b16 %v877
    %v1237 = vunpack.c.l.b16 %v878
    %v1238 = vunpack.c.h.b16 %v878
    %v1239 = vunpack.c.l.b16 %v879
    %v1240 = vunpack.c.h.b16 %v879
    %v1241 = vunpack.c.l.b16 %v880
    %v1242 = vunpack.c.h.b16 %v880
    %v1243 = vunpack.c.l.b16 %v881
    %v1244 = vunpack.c.h.b16 %v881
    %v1245 = vunpack.c.l.b16 %v882
    %v1246 = vunpack.c.h.b16 %v882
    %v1247 = vunpack.c.l.b16 %v883
    %v1248 = vunpack.c.h.b16 %v883
    %v1249 = vunpack.c.l.b16 %v884
    %v1250 = vunpack.c.h.b16 %v884
    %v1251 = vunpack.c.l.b16 %v885
    %v1252 = vunpack.c.h.b16 %v885
    %v1253 = vunpack.c.l.b16 %v886
    %v1254 = vunpack.c.h.b16 %v886
    %v1255 = vunpack.c.l.b16 %v887
    %v1256 = vunpack.c.h.b16 %v887
    %v1257 = vunpack.c.l.b16 %v888
    %v1258 = vunpack.c.h.b16 %v888
    %v1259 = vunpack.c.l.b16 %v889
    %v1260 = vunpack.c.h.b16 %v889
    %v1261 = vunpack.c.l.b16 %v890
    %v1262 = vunpack.c.h.b16 %v890
    %v1263 = vunpack.c.l.b16 %v891
    %v1264 = vunpack.c.h.b16 %v891
    %v1265 = vunpack.c.l.b16 %v892
    %v1266 = vunpack.c.h.b16 %v892
    %v1267 = vunpack.c.l.b16 %v893
    %v1268 = vunpack.c.h.b16 %v893
    %v1269 = vunpack.c.l.b16 %v894
    %v1270 = vunpack.c.h.b16 %v894
    %v1271 = vunpack.c.l.b16 %v895
    %v1272 = vunpack.c.h.b16 %v895
    %v1273 = vunpack.c.l.b16 %v896
    %v1274 = vunpack.c.h.b16 %v896
    %v1275 = vunpack.c.l.b16 %v897
    %v1276 = vunpack.c.h.b16 %v897
    %v1277 = vunpack.c.l.b16 %v898
    %v1278 = vunpack.c.h.b16 %v898
    %v1279 = vunpack.c.l.b16 %v899
    %v1280 = vunpack.c.h.b16 %v899
    %v1281 = vunpack.c.l.b16 %v900
    %v1282 = vunpack.c.h.b16 %v900
    %v1283 = vunpack.c.l.b16 %v901
    %v1284 = vunpack.c.h.b16 %v901
    %v1285 = vunpack.c.l.b16 %v902
    %v1286 = vunpack.c.h.b16 %v902
    %v1287 = vunpack.c.l.b16 %v903
    %v1288 = vunpack.c.h.b16 %v903
    %v1289 = vunpack.c.l.b16 %v904
    %v1290 = vunpack.c.h.b16 %v904
    %v1291 = vunpack.c.l.b16 %v905
    %v1292 = vunpack.c.h.b16 %v905
    %v1293 = vunpack.c.l.b16 %v906
    %v1294 = vunpack.c.h.b16 %v906
    %v1295 = vunpack.c.l.b16 %v907
    %v1296 = vunpack.c.h.b16 %v907
    %v1297 = vunpack.c.l.b16 %v908
    %v1298 = vunpack.c.h.b16 %v908
    %v1299 = vunpack.c.l.b16 %v909
    %v1300 = vunpack.c.h.b16 %v909
    %v1301 = vunpack.c.l.b16 %v910
    %v1302 = vunpack.c.h.b16 %v910
    %v1303 = vunpack.c.l.b16 %v911
    %v1304 = vunpack.c.h.b16 %v911
    %v1305 = vunpack.c.l.b16 %v912
    %v1306 = vunpack.c.h.b16 %v912
    %v1307 = vunpack.c.l.b16 %v913
    %v1308 = vunpack.c.h.b16 %v913
    %v1309 = vunpack.c.l.b16 %v914
    %v1310 = vunpack.c.h.b16 %v914
    %v1311 = vunpack.c.l.b16 %v915
    %v1312 = vunpack.c.h.b16 %v915
    %v1313 = vunpack.c.l.b16 %v916
    %v1314 = vunpack.c.h.b16 %v916
    %v1315 = vunpack.c.l.b16 %v917
    %v1316 = vunpack.c.h.b16 %v917
    %v1317 = vunpack.c.l.b16 %v918
    %v1318 = vunpack.c.h.b16 %v918
    %v1319 = vunpack.c.l.b16 %v919
    %v1320 = vunpack.c.h.b16 %v919
    %v1321 = vunpack.c.l.b16 %v920
    %v1322 = vunpack.c.h.b16 %v920
    %v1323 = vunpack.c.l.b16 %v921
    %v1324 = vunpack.c.h.b16 %v921
    %v1325 = vunpack.c.l.b16 %v922
    %v1326 = vunpack.c.h.b16 %v922
    %v1327 = vunpack.c.l.b16 %v923
    %v1328 = vunpack.c.h.b16 %v923
    %v1329 = vunpack.c.l.b16 %v924
    %v1330 = vunpack.c.h.b16 %v924
    %v1331 = vpack.c.b16 %v1079, %v1075
    %v1332 = vpack.c.b16 %v1080, %v1076
    %v1333 = vpack.c.b16 %v1081, %v1077
    %v1334 = vpack.c.b16 %v1082, %v1078
    %v1335 = vpack.c.b16 %v1087, %v1083
    %v1336 = vpack.c.b16 %v1088, %v1084
    %v1337 = vpack.c.b16 %v1089, %v1085
    %v1338 = vpack.c.b16 %v1090, %v1086
    %v1339 = vpack.c.b16 %v1095, %v1091
    %v1340 = vpack.c.b16 %v1096, %v1092
    %v1341 = vpack.c.b16 %v1097, %v1093
    %v1342 = vpack.c.b16 %v1098, %v1094
    %v1343 = vpack.c.b16 %v1103, %v1099
    %v1344 = vpack.c.b16 %v1104, %v1100
    %v1345 = vpack.c.b16 %v1105, %v1101
    %v1346 = vpack.c.b16 %v1106, %v1102
    %v1347 = vpack.c.b16 %v1111, %v1107
    %v1348 = vpack.c.b16 %v1112, %v1108
    %v1349 = vpack.c.b16 %v1113, %v1109
    %v1350 = vpack.c.b16 %v1114, %v1110
    %v1351 = vpack.c.b16 %v1119, %v1115
    %v1352 = vpack.c.b16 %v1120, %v1116
    %v1353 = vpack.c.b16 %v1121, %v1117
    %v1354 = vpack.c.b16 %v1122, %v1118
    %v1355 = vpack.c.b16 %v1127, %v1123
    %v1356 = vpack.c.b16 %v1128, %v1124
    %v1357 = vpack.c.b16 %v1129, %v1125
    %v1358 = vpack.c.b16 %v1130, %v1126
    %v1359 = vpack.c.b16 %v1135, %v1131
    %v1360 = vpack.c.b16 %v1136, %v1132
    %v1361 = vpack.c.b16 %v1137, %v1133
    %v1362 = vpack.c.b16 %v1138, %v1134
    %v1363 = vpack.c.b16 %v1143, %v1139
    %v1364 = vpack.c.b16 %v1144, %v1140
    %v1365 = vpack.c.b16 %v1145, %v1141
    %v1366 = vpack.c.b16 %v1146, %v1142
    %v1367 = vpack.c.b16 %v1151, %v1147
    %v1368 = vpack.c.b16 %v1152, %v1148
    %v1369 = vpack.c.b16 %v1153, %v1149
    %v1370 = vpack.c.b16 %v1154, %v1150
    %v1371 = vpack.c.b16 %v1159, %v1155
    %v1372 = vpack.c.b16 %v1160, %v1156
    %v1373 = vpack.c.b16 %v1161, %v1157
    %v1374 = vpack.c.b16 %v1162, %v1158
    %v1375 = vpack.c.b16 %v1167, %v1163
    %v1376 = vpack.c.b16 %v1168, %v1164
    %v1377 = vpack.c.b16 %v1169, %v1165
    %v1378 = vpack.c.b16 %v1170, %v1166
    %v1379 = vpack.c.b16 %v1175, %v1171
    %v1380 = vpack.c.b16 %v1176, %v1172
    %v1381 = vpack.c.b16 %v1177, %v1173
    %v1382 = vpack.c.b16 %v1178, %v1174
    %v1383 = vpack.c.b16 %v1183, %v1179
    %v1384 = vpack.c.b16 %v1184, %v1180
    %v1385 = vpack.c.b16 %v1185, %v1181
    %v1386 = vpack.c.b16 %v1186, %v1182
    %v1387 = vpack.c.b16 %v1191, %v1187
    %v1388 = vpack.c.b16 %v1192, %v1188
    %v1389 = vpack.c.b16 %v1193, %v1189
    %v1390 = vpack.c.b16 %v1194, %v1190
    %v1391 = vpack.c.b16 %v1199, %v1195
    %v1392 = vpack.c.b16 %v1200, %v1196
    %v1393 = vpack.c.b16 %v1201, %v1197
    %v1394 = vpack.c.b16 %v1202, %v1198
    %v1395 = vpack.c.b16 %v1207, %v1203
    %v1396 = vpack.c.b16 %v1208, %v1204
    %v1397 = vpack.c.b16 %v1209, %v1205
    %v1398 = vpack.c.b16 %v1210, %v1206
    %v1399 = vpack.c.b16 %v1215, %v1211
    %v1400 = vpack.c.b16 %v1216, %v1212
    %v1401 = vpack.c.b16 %v1217, %v1213
    %v1402 = vpack.c.b16 %v1218, %v1214
    %v1403 = vpack.c.b16 %v1223, %v1219
    %v1404 = vpack.c.b16 %v1224, %v1220
    %v1405 = vpack.c.b16 %v1225, %v1221
    %v1406 = vpack.c.b16 %v1226, %v1222
    %v1407 = vpack.c.b16 %v1231, %v1227
    %v1408 = vpack.c.b16 %v1232, %v1228
    %v1409 = vpack.c.b16 %v1233, %v1229
    %v1410 = vpack.c.b16 %v1234, %v1230
    %v1411 = vpack.c.b16 %v1239, %v1235
    %v1412 = vpack.c.b16 %v1240, %v1236
    %v1413 = vpack.c.b16 %v1241, %v1237
    %v1414 = vpack.c.b16 %v1242, %v1238
    %v1415 = vpack.c.b16 %v1247, %v1243
    %v1416 = vpack.c.b16 %v1248, %v1244
    %v1417 = vpack.c.b16 %v1249, %v1245
    %v1418 = vpack.c.b16 %v1250, %v1246
    %v1419 = vpack.c.b16 %v1255, %v1251
    %v1420 = vpack.c.b16 %v1256, %v1252
    %v1421 = vpack.c.b16 %v1257, %v1253
    %v1422 = vpack.c.b16 %v1258, %v1254
    %v1423 = vpack.c.b16 %v1263, %v1259
    %v1424 = vpack.c.b16 %v1264, %v1260
    %v1425 = vpack.c.b16 %v1265, %v1261
    %v1426 = vpack.c.b16 %v1266, %v1262
    %v1427 = vpack.c.b16 %v1271, %v1267
    %v1428 = vpack.c.b16 %v1272, %v1268
    %v1429 = vpack.c.b16 %v1273, %v1269
    %v1430 = vpack.c.b16 %v1274, %v1270
    %v1431 = vpack.c.b16 %v1279, %v1275
    %v1432 = vpack.c.b16 %v1280, %v1276
    %v1433 = vpack.c.b16 %v1281, %v1277
    %v1434 = vpack.c.b16 %v1282, %v1278
    %v1435 = vpack.c.b16 %v1287, %v1283
    %v1436 = vpack.c.b16 %v1288, %v1284
    %v1437 = vpack.c.b16 %v1289, %v1285
    %v1438 = vpack.c.b16 %v1290, %v1286
    %v1439 = vpack.c.b16 %v1295, %v1291
    %v1440 = vpack.c.b16 %v1296, %v1292
    %v1441 = vpack.c.b16 %v1297, %v1293
    %v1442 = vpack.c.b16 %v1298, %v1294
    %v1443 = vpack.c.b16 %v1303, %v1299
    %v1444 = vpack.c.b16 %v1304, %v1300
    %v1445 = vpack.c.b16 %v1305, %v1301
    %v1446 = vpack.c.b16 %v1306, %v1302
    %v1447 = vpack.c.b16 %v1311, %v1307
    %v1448 = vpack.c.b16 %v1312, %v1308
    %v1449 = vpack.c.b16 %v1313, %v1309
    %v1450 = vpack.c.b16 %v1314, %v1310
    %v1451 = vpack.c.b16 %v1319, %v1315
    %v1452 = vpack.c.b16 %v1320, %v1316
    %v1453 = vpack.c.b16 %v1321, %v1317
    %v1454 = vpack.c.b16 %v1322, %v1318
    %v1455 = vpack.c.b16 %v1327, %v1323
    %v1456 = vpack.c.b16 %v1328, %v1324
    %v1457 = vpack.c.b16 %v1329, %v1325
    %v1458 = vpack.c.b16 %v1330, %v1326
    %1587 = vmatprep.subr.bf16.mxu0 %v1360
    %1588 = vmatpush1.bf16.msra.mxu0 %v1359
    %1589 = vmatprep.subr.bf16.mxu0 %v1356
    %1590 = vmatpush1.bf16.msra.mxu0 %v1355
    %1591 = vmatprep.subr.bf16.mxu0 %v1352
    %1592 = vmatpush1.bf16.msra.mxu0 %v1351
    %1593 = vmatprep.subr.bf16.mxu0 %v1348
    %1594 = vmatpush1.bf16.msra.mxu0 %v1347
    %1595 = vmatprep.subr.bf16.mxu0 %v1344
    %1596 = vmatpush1.bf16.msra.mxu0 %v1343
    %1597 = vmatprep.subr.bf16.mxu0 %v1340
    %1598 = vmatpush1.bf16.msra.mxu0 %v1339
    %1599 = vmatprep.subr.bf16.mxu0 %v1336
    %1600 = vmatpush1.bf16.msra.mxu0 %v1335
    %1601 = vmatprep.subr.bf16.mxu0 %v1332
    %1602 = vmatpush1.bf16.msra.mxu0 %v1331
    %1603 = vmatprep.subr.bf16.mxu0 %v1392
    %1604 = vmatpush2.bf16.msra.mxu0 %v1391
    %1605 = vmatprep.subr.bf16.mxu0 %v1388
    %1606 = vmatpush2.bf16.msra.mxu0 %v1387
    %1607 = vmatprep.subr.bf16.mxu0 %v1384
    %1608 = vmatpush2.bf16.msra.mxu0 %v1383
    %1609 = vmatprep.subr.bf16.mxu0 %v1380
    %1610 = vmatpush2.bf16.msra.mxu0 %v1379
    %1611 = vmatprep.subr.bf16.mxu0 %v1376
    %1612 = vmatpush2.bf16.msra.mxu0 %v1375
    %1613 = vmatprep.subr.bf16.mxu0 %v1372
    %1614 = vmatpush2.bf16.msra.mxu0 %v1371
    %1615 = vmatprep.subr.bf16.mxu0 %v1368
    %1616 = vmatpush2.bf16.msra.mxu0 %v1367
    %1617 = vmatprep.subr.bf16.mxu0 %v1364
    %1618 = vmatpush2.bf16.msra.mxu0 %v1363
    %1619 = vmatprep.mubr.bf16.mxu0 %v114
    %1620 = vmatmul.mubr.bf16.gmra.mxu0 %v113
    %v1621 = vpop.f32.mrf.mxu0
    %v1622 = vadd.f32 %v930, %v1621
    %v1623 = vpop.f32.mrf.mxu0
    %v1624 = vadd.f32 %v934, %v1623
    %v1625 = vpop.f32.mrf.mxu0
    %v1626 = vadd.f32 %v930, %v1625
    %v1627 = vpop.f32.mrf.mxu0
    %v1628 = vadd.f32 %v934, %v1627
    %1629 = vmatprep.mubr.bf16.mxu0 %v118
    %1630 = vmatmul.mubr.bf16.gmra.mxu0 %v117
    %v1631 = vpop.f32.mrf.mxu0
    %v1632 = vadd.f32 %v930, %v1631
    %v1633 = vpop.f32.mrf.mxu0
    %v1634 = vadd.f32 %v934, %v1633
    %v1635 = vpop.f32.mrf.mxu0
    %v1636 = vadd.f32 %v930, %v1635
    %v1637 = vpop.f32.mrf.mxu0
    %v1638 = vadd.f32 %v934, %v1637
    %1639 = vmatprep.mubr.bf16.mxu0 %v122
    %1640 = vmatmul.mubr.bf16.gmra.mxu0 %v121
    %v1641 = vpop.f32.mrf.mxu0
    %v1642 = vadd.f32 %v930, %v1641
    %v1643 = vpop.f32.mrf.mxu0
    %v1644 = vadd.f32 %v934, %v1643
    %v1645 = vpop.f32.mrf.mxu0
    %v1646 = vadd.f32 %v930, %v1645
    %v1647 = vpop.f32.mrf.mxu0
    %v1648 = vadd.f32 %v934, %v1647
    %1649 = vmatprep.mubr.bf16.mxu0 %v126
    %1650 = vmatmul.mubr.bf16.gmra.mxu0 %v125
    %v1651 = vpop.f32.mrf.mxu0
    %v1652 = vadd.f32 %v930, %v1651
    %v1653 = vpop.f32.mrf.mxu0
    %v1654 = vadd.f32 %v934, %v1653
    %v1655 = vpop.f32.mrf.mxu0
    %v1656 = vadd.f32 %v930, %v1655
    %v1657 = vpop.f32.mrf.mxu0
    %v1658 = vadd.f32 %v934, %v1657
    %1659 = vdwg.mxu0
    %1660 = vmatprep.subr.bf16.mxu0 %v1424
    %1661 = vmatpush1.bf16.msra.mxu0 %v1423
    %1662 = vmatprep.subr.bf16.mxu0 %v1420
    %1663 = vmatpush1.bf16.msra.mxu0 %v1419
    %1664 = vmatprep.subr.bf16.mxu0 %v1416
    %1665 = vmatpush1.bf16.msra.mxu0 %v1415
    %1666 = vmatprep.subr.bf16.mxu0 %v1412
    %1667 = vmatpush1.bf16.msra.mxu0 %v1411
    %1668 = vmatprep.subr.bf16.mxu0 %v1408
    %1669 = vmatpush1.bf16.msra.mxu0 %v1407
    %1670 = vmatprep.subr.bf16.mxu0 %v1404
    %1671 = vmatpush1.bf16.msra.mxu0 %v1403
    %1672 = vmatprep.subr.bf16.mxu0 %v1400
    %1673 = vmatpush1.bf16.msra.mxu0 %v1399
    %1674 = vmatprep.subr.bf16.mxu0 %v1396
    %1675 = vmatpush1.bf16.msra.mxu0 %v1395
    %1676 = vmatprep.subr.bf16.mxu0 %v1456
    %1677 = vmatpush2.bf16.msra.mxu0 %v1455
    %1678 = vmatprep.subr.bf16.mxu0 %v1452
    %1679 = vmatpush2.bf16.msra.mxu0 %v1451
    %1680 = vmatprep.subr.bf16.mxu0 %v1448
    %1681 = vmatpush2.bf16.msra.mxu0 %v1447
    %1682 = vmatprep.subr.bf16.mxu0 %v1444
    %1683 = vmatpush2.bf16.msra.mxu0 %v1443
    %1684 = vmatprep.subr.bf16.mxu0 %v1440
    %1685 = vmatpush2.bf16.msra.mxu0 %v1439
    %1686 = vmatprep.subr.bf16.mxu0 %v1436
    %1687 = vmatpush2.bf16.msra.mxu0 %v1435
    %1688 = vmatprep.subr.bf16.mxu0 %v1432
    %1689 = vmatpush2.bf16.msra.mxu0 %v1431
    %1690 = vmatprep.subr.bf16.mxu0 %v1428
    %1691 = vmatpush2.bf16.msra.mxu0 %v1427
    %1692 = vmatprep.mubr.bf16.mxu0 %v116
    %1693 = vmatmul.mubr.bf16.gmra.mxu0 %v115
    %v1694 = vpop.f32.mrf.mxu0
    %v1695 = vadd.f32 %v1622, %v1694
    %v1696 = vpop.f32.mrf.mxu0
    %v1697 = vadd.f32 %v1624, %v1696
    %v1698 = vpop.f32.mrf.mxu0
    %v1699 = vadd.f32 %v1626, %v1698
    %v1700 = vpop.f32.mrf.mxu0
    %v1701 = vadd.f32 %v1628, %v1700
    %1702 = vmatprep.mubr.bf16.mxu0 %v120
    %1703 = vmatmul.mubr.bf16.gmra.mxu0 %v119
    %v1704 = vpop.f32.mrf.mxu0
    %v1705 = vadd.f32 %v1632, %v1704
    %v1706 = vpop.f32.mrf.mxu0
    %v1707 = vadd.f32 %v1634, %v1706
    %v1708 = vpop.f32.mrf.mxu0
    %v1709 = vadd.f32 %v1636, %v1708
    %v1710 = vpop.f32.mrf.mxu0
    %v1711 = vadd.f32 %v1638, %v1710
    %1712 = vmatprep.mubr.bf16.mxu0 %v124
    %1713 = vmatmul.mubr.bf16.gmra.mxu0 %v123
    %v1714 = vpop.f32.mrf.mxu0
    %v1715 = vadd.f32 %v1642, %v1714
    %v1716 = vpop.f32.mrf.mxu0
    %v1717 = vadd.f32 %v1644, %v1716
    %v1718 = vpop.f32.mrf.mxu0
    %v1719 = vadd.f32 %v1646, %v1718
    %v1720 = vpop.f32.mrf.mxu0
    %v1721 = vadd.f32 %v1648, %v1720
    %1722 = vmatprep.mubr.bf16.mxu0 %v128
    %1723 = vmatmul.mubr.bf16.gmra.mxu0 %v127
    %v1724 = vpop.f32.mrf.mxu0
    %v1725 = vadd.f32 %v1652, %v1724
    %v1726 = vpop.f32.mrf.mxu0
    %v1727 = vadd.f32 %v1654, %v1726
    %v1728 = vpop.f32.mrf.mxu0
    %v1729 = vadd.f32 %v1656, %v1728
    %v1730 = vpop.f32.mrf.mxu0
    %v1731 = vadd.f32 %v1658, %v1730
    %1732 = vdwg.mxu0
    %1733 = vmatprep.subr.bf16.mxu0 %v1362
    %1734 = vmatpush1.bf16.msra.mxu0 %v1361
    %1735 = vmatprep.subr.bf16.mxu0 %v1358
    %1736 = vmatpush1.bf16.msra.mxu0 %v1357
    %1737 = vmatprep.subr.bf16.mxu0 %v1354
    %1738 = vmatpush1.bf16.msra.mxu0 %v1353
    %1739 = vmatprep.subr.bf16.mxu0 %v1350
    %1740 = vmatpush1.bf16.msra.mxu0 %v1349
    %1741 = vmatprep.subr.bf16.mxu0 %v1346
    %1742 = vmatpush1.bf16.msra.mxu0 %v1345
    %1743 = vmatprep.subr.bf16.mxu0 %v1342
    %1744 = vmatpush1.bf16.msra.mxu0 %v1341
    %1745 = vmatprep.subr.bf16.mxu0 %v1338
    %1746 = vmatpush1.bf16.msra.mxu0 %v1337
    %1747 = vmatprep.subr.bf16.mxu0 %v1334
    %1748 = vmatpush1.bf16.msra.mxu0 %v1333
    %1749 = vmatprep.subr.bf16.mxu0 %v1394
    %1750 = vmatpush2.bf16.msra.mxu0 %v1393
    %1751 = vmatprep.subr.bf16.mxu0 %v1390
    %1752 = vmatpush2.bf16.msra.mxu0 %v1389
    %1753 = vmatprep.subr.bf16.mxu0 %v1386
    %1754 = vmatpush2.bf16.msra.mxu0 %v1385
    %1755 = vmatprep.subr.bf16.mxu0 %v1382
    %1756 = vmatpush2.bf16.msra.mxu0 %v1381
    %1757 = vmatprep.subr.bf16.mxu0 %v1378
    %1758 = vmatpush2.bf16.msra.mxu0 %v1377
    %1759 = vmatprep.subr.bf16.mxu0 %v1374
    %1760 = vmatpush2.bf16.msra.mxu0 %v1373
    %1761 = vmatprep.subr.bf16.mxu0 %v1370
    %1762 = vmatpush2.bf16.msra.mxu0 %v1369
    %1763 = vmatprep.subr.bf16.mxu0 %v1366
    %1764 = vmatpush2.bf16.msra.mxu0 %v1365
    %1765 = vmatprep.mubr.bf16.mxu0 %v114
    %1766 = vmatmul.mubr.bf16.gmra.mxu0 %v113
    %v1767 = vpop.f32.mrf.mxu0
    %v1768 = vadd.f32 %v938, %v1767
    %v1769 = vpop.f32.mrf.mxu0
    %v1770 = vadd.f32 %v942, %v1769
    %v1771 = vpop.f32.mrf.mxu0
    %v1772 = vadd.f32 %v938, %v1771
    %v1773 = vpop.f32.mrf.mxu0
    %v1774 = vadd.f32 %v942, %v1773
    %1775 = vmatprep.mubr.bf16.mxu0 %v118
    %1776 = vmatmul.mubr.bf16.gmra.mxu0 %v117
    %v1777 = vpop.f32.mrf.mxu0
    %v1778 = vadd.f32 %v938, %v1777
    %v1779 = vpop.f32.mrf.mxu0
    %v1780 = vadd.f32 %v942, %v1779
    %v1781 = vpop.f32.mrf.mxu0
    %v1782 = vadd.f32 %v938, %v1781
    %v1783 = vpop.f32.mrf.mxu0
    %v1784 = vadd.f32 %v942, %v1783
    %1785 = vmatprep.mubr.bf16.mxu0 %v122
    %1786 = vmatmul.mubr.bf16.gmra.mxu0 %v121
    %v1787 = vpop.f32.mrf.mxu0
    %v1788 = vadd.f32 %v938, %v1787
    %v1789 = vpop.f32.mrf.mxu0
    %v1790 = vadd.f32 %v942, %v1789
    %v1791 = vpop.f32.mrf.mxu0
    %v1792 = vadd.f32 %v938, %v1791
    %v1793 = vpop.f32.mrf.mxu0
    %v1794 = vadd.f32 %v942, %v1793
    %1795 = vmatprep.mubr.bf16.mxu0 %v126
    %1796 = vmatmul.mubr.bf16.gmra.mxu0 %v125
    %v1797 = vpop.f32.mrf.mxu0
    %v1798 = vadd.f32 %v938, %v1797
    %v1799 = vpop.f32.mrf.mxu0
    %v1800 = vadd.f32 %v942, %v1799
    %v1801 = vpop.f32.mrf.mxu0
    %v1802 = vadd.f32 %v938, %v1801
    %v1803 = vpop.f32.mrf.mxu0
    %v1804 = vadd.f32 %v942, %v1803
    %1805 = vdwg.mxu0
    %1806 = vmatprep.subr.bf16.mxu0 %v1426
    %1807 = vmatpush1.bf16.msra.mxu0 %v1425
    %1808 = vmatprep.subr.bf16.mxu0 %v1422
    %1809 = vmatpush1.bf16.msra.mxu0 %v1421
    %1810 = vmatprep.subr.bf16.mxu0 %v1418
    %1811 = vmatpush1.bf16.msra.mxu0 %v1417
    %1812 = vmatprep.subr.bf16.mxu0 %v1414
    %1813 = vmatpush1.bf16.msra.mxu0 %v1413
    %1814 = vmatprep.subr.bf16.mxu0 %v1410
    %1815 = vmatpush1.bf16.msra.mxu0 %v1409
    %1816 = vmatprep.subr.bf16.mxu0 %v1406
    %1817 = vmatpush1.bf16.msra.mxu0 %v1405
    %1818 = vmatprep.subr.bf16.mxu0 %v1402
    %1819 = vmatpush1.bf16.msra.mxu0 %v1401
    %1820 = vmatprep.subr.bf16.mxu0 %v1398
    %1821 = vmatpush1.bf16.msra.mxu0 %v1397
    %1822 = vmatprep.subr.bf16.mxu0 %v1458
    %1823 = vmatpush2.bf16.msra.mxu0 %v1457
    %1824 = vmatprep.subr.bf16.mxu0 %v1454
    %1825 = vmatpush2.bf16.msra.mxu0 %v1453
    %1826 = vmatprep.subr.bf16.mxu0 %v1450
    %1827 = vmatpush2.bf16.msra.mxu0 %v1449
    %1828 = vmatprep.subr.bf16.mxu0 %v1446
    %1829 = vmatpush2.bf16.msra.mxu0 %v1445
    %1830 = vmatprep.subr.bf16.mxu0 %v1442
    %1831 = vmatpush2.bf16.msra.mxu0 %v1441
    %1832 = vmatprep.subr.bf16.mxu0 %v1438
    %1833 = vmatpush2.bf16.msra.mxu0 %v1437
    %1834 = vmatprep.subr.bf16.mxu0 %v1434
    %1835 = vmatpush2.bf16.msra.mxu0 %v1433
    %1836 = vmatprep.subr.bf16.mxu0 %v1430
    %1837 = vmatpush2.bf16.msra.mxu0 %v1429
    %1838 = vmatprep.mubr.bf16.mxu0 %v116
    %1839 = vmatmul.mubr.bf16.gmra.mxu0 %v115
    %v1840 = vpop.f32.mrf.mxu0
    %v1841 = vadd.f32 %v1768, %v1840
    %v1842 = vpop.f32.mrf.mxu0
    %v1843 = vadd.f32 %v1770, %v1842
    %v1844 = vpop.f32.mrf.mxu0
    %v1845 = vadd.f32 %v1772, %v1844
    %v1846 = vpop.f32.mrf.mxu0
    %v1847 = vadd.f32 %v1774, %v1846
    %1848 = vmatprep.mubr.bf16.mxu0 %v120
    %1849 = vmatmul.mubr.bf16.gmra.mxu0 %v119
    %v1850 = vpop.f32.mrf.mxu0
    %v1851 = vadd.f32 %v1778, %v1850
    %v1852 = vpop.f32.mrf.mxu0
    %v1853 = vadd.f32 %v1780, %v1852
    %v1854 = vpop.f32.mrf.mxu0
    %v1855 = vadd.f32 %v1782, %v1854
    %v1856 = vpop.f32.mrf.mxu0
    %v1857 = vadd.f32 %v1784, %v1856
    %1858 = vmatprep.mubr.bf16.mxu0 %v124
    %1859 = vmatmul.mubr.bf16.gmra.mxu0 %v123
    %v1860 = vpop.f32.mrf.mxu0
    %v1861 = vadd.f32 %v1788, %v1860
    %v1862 = vpop.f32.mrf.mxu0
    %v1863 = vadd.f32 %v1790, %v1862
    %v1864 = vpop.f32.mrf.mxu0
    %v1865 = vadd.f32 %v1792, %v1864
    %v1866 = vpop.f32.mrf.mxu0
    %v1867 = vadd.f32 %v1794, %v1866
    %1868 = vmatprep.mubr.bf16.mxu0 %v128
    %1869 = vmatmul.mubr.bf16.gmra.mxu0 %v127
    %v1870 = vpop.f32.mrf.mxu0
    %v1871 = vadd.f32 %v1798, %v1870
    %v1872 = vpop.f32.mrf.mxu0
    %v1873 = vadd.f32 %v1800, %v1872
    %v1874 = vpop.f32.mrf.mxu0
    %v1875 = vadd.f32 %v1802, %v1874
    %v1876 = vpop.f32.mrf.mxu0
    %v1877 = vadd.f32 %v1804, %v1876
    %1878 = vdwg.mxu0
    %v1879 = vmax.f32 %v1695, 0.0
    %v1880 = vmax.f32 %v1697, 0.0
    %v1881 = vmax.f32 %v1841, 0.0
    %v1882 = vmax.f32 %v1843, 0.0
    %v1883 = vmax.f32 %v1699, 0.0
    %v1884 = vmax.f32 %v1701, 0.0
    %v1885 = vmax.f32 %v1845, 0.0
    %v1886 = vmax.f32 %v1847, 0.0
    %v1887 = vmax.f32 %v1705, 0.0
    %v1888 = vmax.f32 %v1707, 0.0
    %v1889 = vmax.f32 %v1851, 0.0
    %v1890 = vmax.f32 %v1853, 0.0
    %v1891 = vmax.f32 %v1709, 0.0
    %v1892 = vmax.f32 %v1711, 0.0
    %v1893 = vmax.f32 %v1855, 0.0
    %v1894 = vmax.f32 %v1857, 0.0
    %v1895 = vmax.f32 %v1715, 0.0
    %v1896 = vmax.f32 %v1717, 0.0
    %v1897 = vmax.f32 %v1861, 0.0
    %v1898 = vmax.f32 %v1863, 0.0
    %v1899 = vmax.f32 %v1719, 0.0
    %v1900 = vmax.f32 %v1721, 0.0
    %v1901 = vmax.f32 %v1865, 0.0
    %v1902 = vmax.f32 %v1867, 0.0
    %v1903 = vmax.f32 %v1725, 0.0
    %v1904 = vmax.f32 %v1727, 0.0
    %v1905 = vmax.f32 %v1871, 0.0
    %v1906 = vmax.f32 %v1873, 0.0
    %v1907 = vmax.f32 %v1729, 0.0
    %v1908 = vmax.f32 %v1731, 0.0
    %v1909 = vmax.f32 %v1875, 0.0
    %v1910 = vmax.f32 %v1877, 0.0
    %v1911 = vmul.f32 %v782, %v1879
    %v1912 = vmul.f32 %v782, %v1880
    %v1913 = vmul.f32 %v782, %v1881
    %v1914 = vmul.f32 %v782, %v1882
    %v1915 = vmul.f32 %v784, %v1883
    %v1916 = vmul.f32 %v784, %v1884
    %v1917 = vmul.f32 %v784, %v1885
    %v1918 = vmul.f32 %v784, %v1886
    %v1919 = vmul.f32 %v786, %v1887
    %v1920 = vmul.f32 %v786, %v1888
    %v1921 = vmul.f32 %v786, %v1889
    %v1922 = vmul.f32 %v786, %v1890
    %v1923 = vmul.f32 %v788, %v1891
    %v1924 = vmul.f32 %v788, %v1892
    %v1925 = vmul.f32 %v788, %v1893
    %v1926 = vmul.f32 %v788, %v1894
    %v1927 = vmul.f32 %v790, %v1895
    %v1928 = vmul.f32 %v790, %v1896
    %v1929 = vmul.f32 %v790, %v1897
    %v1930 = vmul.f32 %v790, %v1898
    %v1931 = vmul.f32 %v792, %v1899
    %v1932 = vmul.f32 %v792, %v1900
    %v1933 = vmul.f32 %v792, %v1901
    %v1934 = vmul.f32 %v792, %v1902
    %v1935 = vmul.f32 %v794, %v1903
    %v1936 = vmul.f32 %v794, %v1904
    %v1937 = vmul.f32 %v794, %v1905
    %v1938 = vmul.f32 %v794, %v1906
    %v1939 = vmul.f32 %v796, %v1907
    %v1940 = vmul.f32 %v796, %v1908
    %v1941 = vmul.f32 %v796, %v1909
    %v1942 = vmul.f32 %v796, %v1910
    %v1943 = vadd.f32 %v1911, 0.7
    %v1944 = vadd.f32 %v1912, 0.7
    %v1945 = vadd.f32 %v1913, 0.7
    %v1946 = vadd.f32 %v1914, 0.7
    %v1947 = vadd.f32 %v1915, 0.7
    %v1948 = vadd.f32 %v1916, 0.7
    %v1949 = vadd.f32 %v1917, 0.7
    %v1950 = vadd.f32 %v1918, 0.7
    %v1951 = vadd.f32 %v1919, 0.7
    %v1952 = vadd.f32 %v1920, 0.7
    %v1953 = vadd.f32 %v1921, 0.7
    %v1954 = vadd.f32 %v1922, 0.7
    %v1955 = vadd.f32 %v1923, 0.7
    %v1956 = vadd.f32 %v1924, 0.7
    %v1957 = vadd.f32 %v1925, 0.7
    %v1958 = vadd.f32 %v1926, 0.7
    %v1959 = vadd.f32 %v1927, 0.7
    %v1960 = vadd.f32 %v1928, 0.7
    %v1961 = vadd.f32 %v1929, 0.7
    %v1962 = vadd.f32 %v1930, 0.7
    %v1963 = vadd.f32 %v1931, 0.7
    %v1964 = vadd.f32 %v1932, 0.7
    %v1965 = vadd.f32 %v1933, 0.7
    %v1966 = vadd.f32 %v1934, 0.7
    %v1967 = vadd.f32 %v1935, 0.7
    %v1968 = vadd.f32 %v1936, 0.7
    %v1969 = vadd.f32 %v1937, 0.7
    %v1970 = vadd.f32 %v1938, 0.7
    %v1971 = vadd.f32 %v1939, 0.7
    %v1972 = vadd.f32 %v1940, 0.7
    %v1973 = vadd.f32 %v1941, 0.7
    %v1974 = vadd.f32 %v1942, 0.7
    %v1975 = vmul.f32 %v81, %v1943
    %v1976 = vmul.f32 %v82, %v1944
    %v1977 = vmul.f32 %v83, %v1945
    %v1978 = vmul.f32 %v84, %v1946
    %v1979 = vmul.f32 %v85, %v1947
    %v1980 = vmul.f32 %v86, %v1948
    %v1981 = vmul.f32 %v87, %v1949
    %v1982 = vmul.f32 %v88, %v1950
    %v1983 = vmul.f32 %v89, %v1951
    %v1984 = vmul.f32 %v90, %v1952
    %v1985 = vmul.f32 %v91, %v1953
    %v1986 = vmul.f32 %v92, %v1954
    %v1987 = vmul.f32 %v93, %v1955
    %v1988 = vmul.f32 %v94, %v1956
    %v1989 = vmul.f32 %v95, %v1957
    %v1990 = vmul.f32 %v96, %v1958
    %v1991 = vmul.f32 %v97, %v1959
    %v1992 = vmul.f32 %v98, %v1960
    %v1993 = vmul.f32 %v99, %v1961
    %v1994 = vmul.f32 %v100, %v1962
    %v1995 = vmul.f32 %v101, %v1963
    %v1996 = vmul.f32 %v102, %v1964
    %v1997 = vmul.f32 %v103, %v1965
    %v1998 = vmul.f32 %v104, %v1966
    %v1999 = vmul.f32 %v105, %v1967
    %v2000 = vmul.f32 %v106, %v1968
    %v2001 = vmul.f32 %v107, %v1969
    %v2002 = vmul.f32 %v108, %v1970
    %v2003 = vmul.f32 %v109, %v1971
    %v2004 = vmul.f32 %v110, %v1972
    %v2005 = vmul.f32 %v111, %v1973
    %v2006 = vmul.f32 %v112, %v1974
    %v2007 = vmul.f32 %v1879, 0.3
    %v2008 = vmul.f32 %v1880, 0.3
    %v2009 = vmul.f32 %v1881, 0.3
    %v2010 = vmul.f32 %v1882, 0.3
    %v2011 = vmul.f32 %v1883, 0.3
    %v2012 = vmul.f32 %v1884, 0.3
    %v2013 = vmul.f32 %v1885, 0.3
    %v2014 = vmul.f32 %v1886, 0.3
    %v2015 = vmul.f32 %v1887, 0.3
    %v2016 = vmul.f32 %v1888, 0.3
    %v2017 = vmul.f32 %v1889, 0.3
    %v2018 = vmul.f32 %v1890, 0.3
    %v2019 = vmul.f32 %v1891, 0.3
    %v2020 = vmul.f32 %v1892, 0.3
    %v2021 = vmul.f32 %v1893, 0.3
    %v2022 = vmul.f32 %v1894, 0.3
    %v2023 = vmul.f32 %v1895, 0.3
    %v2024 = vmul.f32 %v1896, 0.3
    %v2025 = vmul.f32 %v1897, 0.3
    %v2026 = vmul.f32 %v1898, 0.3
    %v2027 = vmul.f32 %v1899, 0.3
    %v2028 = vmul.f32 %v1900, 0.3
    %v2029 = vmul.f32 %v1901, 0.3
    %v2030 = vmul.f32 %v1902, 0.3
    %v2031 = vmul.f32 %v1903, 0.3
    %v2032 = vmul.f32 %v1904, 0.3
    %v2033 = vmul.f32 %v1905, 0.3
    %v2034 = vmul.f32 %v1906, 0.3
    %v2035 = vmul.f32 %v1907, 0.3
    %v2036 = vmul.f32 %v1908, 0.3
    %v2037 = vmul.f32 %v1909, 0.3
    %v2038 = vmul.f32 %v1910, 0.3
    %v2039 = vadd.f32 %v1975, %v2007
    %v2040 = vadd.f32 %v1976, %v2008
    %v2041 = vadd.f32 %v1977, %v2009
    %v2042 = vadd.f32 %v1978, %v2010
    %v2043 = vadd.f32 %v1979, %v2011
    %v2044 = vadd.f32 %v1980, %v2012
    %v2045 = vadd.f32 %v1981, %v2013
    %v2046 = vadd.f32 %v1982, %v2014
    %v2047 = vadd.f32 %v1983, %v2015
    %v2048 = vadd.f32 %v1984, %v2016
    %v2049 = vadd.f32 %v1985, %v2017
    %v2050 = vadd.f32 %v1986, %v2018
    %v2051 = vadd.f32 %v1987, %v2019
    %v2052 = vadd.f32 %v1988, %v2020
    %v2053 = vadd.f32 %v1989, %v2021
    %v2054 = vadd.f32 %v1990, %v2022
    %v2055 = vadd.f32 %v1991, %v2023
    %v2056 = vadd.f32 %v1992, %v2024
    %v2057 = vadd.f32 %v1993, %v2025
    %v2058 = vadd.f32 %v1994, %v2026
    %v2059 = vadd.f32 %v1995, %v2027
    %v2060 = vadd.f32 %v1996, %v2028
    %v2061 = vadd.f32 %v1997, %v2029
    %v2062 = vadd.f32 %v1998, %v2030
    %v2063 = vadd.f32 %v1999, %v2031
    %v2064 = vadd.f32 %v2000, %v2032
    %v2065 = vadd.f32 %v2001, %v2033
    %v2066 = vadd.f32 %v2002, %v2034
    %v2067 = vadd.f32 %v2003, %v2035
    %v2068 = vadd.f32 %v2004, %v2036
    %v2069 = vadd.f32 %v2005, %v2037
    %v2070 = vadd.f32 %v2006, %v2038
    %2071 = vst [vmem:[#allocation12] sm:$0xff] %v2039
    %2072 = vst [vmem:[#allocation12 + $0x8] sm:$0xff] %v2040
    %2073 = vst [vmem:[#allocation12 + $0x10] sm:$0xff] %v2041
    %2074 = vst [vmem:[#allocation12 + $0x18] sm:$0xff] %v2042
    %2075 = vst [vmem:[#allocation12 + $0x20] sm:$0xff] %v2043
    %2076 = vst [vmem:[#allocation12 + $0x28] sm:$0xff] %v2044
    %2077 = vst [vmem:[#allocation12 + $0x30] sm:$0xff] %v2045
    %2078 = vst [vmem:[#allocation12 + $0x38] sm:$0xff] %v2046
    %2079 = vst [vmem:[#allocation12 + $0x40] sm:$0xff] %v2047
    %2080 = vst [vmem:[#allocation12 + $0x48] sm:$0xff] %v2048
    %2081 = vst [vmem:[#allocation12 + $0x50] sm:$0xff] %v2049
    %2082 = vst [vmem:[#allocation12 + $0x58] sm:$0xff] %v2050
    %2083 = vst [vmem:[#allocation12 + $0x60] sm:$0xff] %v2051
    %2084 = vst [vmem:[#allocation12 + $0x68] sm:$0xff] %v2052
    %2085 = vst [vmem:[#allocation12 + $0x70] sm:$0xff] %v2053
    %2086 = vst [vmem:[#allocation12 + $0x78] sm:$0xff] %v2054
    %2087 = vst [vmem:[#allocation12 + $0x80] sm:$0xff] %v2055
    %2088 = vst [vmem:[#allocation12 + $0x88] sm:$0xff] %v2056
    %2089 = vst [vmem:[#allocation12 + $0x90] sm:$0xff] %v2057
    %2090 = vst [vmem:[#allocation12 + $0x98] sm:$0xff] %v2058
    %2091 = vst [vmem:[#allocation12 + $0xa0] sm:$0xff] %v2059
    %2092 = vst [vmem:[#allocation12 + $0xa8] sm:$0xff] %v2060
    %2093 = vst [vmem:[#allocation12 + $0xb0] sm:$0xff] %v2061
    %2094 = vst [vmem:[#allocation12 + $0xb8] sm:$0xff] %v2062
    %2095 = vst [vmem:[#allocation12 + $0xc0] sm:$0xff] %v2063
    %2096 = vst [vmem:[#allocation12 + $0xc8] sm:$0xff] %v2064
    %2097 = vst [vmem:[#allocation12 + $0xd0] sm:$0xff] %v2065
    %2098 = vst [vmem:[#allocation12 + $0xd8] sm:$0xff] %v2066
    %2099 = vst [vmem:[#allocation12 + $0xe0] sm:$0xff] %v2067
    %2100 = vst [vmem:[#allocation12 + $0xe8] sm:$0xff] %v2068
    %2101 = vst [vmem:[#allocation12 + $0xf0] sm:$0xff] %v2069
    %2102 = vst [vmem:[#allocation12 + $0xf8] sm:$0xff] %v2070
    // Predicated region
    $region46: #{tpu_custom_call.1} parent=1 // pred_check
      _
    $region47: #{tpu_custom_call.1} parent=1 // pred_check_branch
      %2104 = sbr.rel (0) target = $region49
    $region48: #{tpu_custom_call.1} parent=1 // pred_region
      %s2106 = ssub.s32 4096, 4096
      %2107 = vsyncadd [#allocation6], %s2106
      %s2108 = sshll.u32 [#allocation12], 4
      %s2109 = int_to_ptr.vmem [resolvable:$true] %s2108
      %2114 = dma.vmem_to_hbm [thread:$0]  %s2109, 4096, %s7, [#allocation6], 512, 512, 32
    $region49: #{tpu_custom_call.1} parent=1 // pred_fallthru
      _
    // Predicated region
    $region50: #{tpu_custom_call.1} parent=1 // pred_check
      _
    $region51: #{tpu_custom_call.1} parent=1 // pred_check_branch
      %2116 = sbr.rel (0) target = $region53
    $region52: #{tpu_custom_call.1} parent=1 // pred_region
      %2117 = dma.done [#allocation6], 4096
    $region53: #{tpu_custom_call.1} parent=1 // pred_fallthru
      _
    %2118 = vsyncpa [#allocation5], 1
    %2119 = vsyncpa [#allocation8], 1
    %2120 = vsyncpa [#allocation11], 1
    %2121 = vsyncpa [#allocation6], 1

</llo_original>
